<compile_context>
chip_gen: v7x
topology: tpu7x:2x2x1
jax: 0.10.0
libtpu: 0.0.40
codegen_flags: <defaults>
</compile_context>

<pallas_src>
import functools

import jax
import jax.numpy as jnp
import numpy as np
from jax import lax
from jax.experimental import pallas as pl
from jax.experimental.pallas import tpu as pltpu

_EPS = 1e-5

# One "parallel" grid axis per call (v7x megacore sharding) and an explicit
# scoped-VMEM budget that also fits v7x's 64 MiB physical VMEM.
_COMPILER_PARAMS = pltpu.CompilerParams(
    dimension_semantics=("parallel",),
    vmem_limit_bytes=48 * 1024 * 1024,
)


def _act(z, act):
    # relu / elu both map 0 -> 0, so zero padding commutes with the activation.
    if act == "relu":
        return jnp.maximum(z, 0.0)
    elif act == "elu":
        return jnp.where(z > 0.0, z, jnp.exp(z) - 1.0)
    raise ValueError(f"unsupported act: {act}")


# ---------------------------------------------------------------------------
# In-kernel helpers
# ---------------------------------------------------------------------------
def _conv3x3_stacked(a, H, W, Cp, mask_ref, w1_ref, flat_ref, col_ref):
    """3x3 SAME conv of an activated (H, W, Cp) tile as ONE stacked-K matmul.

    The tile is written flat (H*W rows) into a zero-bordered VMEM scratch;
    each of the 9 taps is a shifted row-window of that scratch (the border
    supplies the H-direction zero padding, a compile-time column mask supplies
    the W-direction padding).  Taps are packed into a (H*W, 9*Cp) im2col panel
    and fed to a single K = 9*Cp MXU matmul instead of nine underfilled K=Cp
    matmuls.
    """
    rows = H * W
    base = (flat_ref.shape[0] - rows) // 2          # symmetric zero border
    flat_ref[...] = jnp.zeros_like(flat_ref)
    flat_ref[base:base + rows, :] = a.reshape(rows, Cp)
    for k in range(9):
        ky, kx = divmod(k, 3)
        start = base + (ky - 1) * W + (kx - 1)
        tap = flat_ref[start:start + rows, :]
        if kx == 0:                                  # tap reads column j-1
            tap = tap * mask_ref[0]
        elif kx == 2:                                # tap reads column j+1
            tap = tap * mask_ref[1]
        col_ref[:, k * Cp:(k + 1) * Cp] = tap.astype(jnp.bfloat16)
    return jnp.dot(col_ref[...], w1_ref[...],
                   preferred_element_type=jnp.float32)


def _emit_out_and_stats(y, out_ref, s_ref, ss_ref):
    out_ref[...] = y.astype(jnp.bfloat16)
    s_ref[0] = jnp.sum(y, axis=0, keepdims=True)
    ss_ref[0] = jnp.sum(y * y, axis=0, keepdims=True)


# ---------------------------------------------------------------------------
# Pallas kernels
# ---------------------------------------------------------------------------
def _act_conv3x3_kernel(act, H, W, r_ref, mask_ref, w1_ref,
                        y1_ref, s_ref, ss_ref, flat_ref, col_ref):
    """Block 0, pass A: act -> 3x3 conv, emit y1 (bf16) + BN1 partial sums."""
    Cp = r_ref.shape[-1]
    a = _act(r_ref[0], act)                                     # (H, W, Cp) f32
    y = _conv3x3_stacked(a, H, W, Cp, mask_ref, w1_ref, flat_ref, col_ref)
    _emit_out_and_stats(y, y1_ref, s_ref, ss_ref)


def _res_act_conv3x3_kernel(act, H, W, r_ref, y2_ref, aff_ref, mask_ref, w1_ref,
                            rnew_ref, y1_ref, s_ref, ss_ref, flat_ref, col_ref):
    """Blocks >= 1, fused pass C+A: previous block's folded BN2 + residual add
    (writes the new residual stream), then act -> 3x3 conv -> y1/stats."""
    Cp = r_ref.shape[-1]
    scale = aff_ref[0:1, :].reshape(1, 1, Cp)
    shift = aff_ref[1:2, :].reshape(1, 1, Cp)
    rnew = r_ref[0] + y2_ref[0].astype(jnp.float32) * scale + shift
    rnew_ref[0] = rnew
    a = _act(rnew, act)
    y = _conv3x3_stacked(a, H, W, Cp, mask_ref, w1_ref, flat_ref, col_ref)
    _emit_out_and_stats(y, y1_ref, s_ref, ss_ref)


def _bn_act_conv1x1_kernel(act, y1_ref, aff_ref, w2_ref,
                           y2_ref, s_ref, ss_ref):
    """Pass B: folded BN1 -> act -> 1x1 conv, emit y2 (bf16) + BN2 sums."""
    h = y1_ref[...].astype(jnp.float32) * aff_ref[0:1, :] + aff_ref[1:2, :]
    a = _act(h, act).astype(jnp.bfloat16)
    y = jnp.dot(a, w2_ref[...], preferred_element_type=jnp.float32)
    _emit_out_and_stats(y, y2_ref, s_ref, ss_ref)


def _bn_residual_kernel(r_ref, y2_ref, aff_ref, o_ref):
    """Final pass C (last block only): folded BN2 + residual add."""
    o_ref[...] = (r_ref[...]
                  + y2_ref[...].astype(jnp.float32) * aff_ref[0:1, :]
                  + aff_ref[1:2, :])


# ---------------------------------------------------------------------------
# Wrapper helpers
# ---------------------------------------------------------------------------
def _round_up(v, m):
    return ((v + m - 1) // m) * m


def _pad_last(a, size):
    pad = size - a.shape[-1]
    if pad == 0:
        return a
    return jnp.pad(a, [(0, 0)] * (a.ndim - 1) + [(0, pad)])


def _pick_row_tile(r, target=2048):
    """Largest 8-aligned divisor of r that is <= target and <= r // 2 (so every
    grid has >= 2 steps: megacore sharding + pipeline overlap)."""
    hi = min(target, max(r // 2, 8))
    for t in range(hi, 7, -1):
        if r % t == 0 and t % 8 == 0:
            return t
    return r


def _affine_from_stats(s, ss, count, gamma, beta):
    """Combine per-tile (sum, sum_sq) partials and fold train-mode BN into
    y * scale + shift.  Single-pass E[x^2]-E[x]^2 variance in f32 (clamped at
    zero); adequate at these sizes, use a shifted/Welford form for huge R."""
    s = jnp.sum(s.reshape(-1, s.shape[-1]), axis=0)
    ss = jnp.sum(ss.reshape(-1, ss.shape[-1]), axis=0)
    mean = s / count
    var = jnp.maximum(ss / count - mean * mean, 0.0)
    scale = gamma * lax.rsqrt(var + _EPS)
    shift = beta - mean * scale
    return jnp.stack([scale, shift]).astype(jnp.float32)           # (2, Cp)


def _prep_block_params(p, C, Cp):
    """Conv weights -> MXU layouts (bf16, zero-padded to Cp); BN affines f32."""
    w1 = jnp.transpose(p["w1"], (2, 3, 1, 0))                      # (3,3,in,out)
    w1 = jnp.pad(w1, ((0, 0), (0, 0), (0, Cp - C), (0, Cp - C)))
    w1 = w1.reshape(9 * Cp, Cp).astype(jnp.bfloat16)               # stacked-K panel
    w2 = jnp.pad(p["w2"][:, :, 0, 0].T, ((0, Cp - C), (0, Cp - C)))
    w2 = w2.astype(jnp.bfloat16)                                   # (in, out)
    g1 = _pad_last(p["g1"].astype(jnp.float32), Cp)
    be1 = _pad_last(p["be1"].astype(jnp.float32), Cp)
    g2 = _pad_last(p["g2"].astype(jnp.float32), Cp)
    be2 = _pad_last(p["be2"].astype(jnp.float32), Cp)
    return w1, w2, g1, be1, g2, be2


# ---------------------------------------------------------------------------
# pallas_call wrappers
# ---------------------------------------------------------------------------
def _call_conv3x3(r, y2_prev, aff2_prev, col_mask, w1, act, H, W, Cp):
    """Pass A (block 0) or fused pass CA (later blocks); grid over batch."""
    N = r.shape[0]
    rows = H * W
    R = N * rows
    halo = _round_up(W + 1, 8)

    img_spec = pl.BlockSpec((1, H, W, Cp), lambda n: (n, 0, 0, 0))
    mask_spec = pl.BlockSpec((2, rows, Cp), lambda n: (0, 0, 0))
    w1_spec = pl.BlockSpec((9 * Cp, Cp), lambda n: (0, 0))
    aff_spec = pl.BlockSpec((2, Cp), lambda n: (0, 0))
    y1_spec = pl.BlockSpec((rows, Cp), lambda n: (n, 0))
    st_spec = pl.BlockSpec((1, 1, Cp), lambda n: (n, 0, 0))

    y1_shape = jax.ShapeDtypeStruct((R, Cp), jnp.bfloat16)
    st_shape = jax.ShapeDtypeStruct((N, 1, Cp), jnp.float32)
    scratch = [pltpu.VMEM((rows + 2 * halo, Cp), jnp.float32),     # flat act + zero border
               pltpu.VMEM((rows, 9 * Cp), jnp.bfloat16)]           # im2col panel

    if y2_prev is None:
        y1, s, ss = pl.pallas_call(
            functools.partial(_act_conv3x3_kernel, act, H, W),
            grid=(N,),
            in_specs=[img_spec, mask_spec, w1_spec],
            out_specs=[y1_spec, st_spec, st_spec],
            out_shape=[y1_shape, st_shape, st_shape],
            scratch_shapes=scratch,
            compiler_params=_COMPILER_PARAMS,
        )(r, col_mask, w1)
        return r, y1, s, ss

    rnew, y1, s, ss = pl.pallas_call(
        functools.partial(_res_act_conv3x3_kernel, act, H, W),
        grid=(N,),
        in_specs=[img_spec, img_spec, aff_spec, mask_spec, w1_spec],
        out_specs=[img_spec, y1_spec, st_spec, st_spec],
        out_shape=[jax.ShapeDtypeStruct(r.shape, jnp.float32),
                   y1_shape, st_shape, st_shape],
        scratch_shapes=scratch,
        input_output_aliases={0: 0},        # old residual buffer -> new residual
        compiler_params=_COMPILER_PARAMS,
    )(r, y2_prev, aff2_prev, col_mask, w1)
    return rnew, y1, s, ss


def _call_conv1x1(y1, aff1, w2, act, TR, Cp):
    """Pass B: folded BN1 -> act -> 1x1 conv over large lane-dense row tiles."""
    R = y1.shape[0]
    G = R // TR
    row_spec = pl.BlockSpec((TR, Cp), lambda i: (i, 0))
    st_spec = pl.BlockSpec((1, 1, Cp), lambda i: (i, 0, 0))
    return pl.pallas_call(
        functools.partial(_bn_act_conv1x1_kernel, act),
        grid=(G,),
        in_specs=[row_spec,
                  pl.BlockSpec((2, Cp), lambda i: (0, 0)),
                  pl.BlockSpec((Cp, Cp), lambda i: (0, 0))],
        out_specs=[row_spec, st_spec, st_spec],
        out_shape=[jax.ShapeDtypeStruct((R, Cp), jnp.bfloat16),
                   jax.ShapeDtypeStruct((G, 1, Cp), jnp.float32),
                   jax.ShapeDtypeStruct((G, 1, Cp), jnp.float32)],
        compiler_params=_COMPILER_PARAMS,
    )(y1, aff1, w2)


def _call_bn_residual(r_flat, y2, aff2, TR, Cp):
    """Final pass C: folded BN2 + residual add; output aliases the residual."""
    R = r_flat.shape[0]
    G = R // TR
    row_spec = pl.BlockSpec((TR, Cp), lambda i: (i, 0))
    return pl.pallas_call(
        _bn_residual_kernel,
        grid=(G,),
        in_specs=[row_spec, row_spec, pl.BlockSpec((2, Cp), lambda i: (0, 0))],
        out_specs=row_spec,
        out_shape=jax.ShapeDtypeStruct((R, Cp), jnp.float32),
        input_output_aliases={0: 0},
        compiler_params=_COMPILER_PARAMS,
    )(r_flat, y2, aff2)


# ---------------------------------------------------------------------------
# ResBlock chain (Pallas) and pure-JAX reference / encoder composition
# ---------------------------------------------------------------------------
def resblock_chain_forward(h_nchw, blocks, act="relu"):
    """Chain of ResBlocks (train-mode BN) as Pallas kernels.  Layout conversion
    (NCHW -> NHWC, channel pad to a multiple of 128) is hoisted outside the
    block loop, and each block's final BN+residual is fused into the next
    block's first pass."""
    N, C, H, W = h_nchw.shape
    Cp = _round_up(max(C, 128), 128)
    R = N * H * W
    rows = H * W
    assert rows % 8 == 0, "H*W must be a multiple of 8"
    # TODO(synk): whole-image spatial tiles (grid over batch) are ample at these
    # map sizes; very large H*W*Cp would need an H split with pl.Element halo reads.

    r = _pad_last(jnp.transpose(h_nchw, (0, 2, 3, 1)).astype(jnp.float32), Cp)
    TR = _pick_row_tile(R)

    # Compile-time column masks for the W-direction SAME padding of the 3x3
    # conv taps (shared by every block).
    jj = np.arange(rows) % W
    col_mask = np.zeros((2, rows, Cp), np.float32)
    col_mask[0] = (jj >= 1).astype(np.float32)[:, None]         # taps reading col j-1
    col_mask[1] = (jj <= W - 2).astype(np.float32)[:, None]     # taps reading col j+1
    col_mask = jnp.asarray(col_mask)

    y2 = None
    aff2 = None
    for bp in blocks:
        w1, w2, g1, be1, g2, be2 = _prep_block_params(bp, C, Cp)
        y2_img = None if y2 is None else y2.reshape(N, H, W, Cp)
        r, y1, s1, ss1 = _call_conv3x3(r, y2_img, aff2, col_mask, w1,
                                       act, H, W, Cp)
        aff1 = _affine_from_stats(s1, ss1, R, g1, be1)
        y2, s2, ss2 = _call_conv1x1(y1, aff1, w2, act, TR, Cp)
        aff2 = _affine_from_stats(s2, ss2, R, g2, be2)

    out = _call_bn_residual(r.reshape(R, Cp), y2, aff2, TR, Cp)
    out = out[:, :C].reshape(N, H, W, C)
    return jnp.transpose(out, (0, 3, 1, 2))                        # back to NCHW


def _batchnorm_train(h, g, b):
    m = jnp.mean(h, axis=(0, 2, 3), keepdims=True)
    v = jnp.mean((h - m) ** 2, axis=(0, 2, 3), keepdims=True)
    return ((h - m) * lax.rsqrt(v + _EPS)
            * g[None, :, None, None] + b[None, :, None, None])


def _conv2d(h, w, b, stride, pad):
    out = lax.conv_general_dilated(
        h, w, (stride, stride), ((pad, pad), (pad, pad)),
        dimension_numbers=("NCHW", "OIHW", "NCHW"))
    return out + b[None, :, None, None]


def resblock_reference(x, p, act="relu"):
    h = _act(x, act)
    h = _conv2d(h, p["w1"], p["b1"], 1, 1)
    h = _batchnorm_train(h, p["g1"], p["be1"])
    h = _act(h, act)
    h = _conv2d(h, p["w2"], p["b2"], 1, 0)
    h = _batchnorm_train(h, p["g2"], p["be2"])
    return x + h


def _stem(x, p):
    # TODO(synk): the strided 4x4 stem convolutions (+ their BN/ReLU) stay as
    # XLA convs; only the ResBlock chain (bulk of the network) is Pallas.
    h = _conv2d(x, p["c1_w"], p["c1_b"], 2, 1)
    h = _batchnorm_train(h, p["bn1_g"], p["bn1_b"])
    h = jnp.maximum(h, 0.0)
    h = _conv2d(h, p["c2_w"], p["c2_b"], 2, 1)
    h = _batchnorm_train(h, p["bn2_g"], p["bn2_b"])
    h = jnp.maximum(h, 0.0)
    h = _conv2d(h, p["c3_w"], p["c3_b"], 1, 1)
    return h


def encoder_forward(x, params, use_pallas=True, act="relu"):
    """EncoderVqResnet64.forward: stem convs -> (num_rb-1) ResBlocks -> res_m."""
    h = _stem(x, params["stem"])
    blocks = list(params["res"]) + [params["res_m"]]
    if use_pallas:
        return resblock_chain_forward(h, blocks, act=act)   # mu == data['z']
    for bp in blocks:
        h = resblock_reference(h, bp, act=act)
    return h


def init_params(key, dim_z, n_resblocks):
    keys = iter(jax.random.split(key, 64))

    def nrm(shape, s):
        return s * jax.random.normal(next(keys), shape, jnp.float32)

    stem = dict(
        c1_w=nrm((dim_z // 2, 3, 4, 4), 0.2), c1_b=nrm((dim_z // 2,), 0.05),
        bn1_g=1.0 + nrm((dim_z // 2,), 0.1), bn1_b=nrm((dim_z // 2,), 0.05),
        c2_w=nrm((dim_z, dim_z // 2, 4, 4), 0.15), c2_b=nrm((dim_z,), 0.05),
        bn2_g=1.0 + nrm((dim_z,), 0.1), bn2_b=nrm((dim_z,), 0.05),
        c3_w=nrm((dim_z, dim_z, 3, 3), 0.1), c3_b=nrm((dim_z,), 0.05),
    )

    def rb():
        return dict(
            w1=nrm((dim_z, dim_z, 3, 3), 0.08), b1=nrm((dim_z,), 0.05),
            g1=1.0 + nrm((dim_z,), 0.1), be1=nrm((dim_z,), 0.05),
            w2=nrm((dim_z, dim_z, 1, 1), 0.15), b2=nrm((dim_z,), 0.05),
            g2=1.0 + nrm((dim_z,), 0.1), be2=nrm((dim_z,), 0.05),
        )

    res = [rb() for _ in range(n_resblocks - 1)]
    res_m = rb()
    return dict(stem=stem, res=res, res_m=res_m)


if __name__ == "__main__":
    key = jax.random.PRNGKey(0)
    kp, kx = jax.random.split(key)

    N, dim_z, n_resblocks = 2, 32, 3
    x = jax.random.normal(kx, (N, 3, 32, 32), jnp.float32)        # data['x']
    params = init_params(kp, dim_z, n_resblocks)

    enc_pallas = jax.jit(functools.partial(encoder_forward, use_pallas=True))
    enc_ref = jax.jit(functools.partial(encoder_forward, use_pallas=False))

    z = jax.block_until_ready(enc_pallas(x, params))
    z_ref = jax.block_until_ready(enc_ref(x, params))
    assert z.shape == (N, dim_z, 8, 8)
    # bf16 MXU operands + bf16 y1/y2 intermediates vs the all-f32 reference;
    # the residual stream itself stays f32.
    np.testing.assert_allclose(np.asarray(z), np.asarray(z_ref),
                               rtol=5e-2, atol=8e-2)

    print("KERNEL_OK")
</pallas_src>

<mosaic_0001>
module attributes {stable_mosaic.version = 11 : i64} {
  func.func @_act_conv3x3_kernel(%arg0: i32, %arg1: memref<1x8x8x128xf32, #tpu.memory_space<vmem>>, %arg2: memref<2x64x128xf32, #tpu.memory_space<vmem>>, %arg3: memref<1152x128xbf16, #tpu.memory_space<vmem>>, %arg4: memref<64x128xbf16, #tpu.memory_space<vmem>>, %arg5: memref<1x1x128xf32, #tpu.memory_space<vmem>>, %arg6: memref<1x1x128xf32, #tpu.memory_space<vmem>>, %arg7: memref<96x128xf32, #tpu.memory_space<vmem>>, %arg8: memref<64x1152xbf16, #tpu.memory_space<vmem>>) attributes {dimension_semantics = [#tpu.dimension_semantics<parallel>], iteration_bounds = array<i64: 2>, scalar_prefetch = 0 : i64, scratch_operands = 2 : i64, tpu.core_type = #tpu.core_type<tc>, window_params = [{transform_indices = @transform_0, window_bounds = array<i64: 1, 8, 8, 128>}, {pipeline_mode = #tpu.pipeline_mode<synchronous>, transform_indices = @transform_1, window_bounds = array<i64: 2, 64, 128>}, {pipeline_mode = #tpu.pipeline_mode<synchronous>, transform_indices = @transform_2, window_bounds = array<i64: 1152, 128>}, {transform_indices = @transform_3, window_bounds = array<i64: 64, 128>}, {transform_indices = @transform_4, window_bounds = array<i64: 1, 1, 128>}, {transform_indices = @transform_5, window_bounds = array<i64: 1, 1, 128>}]} {
    %c0 = arith.constant 0 : index
    %c0_0 = arith.constant 0 : index
    %c0_1 = arith.constant 0 : index
    %c0_2 = arith.constant 0 : index
    %0 = vector.load %arg1[%c0, %c0_0, %c0_1, %c0_2] : memref<1x8x8x128xf32, #tpu.memory_space<vmem>>, vector<1x8x8x128xf32>
    %1 = vector.shape_cast %0 : vector<1x8x8x128xf32> to vector<8x8x128xf32>
    %cst = arith.constant 0.000000e+00 : f32
    %2 = vector.broadcast %cst : f32 to vector<8x8x128xf32>
    %3 = arith.maximumf %1, %2 : vector<8x8x128xf32>
    %cst_3 = arith.constant 0.000000e+00 : f32
    %4 = vector.broadcast %cst_3 : f32 to vector<96x128xf32>
    %c0_4 = arith.constant 0 : index
    %c0_5 = arith.constant 0 : index
    %5 = vector.load %arg7[%c0_4, %c0_5] : memref<96x128xf32, #tpu.memory_space<vmem>>, vector<96x128xf32>
    tpu.vector_store %arg7[%c0_4, %c0_5], %4 {strides = array<i32>} : memref<96x128xf32, #tpu.memory_space<vmem>>, vector<96x128xf32>,
    %6 = vector.shape_cast %3 : vector<8x8x128xf32> to vector<64x128xf32>
    %c16 = arith.constant 16 : index
    %c0_6 = arith.constant 0 : index
    %7 = vector.load %arg7[%c16, %c0_6] : memref<96x128xf32, #tpu.memory_space<vmem>>, vector<64x128xf32>
    tpu.vector_store %arg7[%c16, %c0_6], %6 {strides = array<i32>} : memref<96x128xf32, #tpu.memory_space<vmem>>, vector<64x128xf32>,
    %c7 = arith.constant 7 : index
    %c0_7 = arith.constant 0 : index
    %8 = vector.load %arg7[%c7, %c0_7] : memref<96x128xf32, #tpu.memory_space<vmem>>, vector<64x128xf32>
    %c0_8 = arith.constant 0 : index
    %c0_9 = arith.constant 0 : index
    %c0_10 = arith.constant 0 : index
    %9 = vector.load %arg2[%c0_8, %c0_9, %c0_10] : memref<2x64x128xf32, #tpu.memory_space<vmem>>, vector<1x64x128xf32>
    %10 = vector.shape_cast %9 : vector<1x64x128xf32> to vector<64x128xf32>
    %11 = arith.mulf %8, %10 : vector<64x128xf32>
    %12 = arith.truncf %11 : vector<64x128xf32> to vector<64x128xbf16>
    %c0_11 = arith.constant 0 : index
    %c0_12 = arith.constant 0 : index
    %13 = vector.load %arg8[%c0_11, %c0_12] : memref<64x1152xbf16, #tpu.memory_space<vmem>>, vector<64x128xbf16>
    tpu.vector_store %arg8[%c0_11, %c0_12], %12 {strides = array<i32>} : memref<64x1152xbf16, #tpu.memory_space<vmem>>, vector<64x128xbf16>,
    %c8 = arith.constant 8 : index
    %c0_13 = arith.constant 0 : index
    %14 = vector.load %arg7[%c8, %c0_13] : memref<96x128xf32, #tpu.memory_space<vmem>>, vector<64x128xf32>
    %15 = arith.truncf %14 : vector<64x128xf32> to vector<64x128xbf16>
    %c0_14 = arith.constant 0 : index
    %c128 = arith.constant 128 : index
    %16 = vector.load %arg8[%c0_14, %c128] : memref<64x1152xbf16, #tpu.memory_space<vmem>>, vector<64x128xbf16>
    tpu.vector_store %arg8[%c0_14, %c128], %15 {strides = array<i32>} : memref<64x1152xbf16, #tpu.memory_space<vmem>>, vector<64x128xbf16>,
    %c9 = arith.constant 9 : index
    %c0_15 = arith.constant 0 : index
    %17 = vector.load %arg7[%c9, %c0_15] : memref<96x128xf32, #tpu.memory_space<vmem>>, vector<64x128xf32>
    %c1 = arith.constant 1 : index
    %c0_16 = arith.constant 0 : index
    %c0_17 = arith.constant 0 : index
    %18 = vector.load %arg2[%c1, %c0_16, %c0_17] : memref<2x64x128xf32, #tpu.memory_space<vmem>>, vector<1x64x128xf32>
    %19 = vector.shape_cast %18 : vector<1x64x128xf32> to vector<64x128xf32>
    %20 = arith.mulf %17, %19 : vector<64x128xf32>
    %21 = arith.truncf %20 : vector<64x128xf32> to vector<64x128xbf16>
    %c0_18 = arith.constant 0 : index
    %c256 = arith.constant 256 : index
    %22 = vector.load %arg8[%c0_18, %c256] : memref<64x1152xbf16, #tpu.memory_space<vmem>>, vector<64x128xbf16>
    tpu.vector_store %arg8[%c0_18, %c256], %21 {strides = array<i32>} : memref<64x1152xbf16, #tpu.memory_space<vmem>>, vector<64x128xbf16>,
    %c15 = arith.constant 15 : index
    %c0_19 = arith.constant 0 : index
    %23 = vector.load %arg7[%c15, %c0_19] : memref<96x128xf32, #tpu.memory_space<vmem>>, vector<64x128xf32>
    %c0_20 = arith.constant 0 : index
    %c0_21 = arith.constant 0 : index
    %c0_22 = arith.constant 0 : index
    %24 = vector.load %arg2[%c0_20, %c0_21, %c0_22] : memref<2x64x128xf32, #tpu.memory_space<vmem>>, vector<1x64x128xf32>
    %25 = vector.shape_cast %24 : vector<1x64x128xf32> to vector<64x128xf32>
    %26 = arith.mulf %23, %25 : vector<64x128xf32>
    %27 = arith.truncf %26 : vector<64x128xf32> to vector<64x128xbf16>
    %c0_23 = arith.constant 0 : index
    %c384 = arith.constant 384 : index
    %28 = vector.load %arg8[%c0_23, %c384] : memref<64x1152xbf16, #tpu.memory_space<vmem>>, vector<64x128xbf16>
    tpu.vector_store %arg8[%c0_23, %c384], %27 {strides = array<i32>} : memref<64x1152xbf16, #tpu.memory_space<vmem>>, vector<64x128xbf16>,
    %c16_24 = arith.constant 16 : index
    %c0_25 = arith.constant 0 : index
    %29 = vector.load %arg7[%c16_24, %c0_25] : memref<96x128xf32, #tpu.memory_space<vmem>>, vector<64x128xf32>
    %30 = arith.truncf %29 : vector<64x128xf32> to vector<64x128xbf16>
    %c0_26 = arith.constant 0 : index
    %c512 = arith.constant 512 : index
    %31 = vector.load %arg8[%c0_26, %c512] : memref<64x1152xbf16, #tpu.memory_space<vmem>>, vector<64x128xbf16>
    tpu.vector_store %arg8[%c0_26, %c512], %30 {strides = array<i32>} : memref<64x1152xbf16, #tpu.memory_space<vmem>>, vector<64x128xbf16>,
    %c17 = arith.constant 17 : index
    %c0_27 = arith.constant 0 : index
    %32 = vector.load %arg7[%c17, %c0_27] : memref<96x128xf32, #tpu.memory_space<vmem>>, vector<64x128xf32>
    %c1_28 = arith.constant 1 : index
    %c0_29 = arith.constant 0 : index
    %c0_30 = arith.constant 0 : index
    %33 = vector.load %arg2[%c1_28, %c0_29, %c0_30] : memref<2x64x128xf32, #tpu.memory_space<vmem>>, vector<1x64x128xf32>
    %34 = vector.shape_cast %33 : vector<1x64x128xf32> to vector<64x128xf32>
    %35 = arith.mulf %32, %34 : vector<64x128xf32>
    %36 = arith.truncf %35 : vector<64x128xf32> to vector<64x128xbf16>
    %c0_31 = arith.constant 0 : index
    %c640 = arith.constant 640 : index
    %37 = vector.load %arg8[%c0_31, %c640] : memref<64x1152xbf16, #tpu.memory_space<vmem>>, vector<64x128xbf16>
    tpu.vector_store %arg8[%c0_31, %c640], %36 {strides = array<i32>} : memref<64x1152xbf16, #tpu.memory_space<vmem>>, vector<64x128xbf16>,
    %c23 = arith.constant 23 : index
    %c0_32 = arith.constant 0 : index
    %38 = vector.load %arg7[%c23, %c0_32] : memref<96x128xf32, #tpu.memory_space<vmem>>, vector<64x128xf32>
    %c0_33 = arith.constant 0 : index
    %c0_34 = arith.constant 0 : index
    %c0_35 = arith.constant 0 : index
    %39 = vector.load %arg2[%c0_33, %c0_34, %c0_35] : memref<2x64x128xf32, #tpu.memory_space<vmem>>, vector<1x64x128xf32>
    %40 = vector.shape_cast %39 : vector<1x64x128xf32> to vector<64x128xf32>
    %41 = arith.mulf %38, %40 : vector<64x128xf32>
    %42 = arith.truncf %41 : vector<64x128xf32> to vector<64x128xbf16>
    %c0_36 = arith.constant 0 : index
    %c768 = arith.constant 768 : index
    %43 = vector.load %arg8[%c0_36, %c768] : memref<64x1152xbf16, #tpu.memory_space<vmem>>, vector<64x128xbf16>
    tpu.vector_store %arg8[%c0_36, %c768], %42 {strides = array<i32>} : memref<64x1152xbf16, #tpu.memory_space<vmem>>, vector<64x128xbf16>,
    %c24 = arith.constant 24 : index
    %c0_37 = arith.constant 0 : index
    %44 = vector.load %arg7[%c24, %c0_37] : memref<96x128xf32, #tpu.memory_space<vmem>>, vector<64x128xf32>
    %45 = arith.truncf %44 : vector<64x128xf32> to vector<64x128xbf16>
    %c0_38 = arith.constant 0 : index
    %c896 = arith.constant 896 : index
    %46 = vector.load %arg8[%c0_38, %c896] : memref<64x1152xbf16, #tpu.memory_space<vmem>>, vector<64x128xbf16>
    tpu.vector_store %arg8[%c0_38, %c896], %45 {strides = array<i32>} : memref<64x1152xbf16, #tpu.memory_space<vmem>>, vector<64x128xbf16>,
    %c25 = arith.constant 25 : index
    %c0_39 = arith.constant 0 : index
    %47 = vector.load %arg7[%c25, %c0_39] : memref<96x128xf32, #tpu.memory_space<vmem>>, vector<64x128xf32>
    %c1_40 = arith.constant 1 : index
    %c0_41 = arith.constant 0 : index
    %c0_42 = arith.constant 0 : index
    %48 = vector.load %arg2[%c1_40, %c0_41, %c0_42] : memref<2x64x128xf32, #tpu.memory_space<vmem>>, vector<1x64x128xf32>
    %49 = vector.shape_cast %48 : vector<1x64x128xf32> to vector<64x128xf32>
    %50 = arith.mulf %47, %49 : vector<64x128xf32>
    %51 = arith.truncf %50 : vector<64x128xf32> to vector<64x128xbf16>
    %c0_43 = arith.constant 0 : index
    %c1024 = arith.constant 1024 : index
    %52 = vector.load %arg8[%c0_43, %c1024] : memref<64x1152xbf16, #tpu.memory_space<vmem>>, vector<64x128xbf16>
    tpu.vector_store %arg8[%c0_43, %c1024], %51 {strides = array<i32>} : memref<64x1152xbf16, #tpu.memory_space<vmem>>, vector<64x128xbf16>,
    %c0_44 = arith.constant 0 : index
    %c0_45 = arith.constant 0 : index
    %53 = vector.load %arg8[%c0_44, %c0_45] : memref<64x1152xbf16, #tpu.memory_space<vmem>>, vector<64x1152xbf16>
    %c0_46 = arith.constant 0 : index
    %c0_47 = arith.constant 0 : index
    %54 = vector.load %arg3[%c0_46, %c0_47] : memref<1152x128xbf16, #tpu.memory_space<vmem>>, vector<1152x128xbf16>
    %cst_48 = arith.constant dense<0.000000e+00> : vector<64x128xf32>
    %55 = tpu.matmul %53, %54, %cst_48 {dimension_numbers = #tpu.dot_dimension_numbers<[1], [0], [0], [1], [0, 0, 1, 1], [], []>} : vector<64x1152xbf16>, vector<1152x128xbf16>, vector<64x128xf32> -> vector<64x128xf32>
    %56 = arith.truncf %55 : vector<64x128xf32> to vector<64x128xbf16>
    %c0_49 = arith.constant 0 : index
    %c0_50 = arith.constant 0 : index
    %57 = vector.load %arg4[%c0_49, %c0_50] : memref<64x128xbf16, #tpu.memory_space<vmem>>, vector<64x128xbf16>
    tpu.vector_store %arg4[%c0_49, %c0_50], %56 {strides = array<i32>} : memref<64x128xbf16, #tpu.memory_space<vmem>>, vector<64x128xbf16>,
    %cst_51 = arith.constant dense<0.000000e+00> : vector<128xf32>
    %58 = vector.multi_reduction <add>, %55, %cst_51 [0] : vector<64x128xf32> to vector<128xf32>
    %59 = vector.shape_cast %58 : vector<128xf32> to vector<1x128xf32>
    %c0_52 = arith.constant 0 : index
    %c0_53 = arith.constant 0 : index
    %c0_54 = arith.constant 0 : index
    %60 = vector.load %arg5[%c0_52, %c0_53, %c0_54] : memref<1x1x128xf32, #tpu.memory_space<vmem>>, vector<1x1x128xf32>
    %61 = vector.shape_cast %60 : vector<1x1x128xf32> to vector<1x128xf32>
    %62 = vector.shape_cast %59 : vector<1x128xf32> to vector<1x1x128xf32>
    tpu.vector_store %arg5[%c0_52, %c0_53, %c0_54], %62 {strides = array<i32>} : memref<1x1x128xf32, #tpu.memory_space<vmem>>, vector<1x1x128xf32>,
    %63 = arith.mulf %55, %55 : vector<64x128xf32>
    %cst_55 = arith.constant dense<0.000000e+00> : vector<128xf32>
    %64 = vector.multi_reduction <add>, %63, %cst_55 [0] : vector<64x128xf32> to vector<128xf32>
    %65 = vector.shape_cast %64 : vector<128xf32> to vector<1x128xf32>
    %c0_56 = arith.constant 0 : index
    %c0_57 = arith.constant 0 : index
    %c0_58 = arith.constant 0 : index
    %66 = vector.load %arg6[%c0_56, %c0_57, %c0_58] : memref<1x1x128xf32, #tpu.memory_space<vmem>>, vector<1x1x128xf32>
    %67 = vector.shape_cast %66 : vector<1x1x128xf32> to vector<1x128xf32>
    %68 = vector.shape_cast %65 : vector<1x128xf32> to vector<1x1x128xf32>
    tpu.vector_store %arg6[%c0_56, %c0_57, %c0_58], %68 {strides = array<i32>} : memref<1x1x128xf32, #tpu.memory_space<vmem>>, vector<1x1x128xf32>,
    return
  }
  func.func @transform_0(%arg0: i32) -> (i32, i32, i32, i32) {
    %c0_i32 = arith.constant 0 : i32
    %c0_i32_0 = arith.constant 0 : i32
    %c0_i32_1 = arith.constant 0 : i32
    %c0_i32_2 = arith.constant 0 : i32
    return %arg0, %c0_i32, %c0_i32_0, %c0_i32_1 : i32, i32, i32, i32
  }
  func.func @transform_1(%arg0: i32) -> (i32, i32, i32) {
    %c0_i32 = arith.constant 0 : i32
    %c0_i32_0 = arith.constant 0 : i32
    %c0_i32_1 = arith.constant 0 : i32
    %c0_i32_2 = arith.constant 0 : i32
    return %c0_i32, %c0_i32_0, %c0_i32_1 : i32, i32, i32
  }
  func.func @transform_2(%arg0: i32) -> (i32, i32) {
    %c0_i32 = arith.constant 0 : i32
    %c0_i32_0 = arith.constant 0 : i32
    %c0_i32_1 = arith.constant 0 : i32
    return %c0_i32, %c0_i32_0 : i32, i32
  }
  func.func @transform_3(%arg0: i32) -> (i32, i32) {
    %c0_i32 = arith.constant 0 : i32
    %c0_i32_0 = arith.constant 0 : i32
    return %arg0, %c0_i32 : i32, i32
  }
  func.func @transform_4(%arg0: i32) -> (i32, i32, i32) {
    %c0_i32 = arith.constant 0 : i32
    %c0_i32_0 = arith.constant 0 : i32
    %c0_i32_1 = arith.constant 0 : i32
    return %arg0, %c0_i32, %c0_i32_0 : i32, i32, i32
  }
  func.func @transform_5(%arg0: i32) -> (i32, i32, i32) {
    %c0_i32 = arith.constant 0 : i32
    %c0_i32_0 = arith.constant 0 : i32
    %c0_i32_1 = arith.constant 0 : i32
    return %arg0, %c0_i32, %c0_i32_0 : i32, i32, i32
  }
}

module attributes {stable_mosaic.version = 11 : i64} {
  func.func @_bn_act_conv1x1_kernel(%arg0: i32, %arg1: memref<64x128xbf16, #tpu.memory_space<vmem>>, %arg2: memref<2x128xf32, #tpu.memory_space<vmem>>, %arg3: memref<128x128xbf16, #tpu.memory_space<vmem>>, %arg4: memref<64x128xbf16, #tpu.memory_space<vmem>>, %arg5: memref<1x1x128xf32, #tpu.memory_space<vmem>>, %arg6: memref<1x1x128xf32, #tpu.memory_space<vmem>>) attributes {dimension_semantics = [#tpu.dimension_semantics<parallel>], iteration_bounds = array<i64: 2>, scalar_prefetch = 0 : i64, scratch_operands = 0 : i64, tpu.core_type = #tpu.core_type<tc>, window_params = [{transform_indices = @transform_0, window_bounds = array<i64: 64, 128>}, {pipeline_mode = #tpu.pipeline_mode<synchronous>, transform_indices = @transform_1, window_bounds = array<i64: 2, 128>}, {pipeline_mode = #tpu.pipeline_mode<synchronous>, transform_indices = @transform_2, window_bounds = array<i64: 128, 128>}, {transform_indices = @transform_3, window_bounds = array<i64: 64, 128>}, {transform_indices = @transform_4, window_bounds = array<i64: 1, 1, 128>}, {transform_indices = @transform_5, window_bounds = array<i64: 1, 1, 128>}]} {
    %c0 = arith.constant 0 : index
    %c0_0 = arith.constant 0 : index
    %0 = vector.load %arg1[%c0, %c0_0] : memref<64x128xbf16, #tpu.memory_space<vmem>>, vector<64x128xbf16>
    %1 = arith.extf %0 : vector<64x128xbf16> to vector<64x128xf32>
    %c0_1 = arith.constant 0 : index
    %c0_2 = arith.constant 0 : index
    %2 = vector.load %arg2[%c0_1, %c0_2] : memref<2x128xf32, #tpu.memory_space<vmem>>, vector<1x128xf32>
    %3 = vector.broadcast %2 : vector<1x128xf32> to vector<64x128xf32>
    %4 = arith.mulf %1, %3 : vector<64x128xf32>
    %c1 = arith.constant 1 : index
    %c0_3 = arith.constant 0 : index
    %5 = vector.load %arg2[%c1, %c0_3] : memref<2x128xf32, #tpu.memory_space<vmem>>, vector<1x128xf32>
    %6 = vector.broadcast %5 : vector<1x128xf32> to vector<64x128xf32>
    %7 = arith.addf %4, %6 : vector<64x128xf32>
    %cst = arith.constant 0.000000e+00 : f32
    %8 = vector.broadcast %cst : f32 to vector<64x128xf32>
    %9 = arith.maximumf %7, %8 : vector<64x128xf32>
    %10 = arith.truncf %9 : vector<64x128xf32> to vector<64x128xbf16>
    %c0_4 = arith.constant 0 : index
    %c0_5 = arith.constant 0 : index
    %11 = vector.load %arg3[%c0_4, %c0_5] : memref<128x128xbf16, #tpu.memory_space<vmem>>, vector<128x128xbf16>
    %cst_6 = arith.constant dense<0.000000e+00> : vector<64x128xf32>
    %12 = tpu.matmul %10, %11, %cst_6 {dimension_numbers = #tpu.dot_dimension_numbers<[1], [0], [0], [1], [0, 0, 1, 1], [], []>} : vector<64x128xbf16>, vector<128x128xbf16>, vector<64x128xf32> -> vector<64x128xf32>
    %13 = arith.truncf %12 : vector<64x128xf32> to vector<64x128xbf16>
    %c0_7 = arith.constant 0 : index
    %c0_8 = arith.constant 0 : index
    %14 = vector.load %arg4[%c0_7, %c0_8] : memref<64x128xbf16, #tpu.memory_space<vmem>>, vector<64x128xbf16>
    tpu.vector_store %arg4[%c0_7, %c0_8], %13 {strides = array<i32>} : memref<64x128xbf16, #tpu.memory_space<vmem>>, vector<64x128xbf16>,
    %cst_9 = arith.constant dense<0.000000e+00> : vector<128xf32>
    %15 = vector.multi_reduction <add>, %12, %cst_9 [0] : vector<64x128xf32> to vector<128xf32>
    %16 = vector.shape_cast %15 : vector<128xf32> to vector<1x128xf32>
    %c0_10 = arith.constant 0 : index
    %c0_11 = arith.constant 0 : index
    %c0_12 = arith.constant 0 : index
    %17 = vector.load %arg5[%c0_10, %c0_11, %c0_12] : memref<1x1x128xf32, #tpu.memory_space<vmem>>, vector<1x1x128xf32>
    %18 = vector.shape_cast %17 : vector<1x1x128xf32> to vector<1x128xf32>
    %19 = vector.shape_cast %16 : vector<1x128xf32> to vector<1x1x128xf32>
    tpu.vector_store %arg5[%c0_10, %c0_11, %c0_12], %19 {strides = array<i32>} : memref<1x1x128xf32, #tpu.memory_space<vmem>>, vector<1x1x128xf32>,
    %20 = arith.mulf %12, %12 : vector<64x128xf32>
    %cst_13 = arith.constant dense<0.000000e+00> : vector<128xf32>
    %21 = vector.multi_reduction <add>, %20, %cst_13 [0] : vector<64x128xf32> to vector<128xf32>
    %22 = vector.shape_cast %21 : vector<128xf32> to vector<1x128xf32>
    %c0_14 = arith.constant 0 : index
    %c0_15 = arith.constant 0 : index
    %c0_16 = arith.constant 0 : index
    %23 = vector.load %arg6[%c0_14, %c0_15, %c0_16] : memref<1x1x128xf32, #tpu.memory_space<vmem>>, vector<1x1x128xf32>
    %24 = vector.shape_cast %23 : vector<1x1x128xf32> to vector<1x128xf32>
    %25 = vector.shape_cast %22 : vector<1x128xf32> to vector<1x1x128xf32>
    tpu.vector_store %arg6[%c0_14, %c0_15, %c0_16], %25 {strides = array<i32>} : memref<1x1x128xf32, #tpu.memory_space<vmem>>, vector<1x1x128xf32>,
    return
  }
  func.func @transform_0(%arg0: i32) -> (i32, i32) {
    %c0_i32 = arith.constant 0 : i32
    %c0_i32_0 = arith.constant 0 : i32
    return %arg0, %c0_i32 : i32, i32
  }
  func.func @transform_1(%arg0: i32) -> (i32, i32) {
    %c0_i32 = arith.constant 0 : i32
    %c0_i32_0 = arith.constant 0 : i32
    %c0_i32_1 = arith.constant 0 : i32
    return %c0_i32, %c0_i32_0 : i32, i32
  }
  func.func @transform_2(%arg0: i32) -> (i32, i32) {
    %c0_i32 = arith.constant 0 : i32
    %c0_i32_0 = arith.constant 0 : i32
    %c0_i32_1 = arith.constant 0 : i32
    return %c0_i32, %c0_i32_0 : i32, i32
  }
  func.func @transform_3(%arg0: i32) -> (i32, i32) {
    %c0_i32 = arith.constant 0 : i32
    %c0_i32_0 = arith.constant 0 : i32
    return %arg0, %c0_i32 : i32, i32
  }
  func.func @transform_4(%arg0: i32) -> (i32, i32, i32) {
    %c0_i32 = arith.constant 0 : i32
    %c0_i32_0 = arith.constant 0 : i32
    %c0_i32_1 = arith.constant 0 : i32
    return %arg0, %c0_i32, %c0_i32_0 : i32, i32, i32
  }
  func.func @transform_5(%arg0: i32) -> (i32, i32, i32) {
    %c0_i32 = arith.constant 0 : i32
    %c0_i32_0 = arith.constant 0 : i32
    %c0_i32_1 = arith.constant 0 : i32
    return %arg0, %c0_i32, %c0_i32_0 : i32, i32, i32
  }
}

module attributes {stable_mosaic.version = 11 : i64} {
  func.func @_res_act_conv3x3_kernel(%arg0: i32, %arg1: memref<1x8x8x128xf32, #tpu.memory_space<vmem>>, %arg2: memref<1x8x8x128xbf16, #tpu.memory_space<vmem>>, %arg3: memref<2x128xf32, #tpu.memory_space<vmem>>, %arg4: memref<2x64x128xf32, #tpu.memory_space<vmem>>, %arg5: memref<1152x128xbf16, #tpu.memory_space<vmem>>, %arg6: memref<1x8x8x128xf32, #tpu.memory_space<vmem>>, %arg7: memref<64x128xbf16, #tpu.memory_space<vmem>>, %arg8: memref<1x1x128xf32, #tpu.memory_space<vmem>>, %arg9: memref<1x1x128xf32, #tpu.memory_space<vmem>>, %arg10: memref<96x128xf32, #tpu.memory_space<vmem>>, %arg11: memref<64x1152xbf16, #tpu.memory_space<vmem>>) attributes {dimension_semantics = [#tpu.dimension_semantics<parallel>], iteration_bounds = array<i64: 2>, scalar_prefetch = 0 : i64, scratch_operands = 2 : i64, tpu.core_type = #tpu.core_type<tc>, window_params = [{transform_indices = @transform_0, window_bounds = array<i64: 1, 8, 8, 128>}, {transform_indices = @transform_1, window_bounds = array<i64: 1, 8, 8, 128>}, {pipeline_mode = #tpu.pipeline_mode<synchronous>, transform_indices = @transform_2, window_bounds = array<i64: 2, 128>}, {pipeline_mode = #tpu.pipeline_mode<synchronous>, transform_indices = @transform_3, window_bounds = array<i64: 2, 64, 128>}, {pipeline_mode = #tpu.pipeline_mode<synchronous>, transform_indices = @transform_4, window_bounds = array<i64: 1152, 128>}, {transform_indices = @transform_5, window_bounds = array<i64: 1, 8, 8, 128>}, {transform_indices = @transform_6, window_bounds = array<i64: 64, 128>}, {transform_indices = @transform_7, window_bounds = array<i64: 1, 1, 128>}, {transform_indices = @transform_8, window_bounds = array<i64: 1, 1, 128>}]} {
    %c0 = arith.constant 0 : index
    %c0_0 = arith.constant 0 : index
    %0 = vector.load %arg3[%c0, %c0_0] : memref<2x128xf32, #tpu.memory_space<vmem>>, vector<1x128xf32>
    %1 = vector.shape_cast %0 : vector<1x128xf32> to vector<1x1x128xf32>
    %c1 = arith.constant 1 : index
    %c0_1 = arith.constant 0 : index
    %2 = vector.load %arg3[%c1, %c0_1] : memref<2x128xf32, #tpu.memory_space<vmem>>, vector<1x128xf32>
    %3 = vector.shape_cast %2 : vector<1x128xf32> to vector<1x1x128xf32>
    %c0_2 = arith.constant 0 : index
    %c0_3 = arith.constant 0 : index
    %c0_4 = arith.constant 0 : index
    %c0_5 = arith.constant 0 : index
    %4 = vector.load %arg1[%c0_2, %c0_3, %c0_4, %c0_5] : memref<1x8x8x128xf32, #tpu.memory_space<vmem>>, vector<1x8x8x128xf32>
    %5 = vector.shape_cast %4 : vector<1x8x8x128xf32> to vector<8x8x128xf32>
    %c0_6 = arith.constant 0 : index
    %c0_7 = arith.constant 0 : index
    %c0_8 = arith.constant 0 : index
    %c0_9 = arith.constant 0 : index
    %6 = vector.load %arg2[%c0_6, %c0_7, %c0_8, %c0_9] : memref<1x8x8x128xbf16, #tpu.memory_space<vmem>>, vector<1x8x8x128xbf16>
    %7 = vector.shape_cast %6 : vector<1x8x8x128xbf16> to vector<8x8x128xbf16>
    %8 = arith.extf %7 : vector<8x8x128xbf16> to vector<8x8x128xf32>
    %9 = vector.broadcast %1 : vector<1x1x128xf32> to vector<8x8x128xf32>
    %10 = arith.mulf %8, %9 : vector<8x8x128xf32>
    %11 = arith.addf %5, %10 : vector<8x8x128xf32>
    %12 = vector.broadcast %3 : vector<1x1x128xf32> to vector<8x8x128xf32>
    %13 = arith.addf %11, %12 : vector<8x8x128xf32>
    %c0_10 = arith.constant 0 : index
    %c0_11 = arith.constant 0 : index
    %c0_12 = arith.constant 0 : index
    %c0_13 = arith.constant 0 : index
    %14 = vector.load %arg6[%c0_10, %c0_11, %c0_12, %c0_13] : memref<1x8x8x128xf32, #tpu.memory_space<vmem>>, vector<1x8x8x128xf32>
    %15 = vector.shape_cast %14 : vector<1x8x8x128xf32> to vector<8x8x128xf32>
    %16 = vector.shape_cast %13 : vector<8x8x128xf32> to vector<1x8x8x128xf32>
    tpu.vector_store %arg6[%c0_10, %c0_11, %c0_12, %c0_13], %16 {strides = array<i32>} : memref<1x8x8x128xf32, #tpu.memory_space<vmem>>, vector<1x8x8x128xf32>,
    %cst = arith.constant 0.000000e+00 : f32
    %17 = vector.broadcast %cst : f32 to vector<8x8x128xf32>
    %18 = arith.maximumf %13, %17 : vector<8x8x128xf32>
    %cst_14 = arith.constant 0.000000e+00 : f32
    %19 = vector.broadcast %cst_14 : f32 to vector<96x128xf32>
    %c0_15 = arith.constant 0 : index
    %c0_16 = arith.constant 0 : index
    %20 = vector.load %arg10[%c0_15, %c0_16] : memref<96x128xf32, #tpu.memory_space<vmem>>, vector<96x128xf32>
    tpu.vector_store %arg10[%c0_15, %c0_16], %19 {strides = array<i32>} : memref<96x128xf32, #tpu.memory_space<vmem>>, vector<96x128xf32>,
    %21 = vector.shape_cast %18 : vector<8x8x128xf32> to vector<64x128xf32>
    %c16 = arith.constant 16 : index
    %c0_17 = arith.constant 0 : index
    %22 = vector.load %arg10[%c16, %c0_17] : memref<96x128xf32, #tpu.memory_space<vmem>>, vector<64x128xf32>
    tpu.vector_store %arg10[%c16, %c0_17], %21 {strides = array<i32>} : memref<96x128xf32, #tpu.memory_space<vmem>>, vector<64x128xf32>,
    %c7 = arith.constant 7 : index
    %c0_18 = arith.constant 0 : index
    %23 = vector.load %arg10[%c7, %c0_18] : memref<96x128xf32, #tpu.memory_space<vmem>>, vector<64x128xf32>
    %c0_19 = arith.constant 0 : index
    %c0_20 = arith.constant 0 : index
    %c0_21 = arith.constant 0 : index
    %24 = vector.load %arg4[%c0_19, %c0_20, %c0_21] : memref<2x64x128xf32, #tpu.memory_space<vmem>>, vector<1x64x128xf32>
    %25 = vector.shape_cast %24 : vector<1x64x128xf32> to vector<64x128xf32>
    %26 = arith.mulf %23, %25 : vector<64x128xf32>
    %27 = arith.truncf %26 : vector<64x128xf32> to vector<64x128xbf16>
    %c0_22 = arith.constant 0 : index
    %c0_23 = arith.constant 0 : index
    %28 = vector.load %arg11[%c0_22, %c0_23] : memref<64x1152xbf16, #tpu.memory_space<vmem>>, vector<64x128xbf16>
    tpu.vector_store %arg11[%c0_22, %c0_23], %27 {strides = array<i32>} : memref<64x1152xbf16, #tpu.memory_space<vmem>>, vector<64x128xbf16>,
    %c8 = arith.constant 8 : index
    %c0_24 = arith.constant 0 : index
    %29 = vector.load %arg10[%c8, %c0_24] : memref<96x128xf32, #tpu.memory_space<vmem>>, vector<64x128xf32>
    %30 = arith.truncf %29 : vector<64x128xf32> to vector<64x128xbf16>
    %c0_25 = arith.constant 0 : index
    %c128 = arith.constant 128 : index
    %31 = vector.load %arg11[%c0_25, %c128] : memref<64x1152xbf16, #tpu.memory_space<vmem>>, vector<64x128xbf16>
    tpu.vector_store %arg11[%c0_25, %c128], %30 {strides = array<i32>} : memref<64x1152xbf16, #tpu.memory_space<vmem>>, vector<64x128xbf16>,
    %c9 = arith.constant 9 : index
    %c0_26 = arith.constant 0 : index
    %32 = vector.load %arg10[%c9, %c0_26] : memref<96x128xf32, #tpu.memory_space<vmem>>, vector<64x128xf32>
    %c1_27 = arith.constant 1 : index
    %c0_28 = arith.constant 0 : index
    %c0_29 = arith.constant 0 : index
    %33 = vector.load %arg4[%c1_27, %c0_28, %c0_29] : memref<2x64x128xf32, #tpu.memory_space<vmem>>, vector<1x64x128xf32>
    %34 = vector.shape_cast %33 : vector<1x64x128xf32> to vector<64x128xf32>
    %35 = arith.mulf %32, %34 : vector<64x128xf32>
    %36 = arith.truncf %35 : vector<64x128xf32> to vector<64x128xbf16>
    %c0_30 = arith.constant 0 : index
    %c256 = arith.constant 256 : index
    %37 = vector.load %arg11[%c0_30, %c256] : memref<64x1152xbf16, #tpu.memory_space<vmem>>, vector<64x128xbf16>
    tpu.vector_store %arg11[%c0_30, %c256], %36 {strides = array<i32>} : memref<64x1152xbf16, #tpu.memory_space<vmem>>, vector<64x128xbf16>,
    %c15 = arith.constant 15 : index
    %c0_31 = arith.constant 0 : index
    %38 = vector.load %arg10[%c15, %c0_31] : memref<96x128xf32, #tpu.memory_space<vmem>>, vector<64x128xf32>
    %c0_32 = arith.constant 0 : index
    %c0_33 = arith.constant 0 : index
    %c0_34 = arith.constant 0 : index
    %39 = vector.load %arg4[%c0_32, %c0_33, %c0_34] : memref<2x64x128xf32, #tpu.memory_space<vmem>>, vector<1x64x128xf32>
    %40 = vector.shape_cast %39 : vector<1x64x128xf32> to vector<64x128xf32>
    %41 = arith.mulf %38, %40 : vector<64x128xf32>
    %42 = arith.truncf %41 : vector<64x128xf32> to vector<64x128xbf16>
    %c0_35 = arith.constant 0 : index
    %c384 = arith.constant 384 : index
    %43 = vector.load %arg11[%c0_35, %c384] : memref<64x1152xbf16, #tpu.memory_space<vmem>>, vector<64x128xbf16>
    tpu.vector_store %arg11[%c0_35, %c384], %42 {strides = array<i32>} : memref<64x1152xbf16, #tpu.memory_space<vmem>>, vector<64x128xbf16>,
    %c16_36 = arith.constant 16 : index
    %c0_37 = arith.constant 0 : index
    %44 = vector.load %arg10[%c16_36, %c0_37] : memref<96x128xf32, #tpu.memory_space<vmem>>, vector<64x128xf32>
    %45 = arith.truncf %44 : vector<64x128xf32> to vector<64x128xbf16>
    %c0_38 = arith.constant 0 : index
    %c512 = arith.constant 512 : index
    %46 = vector.load %arg11[%c0_38, %c512] : memref<64x1152xbf16, #tpu.memory_space<vmem>>, vector<64x128xbf16>
    tpu.vector_store %arg11[%c0_38, %c512], %45 {strides = array<i32>} : memref<64x1152xbf16, #tpu.memory_space<vmem>>, vector<64x128xbf16>,
    %c17 = arith.constant 17 : index
    %c0_39 = arith.constant 0 : index
    %47 = vector.load %arg10[%c17, %c0_39] : memref<96x128xf32, #tpu.memory_space<vmem>>, vector<64x128xf32>
    %c1_40 = arith.constant 1 : index
    %c0_41 = arith.constant 0 : index
    %c0_42 = arith.constant 0 : index
    %48 = vector.load %arg4[%c1_40, %c0_41, %c0_42] : memref<2x64x128xf32, #tpu.memory_space<vmem>>, vector<1x64x128xf32>
    %49 = vector.shape_cast %48 : vector<1x64x128xf32> to vector<64x128xf32>
    %50 = arith.mulf %47, %49 : vector<64x128xf32>
    %51 = arith.truncf %50 : vector<64x128xf32> to vector<64x128xbf16>
    %c0_43 = arith.constant 0 : index
    %c640 = arith.constant 640 : index
    %52 = vector.load %arg11[%c0_43, %c640] : memref<64x1152xbf16, #tpu.memory_space<vmem>>, vector<64x128xbf16>
    tpu.vector_store %arg11[%c0_43, %c640], %51 {strides = array<i32>} : memref<64x1152xbf16, #tpu.memory_space<vmem>>, vector<64x128xbf16>,
    %c23 = arith.constant 23 : index
    %c0_44 = arith.constant 0 : index
    %53 = vector.load %arg10[%c23, %c0_44] : memref<96x128xf32, #tpu.memory_space<vmem>>, vector<64x128xf32>
    %c0_45 = arith.constant 0 : index
    %c0_46 = arith.constant 0 : index
    %c0_47 = arith.constant 0 : index
    %54 = vector.load %arg4[%c0_45, %c0_46, %c0_47] : memref<2x64x128xf32, #tpu.memory_space<vmem>>, vector<1x64x128xf32>
    %55 = vector.shape_cast %54 : vector<1x64x128xf32> to vector<64x128xf32>
    %56 = arith.mulf %53, %55 : vector<64x128xf32>
    %57 = arith.truncf %56 : vector<64x128xf32> to vector<64x128xbf16>
    %c0_48 = arith.constant 0 : index
    %c768 = arith.constant 768 : index
    %58 = vector.load %arg11[%c0_48, %c768] : memref<64x1152xbf16, #tpu.memory_space<vmem>>, vector<64x128xbf16>
    tpu.vector_store %arg11[%c0_48, %c768], %57 {strides = array<i32>} : memref<64x1152xbf16, #tpu.memory_space<vmem>>, vector<64x128xbf16>,
    %c24 = arith.constant 24 : index
    %c0_49 = arith.constant 0 : index
    %59 = vector.load %arg10[%c24, %c0_49] : memref<96x128xf32, #tpu.memory_space<vmem>>, vector<64x128xf32>
    %60 = arith.truncf %59 : vector<64x128xf32> to vector<64x128xbf16>
    %c0_50 = arith.constant 0 : index
    %c896 = arith.constant 896 : index
    %61 = vector.load %arg11[%c0_50, %c896] : memref<64x1152xbf16, #tpu.memory_space<vmem>>, vector<64x128xbf16>
    tpu.vector_store %arg11[%c0_50, %c896], %60 {strides = array<i32>} : memref<64x1152xbf16, #tpu.memory_space<vmem>>, vector<64x128xbf16>,
    %c25 = arith.constant 25 : index
    %c0_51 = arith.constant 0 : index
    %62 = vector.load %arg10[%c25, %c0_51] : memref<96x128xf32, #tpu.memory_space<vmem>>, vector<64x128xf32>
    %c1_52 = arith.constant 1 : index
    %c0_53 = arith.constant 0 : index
    %c0_54 = arith.constant 0 : index
    %63 = vector.load %arg4[%c1_52, %c0_53, %c0_54] : memref<2x64x128xf32, #tpu.memory_space<vmem>>, vector<1x64x128xf32>
    %64 = vector.shape_cast %63 : vector<1x64x128xf32> to vector<64x128xf32>
    %65 = arith.mulf %62, %64 : vector<64x128xf32>
    %66 = arith.truncf %65 : vector<64x128xf32> to vector<64x128xbf16>
    %c0_55 = arith.constant 0 : index
    %c1024 = arith.constant 1024 : index
    %67 = vector.load %arg11[%c0_55, %c1024] : memref<64x1152xbf16, #tpu.memory_space<vmem>>, vector<64x128xbf16>
    tpu.vector_store %arg11[%c0_55, %c1024], %66 {strides = array<i32>} : memref<64x1152xbf16, #tpu.memory_space<vmem>>, vector<64x128xbf16>,
    %c0_56 = arith.constant 0 : index
    %c0_57 = arith.constant 0 : index
    %68 = vector.load %arg11[%c0_56, %c0_57] : memref<64x1152xbf16, #tpu.memory_space<vmem>>, vector<64x1152xbf16>
    %c0_58 = arith.constant 0 : index
    %c0_59 = arith.constant 0 : index
    %69 = vector.load %arg5[%c0_58, %c0_59] : memref<1152x128xbf16, #tpu.memory_space<vmem>>, vector<1152x128xbf16>
    %cst_60 = arith.constant dense<0.000000e+00> : vector<64x128xf32>
    %70 = tpu.matmul %68, %69, %cst_60 {dimension_numbers = #tpu.dot_dimension_numbers<[1], [0], [0], [1], [0, 0, 1, 1], [], []>} : vector<64x1152xbf16>, vector<1152x128xbf16>, vector<64x128xf32> -> vector<64x128xf32>
    %71 = arith.truncf %70 : vector<64x128xf32> to vector<64x128xbf16>
    %c0_61 = arith.constant 0 : index
    %c0_62 = arith.constant 0 : index
    %72 = vector.load %arg7[%c0_61, %c0_62] : memref<64x128xbf16, #tpu.memory_space<vmem>>, vector<64x128xbf16>
    tpu.vector_store %arg7[%c0_61, %c0_62], %71 {strides = array<i32>} : memref<64x128xbf16, #tpu.memory_space<vmem>>, vector<64x128xbf16>,
    %cst_63 = arith.constant dense<0.000000e+00> : vector<128xf32>
    %73 = vector.multi_reduction <add>, %70, %cst_63 [0] : vector<64x128xf32> to vector<128xf32>
    %74 = vector.shape_cast %73 : vector<128xf32> to vector<1x128xf32>
    %c0_64 = arith.constant 0 : index
    %c0_65 = arith.constant 0 : index
    %c0_66 = arith.constant 0 : index
    %75 = vector.load %arg8[%c0_64, %c0_65, %c0_66] : memref<1x1x128xf32, #tpu.memory_space<vmem>>, vector<1x1x128xf32>
    %76 = vector.shape_cast %75 : vector<1x1x128xf32> to vector<1x128xf32>
    %77 = vector.shape_cast %74 : vector<1x128xf32> to vector<1x1x128xf32>
    tpu.vector_store %arg8[%c0_64, %c0_65, %c0_66], %77 {strides = array<i32>} : memref<1x1x128xf32, #tpu.memory_space<vmem>>, vector<1x1x128xf32>,
    %78 = arith.mulf %70, %70 : vector<64x128xf32>
    %cst_67 = arith.constant dense<0.000000e+00> : vector<128xf32>
    %79 = vector.multi_reduction <add>, %78, %cst_67 [0] : vector<64x128xf32> to vector<128xf32>
    %80 = vector.shape_cast %79 : vector<128xf32> to vector<1x128xf32>
    %c0_68 = arith.constant 0 : index
    %c0_69 = arith.constant 0 : index
    %c0_70 = arith.constant 0 : index
    %81 = vector.load %arg9[%c0_68, %c0_69, %c0_70] : memref<1x1x128xf32, #tpu.memory_space<vmem>>, vector<1x1x128xf32>
    %82 = vector.shape_cast %81 : vector<1x1x128xf32> to vector<1x128xf32>
    %83 = vector.shape_cast %80 : vector<1x128xf32> to vector<1x1x128xf32>
    tpu.vector_store %arg9[%c0_68, %c0_69, %c0_70], %83 {strides = array<i32>} : memref<1x1x128xf32, #tpu.memory_space<vmem>>, vector<1x1x128xf32>,
    return
  }
  func.func @transform_0(%arg0: i32) -> (i32, i32, i32, i32) {
    %c0_i32 = arith.constant 0 : i32
    %c0_i32_0 = arith.constant 0 : i32
    %c0_i32_1 = arith.constant 0 : i32
    %c0_i32_2 = arith.constant 0 : i32
    return %arg0, %c0_i32, %c0_i32_0, %c0_i32_1 : i32, i32, i32, i32
  }
  func.func @transform_1(%arg0: i32) -> (i32, i32, i32, i32) {
    %c0_i32 = arith.constant 0 : i32
    %c0_i32_0 = arith.constant 0 : i32
    %c0_i32_1 = arith.constant 0 : i32
    %c0_i32_2 = arith.constant 0 : i32
    return %arg0, %c0_i32, %c0_i32_0, %c0_i32_1 : i32, i32, i32, i32
  }
  func.func @transform_2(%arg0: i32) -> (i32, i32) {
    %c0_i32 = arith.constant 0 : i32
    %c0_i32_0 = arith.constant 0 : i32
    %c0_i32_1 = arith.constant 0 : i32
    return %c0_i32, %c0_i32_0 : i32, i32
  }
  func.func @transform_3(%arg0: i32) -> (i32, i32, i32) {
    %c0_i32 = arith.constant 0 : i32
    %c0_i32_0 = arith.constant 0 : i32
    %c0_i32_1 = arith.constant 0 : i32
    %c0_i32_2 = arith.constant 0 : i32
    return %c0_i32, %c0_i32_0, %c0_i32_1 : i32, i32, i32
  }
  func.func @transform_4(%arg0: i32) -> (i32, i32) {
    %c0_i32 = arith.constant 0 : i32
    %c0_i32_0 = arith.constant 0 : i32
    %c0_i32_1 = arith.constant 0 : i32
    return %c0_i32, %c0_i32_0 : i32, i32
  }
  func.func @transform_5(%arg0: i32) -> (i32, i32, i32, i32) {
    %c0_i32 = arith.constant 0 : i32
    %c0_i32_0 = arith.constant 0 : i32
    %c0_i32_1 = arith.constant 0 : i32
    %c0_i32_2 = arith.constant 0 : i32
    return %arg0, %c0_i32, %c0_i32_0, %c0_i32_1 : i32, i32, i32, i32
  }
  func.func @transform_6(%arg0: i32) -> (i32, i32) {
    %c0_i32 = arith.constant 0 : i32
    %c0_i32_0 = arith.constant 0 : i32
    return %arg0, %c0_i32 : i32, i32
  }
  func.func @transform_7(%arg0: i32) -> (i32, i32, i32) {
    %c0_i32 = arith.constant 0 : i32
    %c0_i32_0 = arith.constant 0 : i32
    %c0_i32_1 = arith.constant 0 : i32
    return %arg0, %c0_i32, %c0_i32_0 : i32, i32, i32
  }
  func.func @transform_8(%arg0: i32) -> (i32, i32, i32) {
    %c0_i32 = arith.constant 0 : i32
    %c0_i32_0 = arith.constant 0 : i32
    %c0_i32_1 = arith.constant 0 : i32
    return %arg0, %c0_i32, %c0_i32_0 : i32, i32, i32
  }
}

module attributes {stable_mosaic.version = 11 : i64} {
  func.func @_bn_residual_kernel(%arg0: i32, %arg1: memref<64x128xf32, #tpu.memory_space<vmem>>, %arg2: memref<64x128xbf16, #tpu.memory_space<vmem>>, %arg3: memref<2x128xf32, #tpu.memory_space<vmem>>, %arg4: memref<64x128xf32, #tpu.memory_space<vmem>>) attributes {dimension_semantics = [#tpu.dimension_semantics<parallel>], iteration_bounds = array<i64: 2>, scalar_prefetch = 0 : i64, scratch_operands = 0 : i64, tpu.core_type = #tpu.core_type<tc>, window_params = [{transform_indices = @transform_0, window_bounds = array<i64: 64, 128>}, {transform_indices = @transform_1, window_bounds = array<i64: 64, 128>}, {pipeline_mode = #tpu.pipeline_mode<synchronous>, transform_indices = @transform_2, window_bounds = array<i64: 2, 128>}, {transform_indices = @transform_3, window_bounds = array<i64: 64, 128>}]} {
    %c0 = arith.constant 0 : index
    %c0_0 = arith.constant 0 : index
    %0 = vector.load %arg1[%c0, %c0_0] : memref<64x128xf32, #tpu.memory_space<vmem>>, vector<64x128xf32>
    %c0_1 = arith.constant 0 : index
    %c0_2 = arith.constant 0 : index
    %1 = vector.load %arg2[%c0_1, %c0_2] : memref<64x128xbf16, #tpu.memory_space<vmem>>, vector<64x128xbf16>
    %2 = arith.extf %1 : vector<64x128xbf16> to vector<64x128xf32>
    %c0_3 = arith.constant 0 : index
    %c0_4 = arith.constant 0 : index
    %3 = vector.load %arg3[%c0_3, %c0_4] : memref<2x128xf32, #tpu.memory_space<vmem>>, vector<1x128xf32>
    %4 = vector.broadcast %3 : vector<1x128xf32> to vector<64x128xf32>
    %5 = arith.mulf %2, %4 : vector<64x128xf32>
    %6 = arith.addf %0, %5 : vector<64x128xf32>
    %c1 = arith.constant 1 : index
    %c0_5 = arith.constant 0 : index
    %7 = vector.load %arg3[%c1, %c0_5] : memref<2x128xf32, #tpu.memory_space<vmem>>, vector<1x128xf32>
    %8 = vector.broadcast %7 : vector<1x128xf32> to vector<64x128xf32>
    %9 = arith.addf %6, %8 : vector<64x128xf32>
    %c0_6 = arith.constant 0 : index
    %c0_7 = arith.constant 0 : index
    %10 = vector.load %arg4[%c0_6, %c0_7] : memref<64x128xf32, #tpu.memory_space<vmem>>, vector<64x128xf32>
    tpu.vector_store %arg4[%c0_6, %c0_7], %9 {strides = array<i32>} : memref<64x128xf32, #tpu.memory_space<vmem>>, vector<64x128xf32>,
    return
  }
  func.func @transform_0(%arg0: i32) -> (i32, i32) {
    %c0_i32 = arith.constant 0 : i32
    %c0_i32_0 = arith.constant 0 : i32
    return %arg0, %c0_i32 : i32, i32
  }
  func.func @transform_1(%arg0: i32) -> (i32, i32) {
    %c0_i32 = arith.constant 0 : i32
    %c0_i32_0 = arith.constant 0 : i32
    return %arg0, %c0_i32 : i32, i32
  }
  func.func @transform_2(%arg0: i32) -> (i32, i32) {
    %c0_i32 = arith.constant 0 : i32
    %c0_i32_0 = arith.constant 0 : i32
    %c0_i32_1 = arith.constant 0 : i32
    return %c0_i32, %c0_i32_0 : i32, i32
  }
  func.func @transform_3(%arg0: i32) -> (i32, i32) {
    %c0_i32 = arith.constant 0 : i32
    %c0_i32_0 = arith.constant 0 : i32
    return %arg0, %c0_i32 : i32, i32
  }
}

</mosaic_0001>

<llo_original>
// kernel: encoder_forward.8
$region0: #{encoder_forward.8}
  #allocation0 [shape = 'u32[]', space=smem, size = 0x4, offset = 0x4, fixed_abs, tag = 'smem constant byte address 0x4 - core index']
  #allocation1 [shape = 'u32[144,128]{1,0:T(1,128)}', space=vmem, size = 0x12000, scoped, tag = 'internal scratch']
  %s0 = inlined_call_operand.vmem [shape: bf16[128,128], index: 0, kind: input, shape index: {}]
  %s1 = inlined_call_operand.vmem [shape: f32[2,128], index: 1, kind: input, shape index: {}]
  %s2 = inlined_call_operand.vmem [shape: bf16[128,128], index: 2, kind: input, shape index: {}]
  %s3 = inlined_call_operand.vmem [shape: bf16[128,128], index: 3, kind: output, shape index: {0}]
  %s4 = inlined_call_operand.vmem [shape: f32[2,1,128], index: 4, kind: output, shape index: {1}]
  %s5 = inlined_call_operand.vmem [shape: f32[2,1,128], index: 5, kind: output, shape index: {2}]
  %6 = xla_tuple %s3, %s4, %s5
  %s7 = sld [smem:[#allocation0]]
  $region61: #{encoder_forward.8} parent=0
    _
  %s9 = ssub.s32 1, %s7
  %s10 = scalar_select 0, %s9, %s7
  loop: start=0, step=1, limit=4
  $region2: #{encoder_forward.8} parent=0 // loop_pre_header
    _
  $region3: #{encoder_forward.8} parent=0 // loop_header
    %s12 = sphi 0, %s16
    %p13 = scmp.ge.s32.totalorder %s12, 4
    %s22 = sphi 0, %s24
    %s25 = sphi 0, %s22
    %s26 = sphi 0, %s25
    %s42 = sphi 0, %s26
    %s46 = sphi 0, %s46
    %s48 = sphi 0, %s46
    %s49 = sphi 0, %s48
    %s63 = sphi 0, %s49
    %s67 = sphi 0, %s67
    %s69 = sphi 0, %s67
    %s70 = sphi 0, %s69
    %s84 = sphi 0, %s70
    %s90 = sphi 0, %s92
    %s93 = sphi 0, %s90
    %s94 = sphi 0, %s93
    %s110 = sphi 0, %s94
    %s116 = sphi 0, %s118
    %s119 = sphi 0, %s116
    %s120 = sphi 0, %s119
    %s136 = sphi 0, %s120
    %s142 = sphi 0, %s144
    %s145 = sphi 0, %s142
    %s146 = sphi 0, %s145
    %s162 = sphi 0, %s146
  $region4: #{encoder_forward.8} parent=0 // loop_header_branch
    %15 = sbr.rel (%p13) target = $region8
  $region5: #{encoder_forward.8} parent=0 // loop_body
    %s17 = ssub.s32 %s12, 1
    %s18 = ssub.s32 %s12, 2
    %s19 = sadd.s32 %s12, 1
    %s20 = ssub.s32 %s12, %s19
    %p21 = scmp.eq.s32.totalorder %s20, 0
    %s23 = sadd.s32 %s22, 1
    %s24 = scalar_select %p21, %s22, %s23
    %p27 = pneg %p21
    %p28 = scmp.eq.s32.totalorder %s12, 1
    %p29 = por %p27, %p28
    %p30 = scmp.ne.s32.totalorder %s22, %s25
    %p31 = scmp.eq.s32.totalorder %s12, 0
    %p32 = por %p30, %p31
    %p33 = scmp.ne.s32.totalorder %s22, %s25
    %p34 = scmp.eq.s32.totalorder %s17, 1
    %p35 = por %p33, %p34
    %p36 = scmp.ne.s32.totalorder %s25, %s26
    %p37 = scmp.eq.s32.totalorder %s17, 0
    %p38 = por %p36, %p37
    %p39 = scmp.ne.s32.totalorder %s25, %s26
    %p40 = scmp.eq.s32.totalorder %s18, 1
    %p41 = por %p39, %p40
    %p43 = scmp.ne.s32.totalorder %s26, %s42
    %p44 = scmp.eq.s32.totalorder %s18, 0
    %p45 = por %p43, %p44
    %s47 = sadd.s32 %s46, 1
    %p50 = scmp.eq.s32.totalorder %s12, 1
    %p51 = scmp.ne.s32.totalorder %s46, %s48
    %p52 = scmp.eq.s32.totalorder %s12, 0
    %p53 = por %p51, %p52
    %p54 = scmp.ne.s32.totalorder %s46, %s48
    %p55 = scmp.eq.s32.totalorder %s17, 1
    %p56 = por %p54, %p55
    %p57 = scmp.ne.s32.totalorder %s48, %s49
    %p58 = scmp.eq.s32.totalorder %s17, 0
    %p59 = por %p57, %p58
    %p60 = scmp.ne.s32.totalorder %s48, %s49
    %p61 = scmp.eq.s32.totalorder %s18, 1
    %p62 = por %p60, %p61
    %p64 = scmp.ne.s32.totalorder %s49, %s63
    %p65 = scmp.eq.s32.totalorder %s18, 0
    %p66 = por %p64, %p65
    %s68 = sadd.s32 %s67, 1
    %p71 = scmp.eq.s32.totalorder %s12, 1
    %p72 = scmp.ne.s32.totalorder %s67, %s69
    %p73 = scmp.eq.s32.totalorder %s12, 0
    %p74 = por %p72, %p73
    %p75 = scmp.ne.s32.totalorder %s67, %s69
    %p76 = scmp.eq.s32.totalorder %s17, 1
    %p77 = por %p75, %p76
    %p78 = scmp.ne.s32.totalorder %s69, %s70
    %p79 = scmp.eq.s32.totalorder %s17, 0
    %p80 = por %p78, %p79
    %p81 = scmp.ne.s32.totalorder %s69, %s70
    %p82 = scmp.eq.s32.totalorder %s18, 1
    %p83 = por %p81, %p82
    %p85 = scmp.ne.s32.totalorder %s70, %s84
    %p86 = scmp.eq.s32.totalorder %s18, 0
    %p87 = por %p85, %p86
    %s88 = ssub.s32 %s12, %s19
    %p89 = scmp.eq.s32.totalorder %s88, 0
    %s91 = sadd.s32 %s90, 1
    %s92 = scalar_select %p89, %s90, %s91
    %p95 = pneg %p89
    %p96 = scmp.eq.s32.totalorder %s12, 1
    %p97 = por %p95, %p96
    %p98 = scmp.ne.s32.totalorder %s90, %s93
    %p99 = scmp.eq.s32.totalorder %s12, 0
    %p100 = por %p98, %p99
    %p101 = scmp.ne.s32.totalorder %s90, %s93
    %p102 = scmp.eq.s32.totalorder %s17, 1
    %p103 = por %p101, %p102
    %p104 = scmp.ne.s32.totalorder %s93, %s94
    %p105 = scmp.eq.s32.totalorder %s17, 0
    %p106 = por %p104, %p105
    %p107 = scmp.ne.s32.totalorder %s93, %s94
    %p108 = scmp.eq.s32.totalorder %s18, 1
    %p109 = por %p107, %p108
    %p111 = scmp.ne.s32.totalorder %s94, %s110
    %p112 = scmp.eq.s32.totalorder %s18, 0
    %p113 = por %p111, %p112
    %s114 = ssub.s32 %s12, %s19
    %p115 = scmp.eq.s32.totalorder %s114, 0
    %s117 = sadd.s32 %s116, 1
    %s118 = scalar_select %p115, %s116, %s117
    %p121 = pneg %p115
    %p122 = scmp.eq.s32.totalorder %s12, 1
    %p123 = por %p121, %p122
    %p124 = scmp.ne.s32.totalorder %s116, %s119
    %p125 = scmp.eq.s32.totalorder %s12, 0
    %p126 = por %p124, %p125
    %p127 = scmp.ne.s32.totalorder %s116, %s119
    %p128 = scmp.eq.s32.totalorder %s17, 1
    %p129 = por %p127, %p128
    %p130 = scmp.ne.s32.totalorder %s119, %s120
    %p131 = scmp.eq.s32.totalorder %s17, 0
    %p132 = por %p130, %p131
    %p133 = scmp.ne.s32.totalorder %s119, %s120
    %p134 = scmp.eq.s32.totalorder %s18, 1
    %p135 = por %p133, %p134
    %p137 = scmp.ne.s32.totalorder %s120, %s136
    %p138 = scmp.eq.s32.totalorder %s18, 0
    %p139 = por %p137, %p138
    %s140 = ssub.s32 %s12, %s19
    %p141 = scmp.eq.s32.totalorder %s140, 0
    %s143 = sadd.s32 %s142, 1
    %s144 = scalar_select %p141, %s142, %s143
    %p147 = pneg %p141
    %p148 = scmp.eq.s32.totalorder %s12, 1
    %p149 = por %p147, %p148
    %p150 = scmp.ne.s32.totalorder %s142, %s145
    %p151 = scmp.eq.s32.totalorder %s12, 0
    %p152 = por %p150, %p151
    %p153 = scmp.ne.s32.totalorder %s142, %s145
    %p154 = scmp.eq.s32.totalorder %s17, 1
    %p155 = por %p153, %p154
    %p156 = scmp.ne.s32.totalorder %s145, %s146
    %p157 = scmp.eq.s32.totalorder %s17, 0
    %p158 = por %p156, %p157
    %p159 = scmp.ne.s32.totalorder %s145, %s146
    %p160 = scmp.eq.s32.totalorder %s18, 1
    %p161 = por %p159, %p160
    %p163 = scmp.ne.s32.totalorder %s146, %s162
    %p164 = scmp.eq.s32.totalorder %s18, 0
    %p165 = por %p163, %p164
    %p166 = scmp.le.s32.totalorder 1, %s12
    %p167 = scmp.lt.s32.totalorder %s12, 3
    %p168 = pnand %p166, %p167
    %p169 = pneg %p168
    // Predicated region
    $region9: #{encoder_forward.8} parent=5 // pred_check
      _
    $region10: #{encoder_forward.8} parent=5 // pred_check_branch
      %171 = sbr.rel (%p168) target = $region12
    $region11: #{encoder_forward.8} parent=5 // pred_region
      %s172 = ssub.s32 %s12, 1
      // Predicated region
      $region13: #{encoder_forward.8} parent=11 // pred_check
        %p173 = pneg %p59
      $region14: #{encoder_forward.8} parent=11 // pred_check_branch
        %175 = sbr.rel (%p173) target = $region16
      $region15: #{encoder_forward.8} parent=11 // pred_region
        _
      $region16: #{encoder_forward.8} parent=11 // pred_fallthru
        _
      // Predicated region
      $region17: #{encoder_forward.8} parent=11 // pred_check
        %p176 = pneg %p80
      $region18: #{encoder_forward.8} parent=11 // pred_check_branch
        %178 = sbr.rel (%p176) target = $region20
      $region19: #{encoder_forward.8} parent=11 // pred_region
        _
      $region20: #{encoder_forward.8} parent=11 // pred_fallthru
        _
    $region12: #{encoder_forward.8} parent=5 // pred_fallthru
      _
    %p179 = scmp.lt.s32.totalorder %s12, 2
    // Predicated region
    $region21: #{encoder_forward.8} parent=5 // pred_check
      %p180 = pneg %p179
    $region22: #{encoder_forward.8} parent=5 // pred_check_branch
      %182 = sbr.rel (%p180) target = $region24
    $region23: #{encoder_forward.8} parent=5 // pred_region
      // Predicated region
      $region25: #{encoder_forward.8} parent=23 // pred_check
        %p183 = pneg %p32
      $region26: #{encoder_forward.8} parent=23 // pred_check_branch
        %185 = sbr.rel (%p183) target = $region28
      $region27: #{encoder_forward.8} parent=23 // pred_region
        %s186 = smul.u32 8, %s12
        %p187 = scmp.lt.s32.totalorder %s186, 15
        %s188 = scalar_select %p187, %s186, 15
        %s189 = smul.addr %s188, 4
        %s190 = scalar_lea.vmem %s0, %s189
        %s191 = smul.u32 8, %s12
      $region28: #{encoder_forward.8} parent=23 // pred_fallthru
        _
    $region24: #{encoder_forward.8} parent=5 // pred_fallthru
      _
    %p192 = scmp.le.s32.totalorder 1, %s12
    %p193 = scmp.lt.s32.totalorder %s12, 3
    %p194 = pnand %p192, %p193
    %p195 = pneg %p194
    // Predicated region
    $region29: #{encoder_forward.8} parent=5 // pred_check
      _
    $region30: #{encoder_forward.8} parent=5 // pred_check_branch
      %197 = sbr.rel (%p194) target = $region32
    $region31: #{encoder_forward.8} parent=5 // pred_region
      %s198 = ssub.s32 %s12, 1
      %s199 = smul.u32 8, %s17
      %p200 = scmp.lt.s32.totalorder %s199, 15
      %s201 = scalar_select %p200, %s199, 15
      %s202 = smul.addr %s201, 4
      %s203 = scalar_lea.vmem %s0, %s202
      %p204 = pneg %p38
      %p205 = pneg %p35
      %p206 = pneg %p59
      %p207 = pneg %p56
      %p208 = pneg %p80
      %p209 = pneg %p77
      %p210 = pneg %p106
      %p211 = pneg %p103
      %s212 = smul.u32 8, %s17
      %p213 = scmp.lt.s32.totalorder %s212, 15
      %s214 = scalar_select %p213, %s212, 15
      %s215 = smul.addr %s214, 4
      %s216 = scalar_lea.vmem %s3, %s215
      %p217 = pneg %p132
      %p218 = pneg %p129
      %p219 = scmp.lt.s32.totalorder %s17, 1
      %s220 = scalar_select %p219, %s17, 1
      %s221 = scalar_lea.vmem %s4, %s220
      %p222 = pneg %p158
      %p223 = pneg %p155
      %p224 = scmp.lt.s32.totalorder %s17, 1
      %s225 = scalar_select %p224, %s17, 1
      %s226 = scalar_lea.vmem %s5, %s225
      %s227 = smul.u32 8, %s17
      %p228 = scmp.lt.s32.totalorder %s227, 15
      %s229 = scalar_select %p228, %s227, 15
      %s230 = smul.addr %s229, 4
      %s231 = scalar_lea.vmem %s0, %s230
      %s232 = smul.u32 8, %s17
      %s233 = smul.u32 8, %s17
      %p234 = scmp.lt.s32.totalorder %s233, 15
      %s235 = scalar_select %p234, %s233, 15
      %s236 = smul.addr %s235, 4
      %s237 = scalar_lea.vmem %s3, %s236
      %s238 = smul.u32 8, %s17
      %p239 = scmp.lt.s32.totalorder %s17, 1
      %s240 = scalar_select %p239, %s17, 1
      %s241 = scalar_lea.vmem %s4, %s240
      %p242 = scmp.lt.s32.totalorder %s17, 1
      %s243 = scalar_select %p242, %s17, 1
      %s244 = scalar_lea.vmem %s5, %s243
      %v246 = vld [vmem:[%s231] sm:$0xf]
      %v247 = vld [vmem:[%s231 + $0x4] sm:$0xf]
      %v248 = vld [vmem:[%s231 + $0x8] sm:$0xf]
      %v249 = vld [vmem:[%s231 + $0xc] sm:$0xf]
      %v250 = vld [vmem:[%s231 + $0x10] sm:$0xf]
      %v251 = vld [vmem:[%s231 + $0x14] sm:$0xf]
      %v252 = vld [vmem:[%s231 + $0x18] sm:$0xf]
      %v253 = vld [vmem:[%s231 + $0x1c] sm:$0xf]
      %v254 = vunpack.c.l.bf16 %v246
      %v255 = vunpack.c.l.bf16 %v247
      %v256 = vunpack.c.l.bf16 %v248
      %v257 = vunpack.c.l.bf16 %v249
      %v258 = vunpack.c.l.bf16 %v250
      %v259 = vunpack.c.l.bf16 %v251
      %v260 = vunpack.c.l.bf16 %v252
      %v261 = vunpack.c.l.bf16 %v253
      %v262 = vld [vmem:[%s1] sm:$0x1]
      %v263 = vlaneseq
      %v264 = vshrl.u32 %v263, 7
      %v265 = vsub.s32 0, %v264
      %v266 = vrot.slane %v262, %v265
      %v267 = vmul.f32 %v254, %v266
      %v268 = vmul.f32 %v255, %v266
      %v269 = vmul.f32 %v256, %v266
      %v270 = vmul.f32 %v257, %v266
      %v271 = vmul.f32 %v258, %v266
      %v272 = vmul.f32 %v259, %v266
      %v273 = vmul.f32 %v260, %v266
      %v274 = vmul.f32 %v261, %v266
      %v275 = vld [vmem:[%s1 + $0x1] sm:$0x1]
      %v276 = vlaneseq
      %v277 = vshrl.u32 %v276, 7
      %v278 = vsub.s32 0, %v277
      %v279 = vrot.slane %v275, %v278
      %v280 = vadd.f32 %v267, %v279
      %v281 = vadd.f32 %v268, %v279
      %v282 = vadd.f32 %v269, %v279
      %v283 = vadd.f32 %v270, %v279
      %v284 = vadd.f32 %v271, %v279
      %v285 = vadd.f32 %v272, %v279
      %v286 = vadd.f32 %v273, %v279
      %v287 = vadd.f32 %v274, %v279
      %v288 = vmax.f32 %v280, 0.0
      %v289 = vmax.f32 %v281, 0.0
      %v290 = vmax.f32 %v282, 0.0
      %v291 = vmax.f32 %v283, 0.0
      %v292 = vmax.f32 %v284, 0.0
      %v293 = vmax.f32 %v285, 0.0
      %v294 = vmax.f32 %v286, 0.0
      %v295 = vmax.f32 %v287, 0.0
      %v296 = vpack.c.bf16 %v289, %v288
      %v297 = vpack.c.bf16 %v291, %v290
      %v298 = vpack.c.bf16 %v293, %v292
      %v299 = vpack.c.bf16 %v295, %v294
      %v300 = vld [vmem:[%s2] sm:$0xf]
      %v301 = vld [vmem:[%s2 + $0x4] sm:$0xf]
      %v302 = vld [vmem:[%s2 + $0x8] sm:$0xf]
      %v303 = vld [vmem:[%s2 + $0xc] sm:$0xf]
      %v304 = vld [vmem:[%s2 + $0x10] sm:$0xf]
      %v305 = vld [vmem:[%s2 + $0x14] sm:$0xf]
      %v306 = vld [vmem:[%s2 + $0x18] sm:$0xf]
      %v307 = vld [vmem:[%s2 + $0x1c] sm:$0xf]
      %v308 = vld [vmem:[%s2 + $0x20] sm:$0xf]
      %v309 = vld [vmem:[%s2 + $0x24] sm:$0xf]
      %v310 = vld [vmem:[%s2 + $0x28] sm:$0xf]
      %v311 = vld [vmem:[%s2 + $0x2c] sm:$0xf]
      %v312 = vld [vmem:[%s2 + $0x30] sm:$0xf]
      %v313 = vld [vmem:[%s2 + $0x34] sm:$0xf]
      %v314 = vld [vmem:[%s2 + $0x38] sm:$0xf]
      %v315 = vld [vmem:[%s2 + $0x3c] sm:$0xf]
      %v332 = vunpack.c.l.b16 %v300
      %v333 = vunpack.c.l.b16 %v301
      %v334 = vunpack.c.l.b16 %v302
      %v335 = vunpack.c.l.b16 %v303
      %v336 = vunpack.c.l.b16 %v304
      %v337 = vunpack.c.l.b16 %v305
      %v338 = vunpack.c.l.b16 %v306
      %v339 = vunpack.c.l.b16 %v307
      %v340 = vunpack.c.l.b16 %v308
      %v341 = vunpack.c.l.b16 %v309
      %v342 = vunpack.c.l.b16 %v310
      %v343 = vunpack.c.l.b16 %v311
      %v344 = vunpack.c.l.b16 %v312
      %v345 = vunpack.c.l.b16 %v313
      %v346 = vunpack.c.l.b16 %v314
      %v347 = vunpack.c.l.b16 %v315
      %v348 = vpack.c.b16 %v333, %v332
      %v349 = vpack.c.b16 %v335, %v334
      %v350 = vpack.c.b16 %v337, %v336
      %v351 = vpack.c.b16 %v339, %v338
      %v352 = vpack.c.b16 %v341, %v340
      %v353 = vpack.c.b16 %v343, %v342
      %v354 = vpack.c.b16 %v345, %v344
      %v355 = vpack.c.b16 %v347, %v346
      %364 = vmatprep.subr.bf16.mxu0 0
      %365 = vmatpush1.bf16.msra.mxu0 %v348
      %366 = vmatprep.subr.bf16.mxu0 0
      %367 = vmatpush1.bf16.msra.mxu0 %v349
      %368 = vmatprep.subr.bf16.mxu0 0
      %369 = vmatpush1.bf16.msra.mxu0 %v350
      %370 = vmatprep.subr.bf16.mxu0 0
      %371 = vmatpush1.bf16.msra.mxu0 %v351
      %372 = vmatprep.subr.bf16.mxu0 0
      %373 = vmatpush1.bf16.msra.mxu0 %v352
      %374 = vmatprep.subr.bf16.mxu0 0
      %375 = vmatpush1.bf16.msra.mxu0 %v353
      %376 = vmatprep.subr.bf16.mxu0 0
      %377 = vmatpush1.bf16.msra.mxu0 %v354
      %378 = vmatprep.subr.bf16.mxu0 0
      %379 = vmatpush1.bf16.msra.mxu0 %v355
      %380 = vmatprep.subr.bf16.mxu0 0
      %381 = vmatpush1.bf16.msra.mxu0 0
      %382 = vmatprep.subr.bf16.mxu0 0
      %383 = vmatpush1.bf16.msra.mxu0 0
      %384 = vmatprep.subr.bf16.mxu0 0
      %385 = vmatpush1.bf16.msra.mxu0 0
      %386 = vmatprep.subr.bf16.mxu0 0
      %387 = vmatpush1.bf16.msra.mxu0 0
      %388 = vmatprep.subr.bf16.mxu0 0
      %389 = vmatpush1.bf16.msra.mxu0 0
      %390 = vmatprep.subr.bf16.mxu0 0
      %391 = vmatpush1.bf16.msra.mxu0 0
      %392 = vmatprep.subr.bf16.mxu0 0
      %393 = vmatpush1.bf16.msra.mxu0 0
      %394 = vmatprep.subr.bf16.mxu0 0
      %395 = vmatpush1.bf16.msra.mxu0 0
      %396 = vmatprep.mubr.bf16.mxu0 0
      %397 = vmatmul.mubr.bf16.gmra.mrb[0].mxu0 %v296
      %v398 = vpop.f32.mrb[0].mxu0
      %v399 = vadd.f32 0.0, %v398
      %v400 = vpop.f32.mrb[0].mxu0
      %v401 = vpop.f32.mrb[0].mxu0
      %v402 = vadd.f32 0.0, %v401
      %v403 = vpop.f32.mrb[0].mxu0
      %404 = vmatprep.mubr.bf16.mxu0 0
      %405 = vmatmul.mubr.bf16.gmra.mrb[0].mxu0 %v297
      %v406 = vpop.f32.mrb[0].mxu0
      %v407 = vadd.f32 0.0, %v406
      %v408 = vpop.f32.mrb[0].mxu0
      %v409 = vpop.f32.mrb[0].mxu0
      %v410 = vadd.f32 0.0, %v409
      %v411 = vpop.f32.mrb[0].mxu0
      %412 = vmatprep.mubr.bf16.mxu0 0
      %413 = vmatmul.mubr.bf16.gmra.mrb[0].mxu0 %v298
      %v414 = vpop.f32.mrb[0].mxu0
      %v415 = vadd.f32 0.0, %v414
      %v416 = vpop.f32.mrb[0].mxu0
      %v417 = vpop.f32.mrb[0].mxu0
      %v418 = vadd.f32 0.0, %v417
      %v419 = vpop.f32.mrb[0].mxu0
      %420 = vmatprep.mubr.bf16.mxu0 0
      %421 = vmatmul.mubr.bf16.gmra.mrb[0].mxu0 %v299
      %v422 = vpop.f32.mrb[0].mxu0
      %v423 = vadd.f32 0.0, %v422
      %v424 = vpop.f32.mrb[0].mxu0
      %v425 = vpop.f32.mrb[0].mxu0
      %v426 = vadd.f32 0.0, %v425
      %v427 = vpop.f32.mrb[0].mxu0
      %428 = vdwg.mxu0
      %v429 = vpack.c.bf16 %v402, %v399
      %v430 = vpack.c.bf16 %v410, %v407
      %v431 = vpack.c.bf16 %v418, %v415
      %v432 = vpack.c.bf16 %v426, %v423
      %v437 = vunpack.c.l.b16 %v429
      %v438 = vunpack.c.h.b16 %v429
      %v439 = vunpack.c.l.b16 %v430
      %v440 = vunpack.c.h.b16 %v430
      %v441 = vunpack.c.l.b16 %v431
      %v442 = vunpack.c.h.b16 %v431
      %v443 = vunpack.c.l.b16 %v432
      %v444 = vunpack.c.h.b16 %v432
      %v445 = vpack.c.b16 %v437, %v437
      %v446 = vpack.c.b16 %v438, %v438
      %v447 = vpack.c.b16 %v439, %v439
      %v448 = vpack.c.b16 %v440, %v440
      %v449 = vpack.c.b16 %v441, %v441
      %v450 = vpack.c.b16 %v442, %v442
      %v451 = vpack.c.b16 %v443, %v443
      %v452 = vpack.c.b16 %v444, %v444
      %461 = vst [vmem:[%s237] sm:$0xf] %v445
      %462 = vst [vmem:[%s237 + $0x4] sm:$0xf] %v446
      %463 = vst [vmem:[%s237 + $0x8] sm:$0xf] %v447
      %464 = vst [vmem:[%s237 + $0xc] sm:$0xf] %v448
      %465 = vst [vmem:[%s237 + $0x10] sm:$0xf] %v449
      %466 = vst [vmem:[%s237 + $0x14] sm:$0xf] %v450
      %467 = vst [vmem:[%s237 + $0x18] sm:$0xf] %v451
      %468 = vst [vmem:[%s237 + $0x1c] sm:$0xf] %v452
      %v469 = vadd.f32 %v399, %v402
      %v470 = vadd.f32 %v469, %v407
      %v471 = vadd.f32 %v470, %v410
      %v472 = vadd.f32 %v471, %v415
      %v473 = vadd.f32 %v472, %v418
      %v474 = vadd.f32 %v473, %v423
      %v475 = vadd.f32 %v474, %v426
      %v476 = vrot.slane %v475, 4
      %v477 = vadd.f32 %v475, %v476
      %v478 = vrot.slane %v477, 2
      %v479 = vadd.f32 %v477, %v478
      %v480 = vrot.slane %v479, 1
      %v481 = vadd.f32 %v479, %v480
      %482 = vst [vmem:[%s241] sm:$0x1] %v481
      %v483 = vmul.f32 %v399, %v399
      %v484 = vmul.f32 %v402, %v402
      %v485 = vmul.f32 %v407, %v407
      %v486 = vmul.f32 %v410, %v410
      %v487 = vmul.f32 %v415, %v415
      %v488 = vmul.f32 %v418, %v418
      %v489 = vmul.f32 %v423, %v423
      %v490 = vmul.f32 %v426, %v426
      %v491 = vadd.f32 %v483, %v484
      %v492 = vadd.f32 %v491, %v485
      %v493 = vadd.f32 %v492, %v486
      %v494 = vadd.f32 %v493, %v487
      %v495 = vadd.f32 %v494, %v488
      %v496 = vadd.f32 %v495, %v489
      %v497 = vadd.f32 %v496, %v490
      %v498 = vrot.slane %v497, 4
      %v499 = vadd.f32 %v497, %v498
      %v500 = vrot.slane %v499, 2
      %v501 = vadd.f32 %v499, %v500
      %v502 = vrot.slane %v501, 1
      %v503 = vadd.f32 %v501, %v502
      %504 = vst [vmem:[%s244] sm:$0x1] %v503
      %s505 = smul.u32 8, %s17
      %p506 = scmp.lt.s32.totalorder %s505, 15
      %s507 = scalar_select %p506, %s505, 15
      %s508 = smul.addr %s507, 4
      %s509 = scalar_lea.vmem %s3, %s508
      %p510 = scmp.lt.s32.totalorder %s17, 1
      %s511 = scalar_select %p510, %s17, 1
      %s512 = scalar_lea.vmem %s4, %s511
      %p513 = scmp.lt.s32.totalorder %s17, 1
      %s514 = scalar_select %p513, %s17, 1
      %s515 = scalar_lea.vmem %s5, %s514
      // Predicated region
      $region33: #{encoder_forward.8} parent=31 // pred_check
        %p516 = pneg %p103
      $region34: #{encoder_forward.8} parent=31 // pred_check_branch
        %518 = sbr.rel (%p516) target = $region36
      $region35: #{encoder_forward.8} parent=31 // pred_region
        %s519 = smul.u32 8, %s17
      $region36: #{encoder_forward.8} parent=31 // pred_fallthru
        _
      // Predicated region
      $region37: #{encoder_forward.8} parent=31 // pred_check
        %p520 = pneg %p129
      $region38: #{encoder_forward.8} parent=31 // pred_check_branch
        %522 = sbr.rel (%p520) target = $region40
      $region39: #{encoder_forward.8} parent=31 // pred_region
        _
      $region40: #{encoder_forward.8} parent=31 // pred_fallthru
        _
      // Predicated region
      $region41: #{encoder_forward.8} parent=31 // pred_check
        %p523 = pneg %p155
      $region42: #{encoder_forward.8} parent=31 // pred_check_branch
        %525 = sbr.rel (%p523) target = $region44
      $region43: #{encoder_forward.8} parent=31 // pred_region
        _
      $region44: #{encoder_forward.8} parent=31 // pred_fallthru
        _
    $region32: #{encoder_forward.8} parent=5 // pred_fallthru
      _
    %p526 = scmp.le.s32.totalorder 2, %s12
    // Predicated region
    $region45: #{encoder_forward.8} parent=5 // pred_check
      %p527 = pneg %p526
    $region46: #{encoder_forward.8} parent=5 // pred_check_branch
      %529 = sbr.rel (%p527) target = $region48
    $region47: #{encoder_forward.8} parent=5 // pred_region
      %s530 = ssub.s32 %s12, 2
      // Predicated region
      $region49: #{encoder_forward.8} parent=47 // pred_check
        %p531 = pneg %p109
      $region50: #{encoder_forward.8} parent=47 // pred_check_branch
        %533 = sbr.rel (%p531) target = $region52
      $region51: #{encoder_forward.8} parent=47 // pred_region
        %s534 = smul.u32 8, %s18
        %p535 = scmp.lt.s32.totalorder %s534, 15
        %s536 = scalar_select %p535, %s534, 15
        %s537 = smul.addr %s536, 4
        %s538 = scalar_lea.vmem %s3, %s537
      $region52: #{encoder_forward.8} parent=47 // pred_fallthru
        _
      // Predicated region
      $region53: #{encoder_forward.8} parent=47 // pred_check
        %p539 = pneg %p135
      $region54: #{encoder_forward.8} parent=47 // pred_check_branch
        %541 = sbr.rel (%p539) target = $region56
      $region55: #{encoder_forward.8} parent=47 // pred_region
        %p542 = scmp.lt.s32.totalorder %s18, 1
        %s543 = scalar_select %p542, %s18, 1
        %s544 = scalar_lea.vmem %s4, %s543
      $region56: #{encoder_forward.8} parent=47 // pred_fallthru
        _
      // Predicated region
      $region57: #{encoder_forward.8} parent=47 // pred_check
        %p545 = pneg %p161
      $region58: #{encoder_forward.8} parent=47 // pred_check_branch
        %547 = sbr.rel (%p545) target = $region60
      $region59: #{encoder_forward.8} parent=47 // pred_region
        %p548 = scmp.lt.s32.totalorder %s18, 1
        %s549 = scalar_select %p548, %s18, 1
        %s550 = scalar_lea.vmem %s5, %s549
      $region60: #{encoder_forward.8} parent=47 // pred_fallthru
        _
    $region48: #{encoder_forward.8} parent=5 // pred_fallthru
      _
  $region6: #{encoder_forward.8} parent=0 // loop_footer
    %s16 = sadd.s32 1, %s12
  $region7: #{encoder_forward.8} parent=0 // loop_footer_branch
    %11 = sbr.rel target = $region3
  $region8: #{encoder_forward.8} parent=0 // loop_exit
    _

// kernel: encoder_forward.7
$region0: #{encoder_forward.7}
  #allocation0 [shape = 'u32[]', space=smem, size = 0x4, offset = 0x4, fixed_abs, tag = 'smem constant byte address 0x4 - core index']
  #allocation1 [shape = 'u32[144,128]{1,0:T(1,128)}', space=vmem, size = 0x12000, scoped, tag = 'internal scratch']
  #allocation2 [shape = 'f32[96,128]{1,0:T(8,128)}', space=vmem, size = 0xc000, scoped, tag = 'scratch operand']
  #allocation3 [shape = 'bf16[64,1152]{1,0:T(16,128)(2,1)}', space=vmem, size = 0x24000, scoped, tag = 'scratch operand']
  %s0 = inlined_call_operand.vmem [shape: f32[2,8,8,128], index: 0, kind: input, shape index: {}]
  %s1 = inlined_call_operand.vmem [shape: f32[2,64,128], index: 1, kind: input, shape index: {}]
  %s2 = inlined_call_operand.vmem [shape: bf16[1152,128], index: 2, kind: input, shape index: {}]
  %s3 = inlined_call_operand.vmem [shape: bf16[128,128], index: 3, kind: output, shape index: {0}]
  %s4 = inlined_call_operand.vmem [shape: f32[2,1,128], index: 4, kind: output, shape index: {1}]
  %s5 = inlined_call_operand.vmem [shape: f32[2,1,128], index: 5, kind: output, shape index: {2}]
  %6 = xla_tuple %s3, %s4, %s5
  %s7 = sld [smem:[#allocation0]]
  $region61: #{encoder_forward.7} parent=0
    _
  %s9 = ssub.s32 1, %s7
  %s10 = scalar_select 0, %s9, %s7
  loop: start=0, step=1, limit=4
  $region2: #{encoder_forward.7} parent=0 // loop_pre_header
    _
  $region3: #{encoder_forward.7} parent=0 // loop_header
    %s12 = sphi 0, %s16
    %p13 = scmp.ge.s32.totalorder %s12, 4
    %s22 = sphi 0, %s24
    %s25 = sphi 0, %s22
    %s26 = sphi 0, %s25
    %s42 = sphi 0, %s26
    %s46 = sphi 0, %s46
    %s48 = sphi 0, %s46
    %s49 = sphi 0, %s48
    %s63 = sphi 0, %s49
    %s67 = sphi 0, %s67
    %s69 = sphi 0, %s67
    %s70 = sphi 0, %s69
    %s84 = sphi 0, %s70
    %s90 = sphi 0, %s92
    %s93 = sphi 0, %s90
    %s94 = sphi 0, %s93
    %s110 = sphi 0, %s94
    %s116 = sphi 0, %s118
    %s119 = sphi 0, %s116
    %s120 = sphi 0, %s119
    %s136 = sphi 0, %s120
    %s142 = sphi 0, %s144
    %s145 = sphi 0, %s142
    %s146 = sphi 0, %s145
    %s162 = sphi 0, %s146
  $region4: #{encoder_forward.7} parent=0 // loop_header_branch
    %15 = sbr.rel (%p13) target = $region8
  $region5: #{encoder_forward.7} parent=0 // loop_body
    %s17 = ssub.s32 %s12, 1
    %s18 = ssub.s32 %s12, 2
    %s19 = sadd.s32 %s12, 1
    %s20 = ssub.s32 %s12, %s19
    %p21 = scmp.eq.s32.totalorder %s20, 0
    %s23 = sadd.s32 %s22, 1
    %s24 = scalar_select %p21, %s22, %s23
    %p27 = pneg %p21
    %p28 = scmp.eq.s32.totalorder %s12, 1
    %p29 = por %p27, %p28
    %p30 = scmp.ne.s32.totalorder %s22, %s25
    %p31 = scmp.eq.s32.totalorder %s12, 0
    %p32 = por %p30, %p31
    %p33 = scmp.ne.s32.totalorder %s22, %s25
    %p34 = scmp.eq.s32.totalorder %s17, 1
    %p35 = por %p33, %p34
    %p36 = scmp.ne.s32.totalorder %s25, %s26
    %p37 = scmp.eq.s32.totalorder %s17, 0
    %p38 = por %p36, %p37
    %p39 = scmp.ne.s32.totalorder %s25, %s26
    %p40 = scmp.eq.s32.totalorder %s18, 1
    %p41 = por %p39, %p40
    %p43 = scmp.ne.s32.totalorder %s26, %s42
    %p44 = scmp.eq.s32.totalorder %s18, 0
    %p45 = por %p43, %p44
    %s47 = sadd.s32 %s46, 1
    %p50 = scmp.eq.s32.totalorder %s12, 1
    %p51 = scmp.ne.s32.totalorder %s46, %s48
    %p52 = scmp.eq.s32.totalorder %s12, 0
    %p53 = por %p51, %p52
    %p54 = scmp.ne.s32.totalorder %s46, %s48
    %p55 = scmp.eq.s32.totalorder %s17, 1
    %p56 = por %p54, %p55
    %p57 = scmp.ne.s32.totalorder %s48, %s49
    %p58 = scmp.eq.s32.totalorder %s17, 0
    %p59 = por %p57, %p58
    %p60 = scmp.ne.s32.totalorder %s48, %s49
    %p61 = scmp.eq.s32.totalorder %s18, 1
    %p62 = por %p60, %p61
    %p64 = scmp.ne.s32.totalorder %s49, %s63
    %p65 = scmp.eq.s32.totalorder %s18, 0
    %p66 = por %p64, %p65
    %s68 = sadd.s32 %s67, 1
    %p71 = scmp.eq.s32.totalorder %s12, 1
    %p72 = scmp.ne.s32.totalorder %s67, %s69
    %p73 = scmp.eq.s32.totalorder %s12, 0
    %p74 = por %p72, %p73
    %p75 = scmp.ne.s32.totalorder %s67, %s69
    %p76 = scmp.eq.s32.totalorder %s17, 1
    %p77 = por %p75, %p76
    %p78 = scmp.ne.s32.totalorder %s69, %s70
    %p79 = scmp.eq.s32.totalorder %s17, 0
    %p80 = por %p78, %p79
    %p81 = scmp.ne.s32.totalorder %s69, %s70
    %p82 = scmp.eq.s32.totalorder %s18, 1
    %p83 = por %p81, %p82
    %p85 = scmp.ne.s32.totalorder %s70, %s84
    %p86 = scmp.eq.s32.totalorder %s18, 0
    %p87 = por %p85, %p86
    %s88 = ssub.s32 %s12, %s19
    %p89 = scmp.eq.s32.totalorder %s88, 0
    %s91 = sadd.s32 %s90, 1
    %s92 = scalar_select %p89, %s90, %s91
    %p95 = pneg %p89
    %p96 = scmp.eq.s32.totalorder %s12, 1
    %p97 = por %p95, %p96
    %p98 = scmp.ne.s32.totalorder %s90, %s93
    %p99 = scmp.eq.s32.totalorder %s12, 0
    %p100 = por %p98, %p99
    %p101 = scmp.ne.s32.totalorder %s90, %s93
    %p102 = scmp.eq.s32.totalorder %s17, 1
    %p103 = por %p101, %p102
    %p104 = scmp.ne.s32.totalorder %s93, %s94
    %p105 = scmp.eq.s32.totalorder %s17, 0
    %p106 = por %p104, %p105
    %p107 = scmp.ne.s32.totalorder %s93, %s94
    %p108 = scmp.eq.s32.totalorder %s18, 1
    %p109 = por %p107, %p108
    %p111 = scmp.ne.s32.totalorder %s94, %s110
    %p112 = scmp.eq.s32.totalorder %s18, 0
    %p113 = por %p111, %p112
    %s114 = ssub.s32 %s12, %s19
    %p115 = scmp.eq.s32.totalorder %s114, 0
    %s117 = sadd.s32 %s116, 1
    %s118 = scalar_select %p115, %s116, %s117
    %p121 = pneg %p115
    %p122 = scmp.eq.s32.totalorder %s12, 1
    %p123 = por %p121, %p122
    %p124 = scmp.ne.s32.totalorder %s116, %s119
    %p125 = scmp.eq.s32.totalorder %s12, 0
    %p126 = por %p124, %p125
    %p127 = scmp.ne.s32.totalorder %s116, %s119
    %p128 = scmp.eq.s32.totalorder %s17, 1
    %p129 = por %p127, %p128
    %p130 = scmp.ne.s32.totalorder %s119, %s120
    %p131 = scmp.eq.s32.totalorder %s17, 0
    %p132 = por %p130, %p131
    %p133 = scmp.ne.s32.totalorder %s119, %s120
    %p134 = scmp.eq.s32.totalorder %s18, 1
    %p135 = por %p133, %p134
    %p137 = scmp.ne.s32.totalorder %s120, %s136
    %p138 = scmp.eq.s32.totalorder %s18, 0
    %p139 = por %p137, %p138
    %s140 = ssub.s32 %s12, %s19
    %p141 = scmp.eq.s32.totalorder %s140, 0
    %s143 = sadd.s32 %s142, 1
    %s144 = scalar_select %p141, %s142, %s143
    %p147 = pneg %p141
    %p148 = scmp.eq.s32.totalorder %s12, 1
    %p149 = por %p147, %p148
    %p150 = scmp.ne.s32.totalorder %s142, %s145
    %p151 = scmp.eq.s32.totalorder %s12, 0
    %p152 = por %p150, %p151
    %p153 = scmp.ne.s32.totalorder %s142, %s145
    %p154 = scmp.eq.s32.totalorder %s17, 1
    %p155 = por %p153, %p154
    %p156 = scmp.ne.s32.totalorder %s145, %s146
    %p157 = scmp.eq.s32.totalorder %s17, 0
    %p158 = por %p156, %p157
    %p159 = scmp.ne.s32.totalorder %s145, %s146
    %p160 = scmp.eq.s32.totalorder %s18, 1
    %p161 = por %p159, %p160
    %p163 = scmp.ne.s32.totalorder %s146, %s162
    %p164 = scmp.eq.s32.totalorder %s18, 0
    %p165 = por %p163, %p164
    %p166 = scmp.le.s32.totalorder 1, %s12
    %p167 = scmp.lt.s32.totalorder %s12, 3
    %p168 = pnand %p166, %p167
    %p169 = pneg %p168
    // Predicated region
    $region9: #{encoder_forward.7} parent=5 // pred_check
      _
    $region10: #{encoder_forward.7} parent=5 // pred_check_branch
      %171 = sbr.rel (%p168) target = $region12
    $region11: #{encoder_forward.7} parent=5 // pred_region
      %s172 = ssub.s32 %s12, 1
      // Predicated region
      $region13: #{encoder_forward.7} parent=11 // pred_check
        %p173 = pneg %p59
      $region14: #{encoder_forward.7} parent=11 // pred_check_branch
        %175 = sbr.rel (%p173) target = $region16
      $region15: #{encoder_forward.7} parent=11 // pred_region
        _
      $region16: #{encoder_forward.7} parent=11 // pred_fallthru
        _
      // Predicated region
      $region17: #{encoder_forward.7} parent=11 // pred_check
        %p176 = pneg %p80
      $region18: #{encoder_forward.7} parent=11 // pred_check_branch
        %178 = sbr.rel (%p176) target = $region20
      $region19: #{encoder_forward.7} parent=11 // pred_region
        _
      $region20: #{encoder_forward.7} parent=11 // pred_fallthru
        _
    $region12: #{encoder_forward.7} parent=5 // pred_fallthru
      _
    %p179 = scmp.lt.s32.totalorder %s12, 2
    // Predicated region
    $region21: #{encoder_forward.7} parent=5 // pred_check
      %p180 = pneg %p179
    $region22: #{encoder_forward.7} parent=5 // pred_check_branch
      %182 = sbr.rel (%p180) target = $region24
    $region23: #{encoder_forward.7} parent=5 // pred_region
      // Predicated region
      $region25: #{encoder_forward.7} parent=23 // pred_check
        %p183 = pneg %p32
      $region26: #{encoder_forward.7} parent=23 // pred_check_branch
        %185 = sbr.rel (%p183) target = $region28
      $region27: #{encoder_forward.7} parent=23 // pred_region
        %p186 = scmp.lt.s32.totalorder %s12, 1
        %s187 = scalar_select %p186, %s12, 1
        %s188 = smul.addr %s187, 8
        %s189 = smul.addr %s188, 8
        %s190 = scalar_lea.vmem %s0, %s189
      $region28: #{encoder_forward.7} parent=23 // pred_fallthru
        _
    $region24: #{encoder_forward.7} parent=5 // pred_fallthru
      _
    %p191 = scmp.le.s32.totalorder 1, %s12
    %p192 = scmp.lt.s32.totalorder %s12, 3
    %p193 = pnand %p191, %p192
    %p194 = pneg %p193
    // Predicated region
    $region29: #{encoder_forward.7} parent=5 // pred_check
      _
    $region30: #{encoder_forward.7} parent=5 // pred_check_branch
      %196 = sbr.rel (%p193) target = $region32
    $region31: #{encoder_forward.7} parent=5 // pred_region
      %s197 = ssub.s32 %s12, 1
      %p198 = scmp.lt.s32.totalorder %s17, 1
      %s199 = scalar_select %p198, %s17, 1
      %s200 = smul.addr %s199, 8
      %s201 = smul.addr %s200, 8
      %s202 = scalar_lea.vmem %s0, %s201
      %p203 = pneg %p38
      %p204 = pneg %p35
      %p205 = pneg %p59
      %p206 = pneg %p56
      %p207 = pneg %p80
      %p208 = pneg %p77
      %p209 = pneg %p106
      %p210 = pneg %p103
      %s211 = smul.u32 8, %s17
      %p212 = scmp.lt.s32.totalorder %s211, 15
      %s213 = scalar_select %p212, %s211, 15
      %s214 = smul.addr %s213, 4
      %s215 = scalar_lea.vmem %s3, %s214
      %p216 = pneg %p132
      %p217 = pneg %p129
      %p218 = scmp.lt.s32.totalorder %s17, 1
      %s219 = scalar_select %p218, %s17, 1
      %s220 = scalar_lea.vmem %s4, %s219
      %p221 = pneg %p158
      %p222 = pneg %p155
      %p223 = scmp.lt.s32.totalorder %s17, 1
      %s224 = scalar_select %p223, %s17, 1
      %s225 = scalar_lea.vmem %s5, %s224
      %p226 = scmp.lt.s32.totalorder %s17, 1
      %s227 = scalar_select %p226, %s17, 1
      %s228 = smul.addr %s227, 8
      %s229 = smul.addr %s228, 8
      %s230 = scalar_lea.vmem %s0, %s229
      %s231 = smul.u32 8, %s17
      %p232 = scmp.lt.s32.totalorder %s231, 15
      %s233 = scalar_select %p232, %s231, 15
      %s234 = smul.addr %s233, 4
      %s235 = scalar_lea.vmem %s3, %s234
      %s236 = smul.u32 8, %s17
      %p237 = scmp.lt.s32.totalorder %s17, 1
      %s238 = scalar_select %p237, %s17, 1
      %s239 = scalar_lea.vmem %s4, %s238
      %p240 = scmp.lt.s32.totalorder %s17, 1
      %s241 = scalar_select %p240, %s17, 1
      %s242 = scalar_lea.vmem %s5, %s241
      %v244 = vld [vmem:[%s230] sm:$0xff]
      %v245 = vld [vmem:[%s230 + $0x8] sm:$0xff]
      %v246 = vld [vmem:[%s230 + $0x10] sm:$0xff]
      %v247 = vld [vmem:[%s230 + $0x18] sm:$0xff]
      %v248 = vld [vmem:[%s230 + $0x20] sm:$0xff]
      %v249 = vld [vmem:[%s230 + $0x28] sm:$0xff]
      %v250 = vld [vmem:[%s230 + $0x30] sm:$0xff]
      %v251 = vld [vmem:[%s230 + $0x38] sm:$0xff]
      %v252 = vmax.f32 %v244, 0.0
      %v253 = vmax.f32 %v245, 0.0
      %v254 = vmax.f32 %v246, 0.0
      %v255 = vmax.f32 %v247, 0.0
      %v256 = vmax.f32 %v248, 0.0
      %v257 = vmax.f32 %v249, 0.0
      %v258 = vmax.f32 %v250, 0.0
      %v259 = vmax.f32 %v251, 0.0
      %260 = vst [vmem:[#allocation2] sm:$0xff] 0.0
      %261 = vst [vmem:[#allocation2 + $0x8] sm:$0xff] 0.0
      %262 = vst [vmem:[#allocation2 + $0x10] sm:$0xff] 0.0
      %263 = vst [vmem:[#allocation2 + $0x18] sm:$0xff] 0.0
      %264 = vst [vmem:[#allocation2 + $0x20] sm:$0xff] 0.0
      %265 = vst [vmem:[#allocation2 + $0x28] sm:$0xff] 0.0
      %266 = vst [vmem:[#allocation2 + $0x30] sm:$0xff] 0.0
      %267 = vst [vmem:[#allocation2 + $0x38] sm:$0xff] 0.0
      %268 = vst [vmem:[#allocation2 + $0x40] sm:$0xff] 0.0
      %269 = vst [vmem:[#allocation2 + $0x48] sm:$0xff] 0.0
      %270 = vst [vmem:[#allocation2 + $0x50] sm:$0xff] 0.0
      %271 = vst [vmem:[#allocation2 + $0x58] sm:$0xff] 0.0
      %272 = vst [vmem:[#allocation2 + $0x10] sm:$0xff] %v252
      %273 = vst [vmem:[#allocation2 + $0x18] sm:$0xff] %v253
      %274 = vst [vmem:[#allocation2 + $0x20] sm:$0xff] %v254
      %275 = vst [vmem:[#allocation2 + $0x28] sm:$0xff] %v255
      %276 = vst [vmem:[#allocation2 + $0x30] sm:$0xff] %v256
      %277 = vst [vmem:[#allocation2 + $0x38] sm:$0xff] %v257
      %278 = vst [vmem:[#allocation2 + $0x40] sm:$0xff] %v258
      %279 = vst [vmem:[#allocation2 + $0x48] sm:$0xff] %v259
      %v280 = vld [vmem:[#allocation2 + $0x7] sm:$0xff]
      %v281 = vld [vmem:[#allocation2 + $0xf] sm:$0xff]
      %v282 = vld [vmem:[#allocation2 + $0x17] sm:$0xff]
      %v283 = vld [vmem:[#allocation2 + $0x1f] sm:$0xff]
      %v284 = vld [vmem:[#allocation2 + $0x27] sm:$0xff]
      %v285 = vld [vmem:[#allocation2 + $0x2f] sm:$0xff]
      %v286 = vld [vmem:[#allocation2 + $0x37] sm:$0xff]
      %v287 = vld [vmem:[#allocation2 + $0x3f] sm:$0xff]
      %v288 = vld [vmem:[%s1] sm:$0xff]
      %v289 = vld [vmem:[%s1 + $0x8] sm:$0xff]
      %v290 = vld [vmem:[%s1 + $0x10] sm:$0xff]
      %v291 = vld [vmem:[%s1 + $0x18] sm:$0xff]
      %v292 = vld [vmem:[%s1 + $0x20] sm:$0xff]
      %v293 = vld [vmem:[%s1 + $0x28] sm:$0xff]
      %v294 = vld [vmem:[%s1 + $0x30] sm:$0xff]
      %v295 = vld [vmem:[%s1 + $0x38] sm:$0xff]
      %v296 = vmul.f32 %v280, %v288
      %v297 = vmul.f32 %v281, %v289
      %v298 = vmul.f32 %v282, %v290
      %v299 = vmul.f32 %v283, %v291
      %v300 = vmul.f32 %v284, %v292
      %v301 = vmul.f32 %v285, %v293
      %v302 = vmul.f32 %v286, %v294
      %v303 = vmul.f32 %v287, %v295
      %v304 = vpack.c.bf16 %v297, %v296
      %v305 = vpack.c.bf16 %v299, %v298
      %v306 = vpack.c.bf16 %v301, %v300
      %v307 = vpack.c.bf16 %v303, %v302
      %308 = vst [vmem:[#allocation3] sm:$0xff] %v304
      %309 = vst [vmem:[#allocation3 + $0x48] sm:$0xff] %v305
      %310 = vst [vmem:[#allocation3 + $0x90] sm:$0xff] %v306
      %311 = vst [vmem:[#allocation3 + $0xd8] sm:$0xff] %v307
      %v312 = vld [vmem:[#allocation2 + $0x8] sm:$0xff]
      %v313 = vld [vmem:[#allocation2 + $0x10] sm:$0xff]
      %v314 = vld [vmem:[#allocation2 + $0x18] sm:$0xff]
      %v315 = vld [vmem:[#allocation2 + $0x20] sm:$0xff]
      %v316 = vld [vmem:[#allocation2 + $0x28] sm:$0xff]
      %v317 = vld [vmem:[#allocation2 + $0x30] sm:$0xff]
      %v318 = vld [vmem:[#allocation2 + $0x38] sm:$0xff]
      %v319 = vld [vmem:[#allocation2 + $0x40] sm:$0xff]
      %v320 = vpack.c.bf16 %v313, %v312
      %v321 = vpack.c.bf16 %v315, %v314
      %v322 = vpack.c.bf16 %v317, %v316
      %v323 = vpack.c.bf16 %v319, %v318
      %324 = vst [vmem:[#allocation3 + $0x8] sm:$0xff] %v320
      %325 = vst [vmem:[#allocation3 + $0x50] sm:$0xff] %v321
      %326 = vst [vmem:[#allocation3 + $0x98] sm:$0xff] %v322
      %327 = vst [vmem:[#allocation3 + $0xe0] sm:$0xff] %v323
      %v328 = vld [vmem:[#allocation2 + $0x9] sm:$0xff]
      %v329 = vld [vmem:[#allocation2 + $0x11] sm:$0xff]
      %v330 = vld [vmem:[#allocation2 + $0x19] sm:$0xff]
      %v331 = vld [vmem:[#allocation2 + $0x21] sm:$0xff]
      %v332 = vld [vmem:[#allocation2 + $0x29] sm:$0xff]
      %v333 = vld [vmem:[#allocation2 + $0x31] sm:$0xff]
      %v334 = vld [vmem:[#allocation2 + $0x39] sm:$0xff]
      %v335 = vld [vmem:[#allocation2 + $0x41] sm:$0xff]
      %s336 = scalar_lea.vmem %s1, 64
      %v337 = vld [vmem:[%s336] sm:$0xff]
      %v338 = vld [vmem:[%s336 + $0x8] sm:$0xff]
      %v339 = vld [vmem:[%s336 + $0x10] sm:$0xff]
      %v340 = vld [vmem:[%s336 + $0x18] sm:$0xff]
      %v341 = vld [vmem:[%s336 + $0x20] sm:$0xff]
      %v342 = vld [vmem:[%s336 + $0x28] sm:$0xff]
      %v343 = vld [vmem:[%s336 + $0x30] sm:$0xff]
      %v344 = vld [vmem:[%s336 + $0x38] sm:$0xff]
      %v345 = vmul.f32 %v328, %v337
      %v346 = vmul.f32 %v329, %v338
      %v347 = vmul.f32 %v330, %v339
      %v348 = vmul.f32 %v331, %v340
      %v349 = vmul.f32 %v332, %v341
      %v350 = vmul.f32 %v333, %v342
      %v351 = vmul.f32 %v334, %v343
      %v352 = vmul.f32 %v335, %v344
      %v353 = vpack.c.bf16 %v346, %v345
      %v354 = vpack.c.bf16 %v348, %v347
      %v355 = vpack.c.bf16 %v350, %v349
      %v356 = vpack.c.bf16 %v352, %v351
      %357 = vst [vmem:[#allocation3 + $0x10] sm:$0xff] %v353
      %358 = vst [vmem:[#allocation3 + $0x58] sm:$0xff] %v354
      %359 = vst [vmem:[#allocation3 + $0xa0] sm:$0xff] %v355
      %360 = vst [vmem:[#allocation3 + $0xe8] sm:$0xff] %v356
      %v361 = vld [vmem:[#allocation2 + $0xf] sm:$0xff]
      %v362 = vld [vmem:[#allocation2 + $0x17] sm:$0xff]
      %v363 = vld [vmem:[#allocation2 + $0x1f] sm:$0xff]
      %v364 = vld [vmem:[#allocation2 + $0x27] sm:$0xff]
      %v365 = vld [vmem:[#allocation2 + $0x2f] sm:$0xff]
      %v366 = vld [vmem:[#allocation2 + $0x37] sm:$0xff]
      %v367 = vld [vmem:[#allocation2 + $0x3f] sm:$0xff]
      %v368 = vld [vmem:[#allocation2 + $0x47] sm:$0xff]
      %v369 = vld [vmem:[%s1] sm:$0xff]
      %v370 = vld [vmem:[%s1 + $0x8] sm:$0xff]
      %v371 = vld [vmem:[%s1 + $0x10] sm:$0xff]
      %v372 = vld [vmem:[%s1 + $0x18] sm:$0xff]
      %v373 = vld [vmem:[%s1 + $0x20] sm:$0xff]
      %v374 = vld [vmem:[%s1 + $0x28] sm:$0xff]
      %v375 = vld [vmem:[%s1 + $0x30] sm:$0xff]
      %v376 = vld [vmem:[%s1 + $0x38] sm:$0xff]
      %v377 = vmul.f32 %v361, %v369
      %v378 = vmul.f32 %v362, %v370
      %v379 = vmul.f32 %v363, %v371
      %v380 = vmul.f32 %v364, %v372
      %v381 = vmul.f32 %v365, %v373
      %v382 = vmul.f32 %v366, %v374
      %v383 = vmul.f32 %v367, %v375
      %v384 = vmul.f32 %v368, %v376
      %v385 = vpack.c.bf16 %v378, %v377
      %v386 = vpack.c.bf16 %v380, %v379
      %v387 = vpack.c.bf16 %v382, %v381
      %v388 = vpack.c.bf16 %v384, %v383
      %389 = vst [vmem:[#allocation3 + $0x18] sm:$0xff] %v385
      %390 = vst [vmem:[#allocation3 + $0x60] sm:$0xff] %v386
      %391 = vst [vmem:[#allocation3 + $0xa8] sm:$0xff] %v387
      %392 = vst [vmem:[#allocation3 + $0xf0] sm:$0xff] %v388
      %v393 = vld [vmem:[#allocation2 + $0x10] sm:$0xff]
      %v394 = vld [vmem:[#allocation2 + $0x18] sm:$0xff]
      %v395 = vld [vmem:[#allocation2 + $0x20] sm:$0xff]
      %v396 = vld [vmem:[#allocation2 + $0x28] sm:$0xff]
      %v397 = vld [vmem:[#allocation2 + $0x30] sm:$0xff]
      %v398 = vld [vmem:[#allocation2 + $0x38] sm:$0xff]
      %v399 = vld [vmem:[#allocation2 + $0x40] sm:$0xff]
      %v400 = vld [vmem:[#allocation2 + $0x48] sm:$0xff]
      %v401 = vpack.c.bf16 %v394, %v393
      %v402 = vpack.c.bf16 %v396, %v395
      %v403 = vpack.c.bf16 %v398, %v397
      %v404 = vpack.c.bf16 %v400, %v399
      %405 = vst [vmem:[#allocation3 + $0x20] sm:$0xff] %v401
      %406 = vst [vmem:[#allocation3 + $0x68] sm:$0xff] %v402
      %407 = vst [vmem:[#allocation3 + $0xb0] sm:$0xff] %v403
      %408 = vst [vmem:[#allocation3 + $0xf8] sm:$0xff] %v404
      %v409 = vld [vmem:[#allocation2 + $0x11] sm:$0xff]
      %v410 = vld [vmem:[#allocation2 + $0x19] sm:$0xff]
      %v411 = vld [vmem:[#allocation2 + $0x21] sm:$0xff]
      %v412 = vld [vmem:[#allocation2 + $0x29] sm:$0xff]
      %v413 = vld [vmem:[#allocation2 + $0x31] sm:$0xff]
      %v414 = vld [vmem:[#allocation2 + $0x39] sm:$0xff]
      %v415 = vld [vmem:[#allocation2 + $0x41] sm:$0xff]
      %v416 = vld [vmem:[#allocation2 + $0x49] sm:$0xff]
      %v417 = vld [vmem:[%s336] sm:$0xff]
      %v418 = vld [vmem:[%s336 + $0x8] sm:$0xff]
      %v419 = vld [vmem:[%s336 + $0x10] sm:$0xff]
      %v420 = vld [vmem:[%s336 + $0x18] sm:$0xff]
      %v421 = vld [vmem:[%s336 + $0x20] sm:$0xff]
      %v422 = vld [vmem:[%s336 + $0x28] sm:$0xff]
      %v423 = vld [vmem:[%s336 + $0x30] sm:$0xff]
      %v424 = vld [vmem:[%s336 + $0x38] sm:$0xff]
      %v425 = vmul.f32 %v409, %v417
      %v426 = vmul.f32 %v410, %v418
      %v427 = vmul.f32 %v411, %v419
      %v428 = vmul.f32 %v412, %v420
      %v429 = vmul.f32 %v413, %v421
      %v430 = vmul.f32 %v414, %v422
      %v431 = vmul.f32 %v415, %v423
      %v432 = vmul.f32 %v416, %v424
      %v433 = vpack.c.bf16 %v426, %v425
      %v434 = vpack.c.bf16 %v428, %v427
      %v435 = vpack.c.bf16 %v430, %v429
      %v436 = vpack.c.bf16 %v432, %v431
      %437 = vst [vmem:[#allocation3 + $0x28] sm:$0xff] %v433
      %438 = vst [vmem:[#allocation3 + $0x70] sm:$0xff] %v434
      %439 = vst [vmem:[#allocation3 + $0xb8] sm:$0xff] %v435
      %440 = vst [vmem:[#allocation3 + $0x100] sm:$0xff] %v436
      %v441 = vld [vmem:[#allocation2 + $0x17] sm:$0xff]
      %v442 = vld [vmem:[#allocation2 + $0x1f] sm:$0xff]
      %v443 = vld [vmem:[#allocation2 + $0x27] sm:$0xff]
      %v444 = vld [vmem:[#allocation2 + $0x2f] sm:$0xff]
      %v445 = vld [vmem:[#allocation2 + $0x37] sm:$0xff]
      %v446 = vld [vmem:[#allocation2 + $0x3f] sm:$0xff]
      %v447 = vld [vmem:[#allocation2 + $0x47] sm:$0xff]
      %v448 = vld [vmem:[#allocation2 + $0x4f] sm:$0xff]
      %v449 = vld [vmem:[%s1] sm:$0xff]
      %v450 = vld [vmem:[%s1 + $0x8] sm:$0xff]
      %v451 = vld [vmem:[%s1 + $0x10] sm:$0xff]
      %v452 = vld [vmem:[%s1 + $0x18] sm:$0xff]
      %v453 = vld [vmem:[%s1 + $0x20] sm:$0xff]
      %v454 = vld [vmem:[%s1 + $0x28] sm:$0xff]
      %v455 = vld [vmem:[%s1 + $0x30] sm:$0xff]
      %v456 = vld [vmem:[%s1 + $0x38] sm:$0xff]
      %v457 = vmul.f32 %v441, %v449
      %v458 = vmul.f32 %v442, %v450
      %v459 = vmul.f32 %v443, %v451
      %v460 = vmul.f32 %v444, %v452
      %v461 = vmul.f32 %v445, %v453
      %v462 = vmul.f32 %v446, %v454
      %v463 = vmul.f32 %v447, %v455
      %v464 = vmul.f32 %v448, %v456
      %v465 = vpack.c.bf16 %v458, %v457
      %v466 = vpack.c.bf16 %v460, %v459
      %v467 = vpack.c.bf16 %v462, %v461
      %v468 = vpack.c.bf16 %v464, %v463
      %469 = vst [vmem:[#allocation3 + $0x30] sm:$0xff] %v465
      %470 = vst [vmem:[#allocation3 + $0x78] sm:$0xff] %v466
      %471 = vst [vmem:[#allocation3 + $0xc0] sm:$0xff] %v467
      %472 = vst [vmem:[#allocation3 + $0x108] sm:$0xff] %v468
      %v473 = vld [vmem:[#allocation2 + $0x18] sm:$0xff]
      %v474 = vld [vmem:[#allocation2 + $0x20] sm:$0xff]
      %v475 = vld [vmem:[#allocation2 + $0x28] sm:$0xff]
      %v476 = vld [vmem:[#allocation2 + $0x30] sm:$0xff]
      %v477 = vld [vmem:[#allocation2 + $0x38] sm:$0xff]
      %v478 = vld [vmem:[#allocation2 + $0x40] sm:$0xff]
      %v479 = vld [vmem:[#allocation2 + $0x48] sm:$0xff]
      %v480 = vld [vmem:[#allocation2 + $0x50] sm:$0xff]
      %v481 = vpack.c.bf16 %v474, %v473
      %v482 = vpack.c.bf16 %v476, %v475
      %v483 = vpack.c.bf16 %v478, %v477
      %v484 = vpack.c.bf16 %v480, %v479
      %485 = vst [vmem:[#allocation3 + $0x38] sm:$0xff] %v481
      %486 = vst [vmem:[#allocation3 + $0x80] sm:$0xff] %v482
      %487 = vst [vmem:[#allocation3 + $0xc8] sm:$0xff] %v483
      %488 = vst [vmem:[#allocation3 + $0x110] sm:$0xff] %v484
      %v489 = vld [vmem:[#allocation2 + $0x19] sm:$0xff]
      %v490 = vld [vmem:[#allocation2 + $0x21] sm:$0xff]
      %v491 = vld [vmem:[#allocation2 + $0x29] sm:$0xff]
      %v492 = vld [vmem:[#allocation2 + $0x31] sm:$0xff]
      %v493 = vld [vmem:[#allocation2 + $0x39] sm:$0xff]
      %v494 = vld [vmem:[#allocation2 + $0x41] sm:$0xff]
      %v495 = vld [vmem:[#allocation2 + $0x49] sm:$0xff]
      %v496 = vld [vmem:[#allocation2 + $0x51] sm:$0xff]
      %v497 = vld [vmem:[%s336] sm:$0xff]
      %v498 = vld [vmem:[%s336 + $0x8] sm:$0xff]
      %v499 = vld [vmem:[%s336 + $0x10] sm:$0xff]
      %v500 = vld [vmem:[%s336 + $0x18] sm:$0xff]
      %v501 = vld [vmem:[%s336 + $0x20] sm:$0xff]
      %v502 = vld [vmem:[%s336 + $0x28] sm:$0xff]
      %v503 = vld [vmem:[%s336 + $0x30] sm:$0xff]
      %v504 = vld [vmem:[%s336 + $0x38] sm:$0xff]
      %v505 = vmul.f32 %v489, %v497
      %v506 = vmul.f32 %v490, %v498
      %v507 = vmul.f32 %v491, %v499
      %v508 = vmul.f32 %v492, %v500
      %v509 = vmul.f32 %v493, %v501
      %v510 = vmul.f32 %v494, %v502
      %v511 = vmul.f32 %v495, %v503
      %v512 = vmul.f32 %v496, %v504
      %v513 = vpack.c.bf16 %v506, %v505
      %v514 = vpack.c.bf16 %v508, %v507
      %v515 = vpack.c.bf16 %v510, %v509
      %v516 = vpack.c.bf16 %v512, %v511
      %517 = vst [vmem:[#allocation3 + $0x40] sm:$0xff] %v513
      %518 = vst [vmem:[#allocation3 + $0x88] sm:$0xff] %v514
      %519 = vst [vmem:[#allocation3 + $0xd0] sm:$0xff] %v515
      %520 = vst [vmem:[#allocation3 + $0x118] sm:$0xff] %v516
      %v521 = vld [vmem:[#allocation3] sm:$0xff]
      %v522 = vld [vmem:[#allocation3 + $0x8] sm:$0xff]
      %v523 = vld [vmem:[#allocation3 + $0x10] sm:$0xff]
      %v524 = vld [vmem:[#allocation3 + $0x18] sm:$0xff]
      %v525 = vld [vmem:[#allocation3 + $0x20] sm:$0xff]
      %v526 = vld [vmem:[#allocation3 + $0x28] sm:$0xff]
      %v527 = vld [vmem:[#allocation3 + $0x30] sm:$0xff]
      %v528 = vld [vmem:[#allocation3 + $0x38] sm:$0xff]
      %v529 = vld [vmem:[#allocation3 + $0x40] sm:$0xff]
      %v530 = vld [vmem:[#allocation3 + $0x48] sm:$0xff]
      %v531 = vld [vmem:[#allocation3 + $0x50] sm:$0xff]
      %v532 = vld [vmem:[#allocation3 + $0x58] sm:$0xff]
      %v533 = vld [vmem:[#allocation3 + $0x60] sm:$0xff]
      %v534 = vld [vmem:[#allocation3 + $0x68] sm:$0xff]
      %v535 = vld [vmem:[#allocation3 + $0x70] sm:$0xff]
      %v536 = vld [vmem:[#allocation3 + $0x78] sm:$0xff]
      %v537 = vld [vmem:[#allocation3 + $0x80] sm:$0xff]
      %v538 = vld [vmem:[#allocation3 + $0x88] sm:$0xff]
      %v539 = vld [vmem:[#allocation3 + $0x90] sm:$0xff]
      %v540 = vld [vmem:[#allocation3 + $0x98] sm:$0xff]
      %v541 = vld [vmem:[#allocation3 + $0xa0] sm:$0xff]
      %v542 = vld [vmem:[#allocation3 + $0xa8] sm:$0xff]
      %v543 = vld [vmem:[#allocation3 + $0xb0] sm:$0xff]
      %v544 = vld [vmem:[#allocation3 + $0xb8] sm:$0xff]
      %v545 = vld [vmem:[#allocation3 + $0xc0] sm:$0xff]
      %v546 = vld [vmem:[#allocation3 + $0xc8] sm:$0xff]
      %v547 = vld [vmem:[#allocation3 + $0xd0] sm:$0xff]
      %v548 = vld [vmem:[#allocation3 + $0xd8] sm:$0xff]
      %v549 = vld [vmem:[#allocation3 + $0xe0] sm:$0xff]
      %v550 = vld [vmem:[#allocation3 + $0xe8] sm:$0xff]
      %v551 = vld [vmem:[#allocation3 + $0xf0] sm:$0xff]
      %v552 = vld [vmem:[#allocation3 + $0xf8] sm:$0xff]
      %v553 = vld [vmem:[#allocation3 + $0x100] sm:$0xff]
      %v554 = vld [vmem:[#allocation3 + $0x108] sm:$0xff]
      %v555 = vld [vmem:[#allocation3 + $0x110] sm:$0xff]
      %v556 = vld [vmem:[#allocation3 + $0x118] sm:$0xff]
      %v557 = vld [vmem:[%s2] sm:$0xf]
      %v558 = vld [vmem:[%s2 + $0x4] sm:$0xf]
      %v559 = vld [vmem:[%s2 + $0x8] sm:$0xf]
      %v560 = vld [vmem:[%s2 + $0xc] sm:$0xf]
      %v561 = vld [vmem:[%s2 + $0x10] sm:$0xf]
      %v562 = vld [vmem:[%s2 + $0x14] sm:$0xf]
      %v563 = vld [vmem:[%s2 + $0x18] sm:$0xf]
      %v564 = vld [vmem:[%s2 + $0x1c] sm:$0xf]
      %v565 = vld [vmem:[%s2 + $0x20] sm:$0xf]
      %v566 = vld [vmem:[%s2 + $0x24] sm:$0xf]
      %v567 = vld [vmem:[%s2 + $0x28] sm:$0xf]
      %v568 = vld [vmem:[%s2 + $0x2c] sm:$0xf]
      %v569 = vld [vmem:[%s2 + $0x30] sm:$0xf]
      %v570 = vld [vmem:[%s2 + $0x34] sm:$0xf]
      %v571 = vld [vmem:[%s2 + $0x38] sm:$0xf]
      %v572 = vld [vmem:[%s2 + $0x3c] sm:$0xf]
      %v573 = vld [vmem:[%s2 + $0x40] sm:$0xf]
      %v574 = vld [vmem:[%s2 + $0x44] sm:$0xf]
      %v575 = vld [vmem:[%s2 + $0x48] sm:$0xf]
      %v576 = vld [vmem:[%s2 + $0x4c] sm:$0xf]
      %v577 = vld [vmem:[%s2 + $0x50] sm:$0xf]
      %v578 = vld [vmem:[%s2 + $0x54] sm:$0xf]
      %v579 = vld [vmem:[%s2 + $0x58] sm:$0xf]
      %v580 = vld [vmem:[%s2 + $0x5c] sm:$0xf]
      %v581 = vld [vmem:[%s2 + $0x60] sm:$0xf]
      %v582 = vld [vmem:[%s2 + $0x64] sm:$0xf]
      %v583 = vld [vmem:[%s2 + $0x68] sm:$0xf]
      %v584 = vld [vmem:[%s2 + $0x6c] sm:$0xf]
      %v585 = vld [vmem:[%s2 + $0x70] sm:$0xf]
      %v586 = vld [vmem:[%s2 + $0x74] sm:$0xf]
      %v587 = vld [vmem:[%s2 + $0x78] sm:$0xf]
      %v588 = vld [vmem:[%s2 + $0x7c] sm:$0xf]
      %v589 = vld [vmem:[%s2 + $0x80] sm:$0xf]
      %v590 = vld [vmem:[%s2 + $0x84] sm:$0xf]
      %v591 = vld [vmem:[%s2 + $0x88] sm:$0xf]
      %v592 = vld [vmem:[%s2 + $0x8c] sm:$0xf]
      %v593 = vld [vmem:[%s2 + $0x90] sm:$0xf]
      %v594 = vld [vmem:[%s2 + $0x94] sm:$0xf]
      %v595 = vld [vmem:[%s2 + $0x98] sm:$0xf]
      %v596 = vld [vmem:[%s2 + $0x9c] sm:$0xf]
      %v597 = vld [vmem:[%s2 + $0xa0] sm:$0xf]
      %v598 = vld [vmem:[%s2 + $0xa4] sm:$0xf]
      %v599 = vld [vmem:[%s2 + $0xa8] sm:$0xf]
      %v600 = vld [vmem:[%s2 + $0xac] sm:$0xf]
      %v601 = vld [vmem:[%s2 + $0xb0] sm:$0xf]
      %v602 = vld [vmem:[%s2 + $0xb4] sm:$0xf]
      %v603 = vld [vmem:[%s2 + $0xb8] sm:$0xf]
      %v604 = vld [vmem:[%s2 + $0xbc] sm:$0xf]
      %v605 = vld [vmem:[%s2 + $0xc0] sm:$0xf]
      %v606 = vld [vmem:[%s2 + $0xc4] sm:$0xf]
      %v607 = vld [vmem:[%s2 + $0xc8] sm:$0xf]
      %v608 = vld [vmem:[%s2 + $0xcc] sm:$0xf]
      %v609 = vld [vmem:[%s2 + $0xd0] sm:$0xf]
      %v610 = vld [vmem:[%s2 + $0xd4] sm:$0xf]
      %v611 = vld [vmem:[%s2 + $0xd8] sm:$0xf]
      %v612 = vld [vmem:[%s2 + $0xdc] sm:$0xf]
      %v613 = vld [vmem:[%s2 + $0xe0] sm:$0xf]
      %v614 = vld [vmem:[%s2 + $0xe4] sm:$0xf]
      %v615 = vld [vmem:[%s2 + $0xe8] sm:$0xf]
      %v616 = vld [vmem:[%s2 + $0xec] sm:$0xf]
      %v617 = vld [vmem:[%s2 + $0xf0] sm:$0xf]
      %v618 = vld [vmem:[%s2 + $0xf4] sm:$0xf]
      %v619 = vld [vmem:[%s2 + $0xf8] sm:$0xf]
      %v620 = vld [vmem:[%s2 + $0xfc] sm:$0xf]
      %v621 = vld [vmem:[%s2 + $0x100] sm:$0xf]
      %v622 = vld [vmem:[%s2 + $0x104] sm:$0xf]
      %v623 = vld [vmem:[%s2 + $0x108] sm:$0xf]
      %v624 = vld [vmem:[%s2 + $0x10c] sm:$0xf]
      %v625 = vld [vmem:[%s2 + $0x110] sm:$0xf]
      %v626 = vld [vmem:[%s2 + $0x114] sm:$0xf]
      %v627 = vld [vmem:[%s2 + $0x118] sm:$0xf]
      %v628 = vld [vmem:[%s2 + $0x11c] sm:$0xf]
      %v629 = vld [vmem:[%s2 + $0x120] sm:$0xf]
      %v630 = vld [vmem:[%s2 + $0x124] sm:$0xf]
      %v631 = vld [vmem:[%s2 + $0x128] sm:$0xf]
      %v632 = vld [vmem:[%s2 + $0x12c] sm:$0xf]
      %v633 = vld [vmem:[%s2 + $0x130] sm:$0xf]
      %v634 = vld [vmem:[%s2 + $0x134] sm:$0xf]
      %v635 = vld [vmem:[%s2 + $0x138] sm:$0xf]
      %v636 = vld [vmem:[%s2 + $0x13c] sm:$0xf]
      %v637 = vld [vmem:[%s2 + $0x140] sm:$0xf]
      %v638 = vld [vmem:[%s2 + $0x144] sm:$0xf]
      %v639 = vld [vmem:[%s2 + $0x148] sm:$0xf]
      %v640 = vld [vmem:[%s2 + $0x14c] sm:$0xf]
      %v641 = vld [vmem:[%s2 + $0x150] sm:$0xf]
      %v642 = vld [vmem:[%s2 + $0x154] sm:$0xf]
      %v643 = vld [vmem:[%s2 + $0x158] sm:$0xf]
      %v644 = vld [vmem:[%s2 + $0x15c] sm:$0xf]
      %v645 = vld [vmem:[%s2 + $0x160] sm:$0xf]
      %v646 = vld [vmem:[%s2 + $0x164] sm:$0xf]
      %v647 = vld [vmem:[%s2 + $0x168] sm:$0xf]
      %v648 = vld [vmem:[%s2 + $0x16c] sm:$0xf]
      %v649 = vld [vmem:[%s2 + $0x170] sm:$0xf]
      %v650 = vld [vmem:[%s2 + $0x174] sm:$0xf]
      %v651 = vld [vmem:[%s2 + $0x178] sm:$0xf]
      %v652 = vld [vmem:[%s2 + $0x17c] sm:$0xf]
      %v653 = vld [vmem:[%s2 + $0x180] sm:$0xf]
      %v654 = vld [vmem:[%s2 + $0x184] sm:$0xf]
      %v655 = vld [vmem:[%s2 + $0x188] sm:$0xf]
      %v656 = vld [vmem:[%s2 + $0x18c] sm:$0xf]
      %v657 = vld [vmem:[%s2 + $0x190] sm:$0xf]
      %v658 = vld [vmem:[%s2 + $0x194] sm:$0xf]
      %v659 = vld [vmem:[%s2 + $0x198] sm:$0xf]
      %v660 = vld [vmem:[%s2 + $0x19c] sm:$0xf]
      %v661 = vld [vmem:[%s2 + $0x1a0] sm:$0xf]
      %v662 = vld [vmem:[%s2 + $0x1a4] sm:$0xf]
      %v663 = vld [vmem:[%s2 + $0x1a8] sm:$0xf]
      %v664 = vld [vmem:[%s2 + $0x1ac] sm:$0xf]
      %v665 = vld [vmem:[%s2 + $0x1b0] sm:$0xf]
      %v666 = vld [vmem:[%s2 + $0x1b4] sm:$0xf]
      %v667 = vld [vmem:[%s2 + $0x1b8] sm:$0xf]
      %v668 = vld [vmem:[%s2 + $0x1bc] sm:$0xf]
      %v669 = vld [vmem:[%s2 + $0x1c0] sm:$0xf]
      %v670 = vld [vmem:[%s2 + $0x1c4] sm:$0xf]
      %v671 = vld [vmem:[%s2 + $0x1c8] sm:$0xf]
      %v672 = vld [vmem:[%s2 + $0x1cc] sm:$0xf]
      %v673 = vld [vmem:[%s2 + $0x1d0] sm:$0xf]
      %v674 = vld [vmem:[%s2 + $0x1d4] sm:$0xf]
      %v675 = vld [vmem:[%s2 + $0x1d8] sm:$0xf]
      %v676 = vld [vmem:[%s2 + $0x1dc] sm:$0xf]
      %v677 = vld [vmem:[%s2 + $0x1e0] sm:$0xf]
      %v678 = vld [vmem:[%s2 + $0x1e4] sm:$0xf]
      %v679 = vld [vmem:[%s2 + $0x1e8] sm:$0xf]
      %v680 = vld [vmem:[%s2 + $0x1ec] sm:$0xf]
      %v681 = vld [vmem:[%s2 + $0x1f0] sm:$0xf]
      %v682 = vld [vmem:[%s2 + $0x1f4] sm:$0xf]
      %v683 = vld [vmem:[%s2 + $0x1f8] sm:$0xf]
      %v684 = vld [vmem:[%s2 + $0x1fc] sm:$0xf]
      %v685 = vld [vmem:[%s2 + $0x200] sm:$0xf]
      %v686 = vld [vmem:[%s2 + $0x204] sm:$0xf]
      %v687 = vld [vmem:[%s2 + $0x208] sm:$0xf]
      %v688 = vld [vmem:[%s2 + $0x20c] sm:$0xf]
      %v689 = vld [vmem:[%s2 + $0x210] sm:$0xf]
      %v690 = vld [vmem:[%s2 + $0x214] sm:$0xf]
      %v691 = vld [vmem:[%s2 + $0x218] sm:$0xf]
      %v692 = vld [vmem:[%s2 + $0x21c] sm:$0xf]
      %v693 = vld [vmem:[%s2 + $0x220] sm:$0xf]
      %v694 = vld [vmem:[%s2 + $0x224] sm:$0xf]
      %v695 = vld [vmem:[%s2 + $0x228] sm:$0xf]
      %v696 = vld [vmem:[%s2 + $0x22c] sm:$0xf]
      %v697 = vld [vmem:[%s2 + $0x230] sm:$0xf]
      %v698 = vld [vmem:[%s2 + $0x234] sm:$0xf]
      %v699 = vld [vmem:[%s2 + $0x238] sm:$0xf]
      %v700 = vld [vmem:[%s2 + $0x23c] sm:$0xf]
      %v845 = vunpack.c.l.b16 %v557
      %v846 = vunpack.c.l.b16 %v558
      %v847 = vunpack.c.l.b16 %v559
      %v848 = vunpack.c.l.b16 %v560
      %v849 = vunpack.c.l.b16 %v561
      %v850 = vunpack.c.l.b16 %v562
      %v851 = vunpack.c.l.b16 %v563
      %v852 = vunpack.c.l.b16 %v564
      %v853 = vunpack.c.l.b16 %v565
      %v854 = vunpack.c.l.b16 %v566
      %v855 = vunpack.c.l.b16 %v567
      %v856 = vunpack.c.l.b16 %v568
      %v857 = vunpack.c.l.b16 %v569
      %v858 = vunpack.c.l.b16 %v570
      %v859 = vunpack.c.l.b16 %v571
      %v860 = vunpack.c.l.b16 %v572
      %v861 = vunpack.c.l.b16 %v573
      %v862 = vunpack.c.l.b16 %v574
      %v863 = vunpack.c.l.b16 %v575
      %v864 = vunpack.c.l.b16 %v576
      %v865 = vunpack.c.l.b16 %v577
      %v866 = vunpack.c.l.b16 %v578
      %v867 = vunpack.c.l.b16 %v579
      %v868 = vunpack.c.l.b16 %v580
      %v869 = vunpack.c.l.b16 %v581
      %v870 = vunpack.c.l.b16 %v582
      %v871 = vunpack.c.l.b16 %v583
      %v872 = vunpack.c.l.b16 %v584
      %v873 = vunpack.c.l.b16 %v585
      %v874 = vunpack.c.l.b16 %v586
      %v875 = vunpack.c.l.b16 %v587
      %v876 = vunpack.c.l.b16 %v588
      %v877 = vunpack.c.l.b16 %v589
      %v878 = vunpack.c.l.b16 %v590
      %v879 = vunpack.c.l.b16 %v591
      %v880 = vunpack.c.l.b16 %v592
      %v881 = vunpack.c.l.b16 %v593
      %v882 = vunpack.c.l.b16 %v594
      %v883 = vunpack.c.l.b16 %v595
      %v884 = vunpack.c.l.b16 %v596
      %v885 = vunpack.c.l.b16 %v597
      %v886 = vunpack.c.l.b16 %v598
      %v887 = vunpack.c.l.b16 %v599
      %v888 = vunpack.c.l.b16 %v600
      %v889 = vunpack.c.l.b16 %v601
      %v890 = vunpack.c.l.b16 %v602
      %v891 = vunpack.c.l.b16 %v603
      %v892 = vunpack.c.l.b16 %v604
      %v893 = vunpack.c.l.b16 %v605
      %v894 = vunpack.c.l.b16 %v606
      %v895 = vunpack.c.l.b16 %v607
      %v896 = vunpack.c.l.b16 %v608
      %v897 = vunpack.c.l.b16 %v609
      %v898 = vunpack.c.l.b16 %v610
      %v899 = vunpack.c.l.b16 %v611
      %v900 = vunpack.c.l.b16 %v612
      %v901 = vunpack.c.l.b16 %v613
      %v902 = vunpack.c.l.b16 %v614
      %v903 = vunpack.c.l.b16 %v615
      %v904 = vunpack.c.l.b16 %v616
      %v905 = vunpack.c.l.b16 %v617
      %v906 = vunpack.c.l.b16 %v618
      %v907 = vunpack.c.l.b16 %v619
      %v908 = vunpack.c.l.b16 %v620
      %v909 = vunpack.c.l.b16 %v621
      %v910 = vunpack.c.l.b16 %v622
      %v911 = vunpack.c.l.b16 %v623
      %v912 = vunpack.c.l.b16 %v624
      %v913 = vunpack.c.l.b16 %v625
      %v914 = vunpack.c.l.b16 %v626
      %v915 = vunpack.c.l.b16 %v627
      %v916 = vunpack.c.l.b16 %v628
      %v917 = vunpack.c.l.b16 %v629
      %v918 = vunpack.c.l.b16 %v630
      %v919 = vunpack.c.l.b16 %v631
      %v920 = vunpack.c.l.b16 %v632
      %v921 = vunpack.c.l.b16 %v633
      %v922 = vunpack.c.l.b16 %v634
      %v923 = vunpack.c.l.b16 %v635
      %v924 = vunpack.c.l.b16 %v636
      %v925 = vunpack.c.l.b16 %v637
      %v926 = vunpack.c.l.b16 %v638
      %v927 = vunpack.c.l.b16 %v639
      %v928 = vunpack.c.l.b16 %v640
      %v929 = vunpack.c.l.b16 %v641
      %v930 = vunpack.c.l.b16 %v642
      %v931 = vunpack.c.l.b16 %v643
      %v932 = vunpack.c.l.b16 %v644
      %v933 = vunpack.c.l.b16 %v645
      %v934 = vunpack.c.l.b16 %v646
      %v935 = vunpack.c.l.b16 %v647
      %v936 = vunpack.c.l.b16 %v648
      %v937 = vunpack.c.l.b16 %v649
      %v938 = vunpack.c.l.b16 %v650
      %v939 = vunpack.c.l.b16 %v651
      %v940 = vunpack.c.l.b16 %v652
      %v941 = vunpack.c.l.b16 %v653
      %v942 = vunpack.c.l.b16 %v654
      %v943 = vunpack.c.l.b16 %v655
      %v944 = vunpack.c.l.b16 %v656
      %v945 = vunpack.c.l.b16 %v657
      %v946 = vunpack.c.l.b16 %v658
      %v947 = vunpack.c.l.b16 %v659
      %v948 = vunpack.c.l.b16 %v660
      %v949 = vunpack.c.l.b16 %v661
      %v950 = vunpack.c.l.b16 %v662
      %v951 = vunpack.c.l.b16 %v663
      %v952 = vunpack.c.l.b16 %v664
      %v953 = vunpack.c.l.b16 %v665
      %v954 = vunpack.c.l.b16 %v666
      %v955 = vunpack.c.l.b16 %v667
      %v956 = vunpack.c.l.b16 %v668
      %v957 = vunpack.c.l.b16 %v669
      %v958 = vunpack.c.l.b16 %v670
      %v959 = vunpack.c.l.b16 %v671
      %v960 = vunpack.c.l.b16 %v672
      %v961 = vunpack.c.l.b16 %v673
      %v962 = vunpack.c.l.b16 %v674
      %v963 = vunpack.c.l.b16 %v675
      %v964 = vunpack.c.l.b16 %v676
      %v965 = vunpack.c.l.b16 %v677
      %v966 = vunpack.c.l.b16 %v678
      %v967 = vunpack.c.l.b16 %v679
      %v968 = vunpack.c.l.b16 %v680
      %v969 = vunpack.c.l.b16 %v681
      %v970 = vunpack.c.l.b16 %v682
      %v971 = vunpack.c.l.b16 %v683
      %v972 = vunpack.c.l.b16 %v684
      %v973 = vunpack.c.l.b16 %v685
      %v974 = vunpack.c.l.b16 %v686
      %v975 = vunpack.c.l.b16 %v687
      %v976 = vunpack.c.l.b16 %v688
      %v977 = vunpack.c.l.b16 %v689
      %v978 = vunpack.c.l.b16 %v690
      %v979 = vunpack.c.l.b16 %v691
      %v980 = vunpack.c.l.b16 %v692
      %v981 = vunpack.c.l.b16 %v693
      %v982 = vunpack.c.l.b16 %v694
      %v983 = vunpack.c.l.b16 %v695
      %v984 = vunpack.c.l.b16 %v696
      %v985 = vunpack.c.l.b16 %v697
      %v986 = vunpack.c.l.b16 %v698
      %v987 = vunpack.c.l.b16 %v699
      %v988 = vunpack.c.l.b16 %v700
      %v989 = vpack.c.b16 %v846, %v845
      %v990 = vpack.c.b16 %v848, %v847
      %v991 = vpack.c.b16 %v850, %v849
      %v992 = vpack.c.b16 %v852, %v851
      %v993 = vpack.c.b16 %v854, %v853
      %v994 = vpack.c.b16 %v856, %v855
      %v995 = vpack.c.b16 %v858, %v857
      %v996 = vpack.c.b16 %v860, %v859
      %v997 = vpack.c.b16 %v862, %v861
      %v998 = vpack.c.b16 %v864, %v863
      %v999 = vpack.c.b16 %v866, %v865
      %v1000 = vpack.c.b16 %v868, %v867
      %v1001 = vpack.c.b16 %v870, %v869
      %v1002 = vpack.c.b16 %v872, %v871
      %v1003 = vpack.c.b16 %v874, %v873
      %v1004 = vpack.c.b16 %v876, %v875
      %v1005 = vpack.c.b16 %v878, %v877
      %v1006 = vpack.c.b16 %v880, %v879
      %v1007 = vpack.c.b16 %v882, %v881
      %v1008 = vpack.c.b16 %v884, %v883
      %v1009 = vpack.c.b16 %v886, %v885
      %v1010 = vpack.c.b16 %v888, %v887
      %v1011 = vpack.c.b16 %v890, %v889
      %v1012 = vpack.c.b16 %v892, %v891
      %v1013 = vpack.c.b16 %v894, %v893
      %v1014 = vpack.c.b16 %v896, %v895
      %v1015 = vpack.c.b16 %v898, %v897
      %v1016 = vpack.c.b16 %v900, %v899
      %v1017 = vpack.c.b16 %v902, %v901
      %v1018 = vpack.c.b16 %v904, %v903
      %v1019 = vpack.c.b16 %v906, %v905
      %v1020 = vpack.c.b16 %v908, %v907
      %v1021 = vpack.c.b16 %v910, %v909
      %v1022 = vpack.c.b16 %v912, %v911
      %v1023 = vpack.c.b16 %v914, %v913
      %v1024 = vpack.c.b16 %v916, %v915
      %v1025 = vpack.c.b16 %v918, %v917
      %v1026 = vpack.c.b16 %v920, %v919
      %v1027 = vpack.c.b16 %v922, %v921
      %v1028 = vpack.c.b16 %v924, %v923
      %v1029 = vpack.c.b16 %v926, %v925
      %v1030 = vpack.c.b16 %v928, %v927
      %v1031 = vpack.c.b16 %v930, %v929
      %v1032 = vpack.c.b16 %v932, %v931
      %v1033 = vpack.c.b16 %v934, %v933
      %v1034 = vpack.c.b16 %v936, %v935
      %v1035 = vpack.c.b16 %v938, %v937
      %v1036 = vpack.c.b16 %v940, %v939
      %v1037 = vpack.c.b16 %v942, %v941
      %v1038 = vpack.c.b16 %v944, %v943
      %v1039 = vpack.c.b16 %v946, %v945
      %v1040 = vpack.c.b16 %v948, %v947
      %v1041 = vpack.c.b16 %v950, %v949
      %v1042 = vpack.c.b16 %v952, %v951
      %v1043 = vpack.c.b16 %v954, %v953
      %v1044 = vpack.c.b16 %v956, %v955
      %v1045 = vpack.c.b16 %v958, %v957
      %v1046 = vpack.c.b16 %v960, %v959
      %v1047 = vpack.c.b16 %v962, %v961
      %v1048 = vpack.c.b16 %v964, %v963
      %v1049 = vpack.c.b16 %v966, %v965
      %v1050 = vpack.c.b16 %v968, %v967
      %v1051 = vpack.c.b16 %v970, %v969
      %v1052 = vpack.c.b16 %v972, %v971
      %v1053 = vpack.c.b16 %v974, %v973
      %v1054 = vpack.c.b16 %v976, %v975
      %v1055 = vpack.c.b16 %v978, %v977
      %v1056 = vpack.c.b16 %v980, %v979
      %v1057 = vpack.c.b16 %v982, %v981
      %v1058 = vpack.c.b16 %v984, %v983
      %v1059 = vpack.c.b16 %v986, %v985
      %v1060 = vpack.c.b16 %v988, %v987
      %1133 = vmatprep.subr.bf16.mxu0 0
      %1134 = vmatpush1.bf16.msra.mxu0 %v989
      %1135 = vmatprep.subr.bf16.mxu0 0
      %1136 = vmatpush1.bf16.msra.mxu0 %v990
      %1137 = vmatprep.subr.bf16.mxu0 0
      %1138 = vmatpush1.bf16.msra.mxu0 %v991
      %1139 = vmatprep.subr.bf16.mxu0 0
      %1140 = vmatpush1.bf16.msra.mxu0 %v992
      %1141 = vmatprep.subr.bf16.mxu0 0
      %1142 = vmatpush1.bf16.msra.mxu0 %v993
      %1143 = vmatprep.subr.bf16.mxu0 0
      %1144 = vmatpush1.bf16.msra.mxu0 %v994
      %1145 = vmatprep.subr.bf16.mxu0 0
      %1146 = vmatpush1.bf16.msra.mxu0 %v995
      %1147 = vmatprep.subr.bf16.mxu0 0
      %1148 = vmatpush1.bf16.msra.mxu0 %v996
      %1149 = vmatprep.subr.bf16.mxu0 0
      %1150 = vmatpush1.bf16.msra.mxu0 %v997
      %1151 = vmatprep.subr.bf16.mxu0 0
      %1152 = vmatpush1.bf16.msra.mxu0 %v998
      %1153 = vmatprep.subr.bf16.mxu0 0
      %1154 = vmatpush1.bf16.msra.mxu0 %v999
      %1155 = vmatprep.subr.bf16.mxu0 0
      %1156 = vmatpush1.bf16.msra.mxu0 %v1000
      %1157 = vmatprep.subr.bf16.mxu0 0
      %1158 = vmatpush1.bf16.msra.mxu0 %v1001
      %1159 = vmatprep.subr.bf16.mxu0 0
      %1160 = vmatpush1.bf16.msra.mxu0 %v1002
      %1161 = vmatprep.subr.bf16.mxu0 0
      %1162 = vmatpush1.bf16.msra.mxu0 %v1003
      %1163 = vmatprep.subr.bf16.mxu0 0
      %1164 = vmatpush1.bf16.msra.mxu0 %v1004
      %1165 = vmatprep.mubr.bf16.mxu0 %v522
      %1166 = vmatmul.mubr.bf16.gmra.mrb[0].mxu0 %v521
      %v1167 = vpop.f32.mrb[0].mxu0
      %v1168 = vadd.f32 0.0, %v1167
      %v1169 = vpop.f32.mrb[0].mxu0
      %v1170 = vpop.f32.mrb[0].mxu0
      %v1171 = vadd.f32 0.0, %v1170
      %v1172 = vpop.f32.mrb[0].mxu0
      %1173 = vmatprep.mubr.bf16.mxu0 %v531
      %1174 = vmatmul.mubr.bf16.gmra.mrb[0].mxu0 %v530
      %v1175 = vpop.f32.mrb[0].mxu0
      %v1176 = vadd.f32 0.0, %v1175
      %v1177 = vpop.f32.mrb[0].mxu0
      %v1178 = vpop.f32.mrb[0].mxu0
      %v1179 = vadd.f32 0.0, %v1178
      %v1180 = vpop.f32.mrb[0].mxu0
      %1181 = vmatprep.mubr.bf16.mxu0 %v540
      %1182 = vmatmul.mubr.bf16.gmra.mrb[0].mxu0 %v539
      %v1183 = vpop.f32.mrb[0].mxu0
      %v1184 = vadd.f32 0.0, %v1183
      %v1185 = vpop.f32.mrb[0].mxu0
      %v1186 = vpop.f32.mrb[0].mxu0
      %v1187 = vadd.f32 0.0, %v1186
      %v1188 = vpop.f32.mrb[0].mxu0
      %1189 = vmatprep.mubr.bf16.mxu0 %v549
      %1190 = vmatmul.mubr.bf16.gmra.mrb[0].mxu0 %v548
      %v1191 = vpop.f32.mrb[0].mxu0
      %v1192 = vadd.f32 0.0, %v1191
      %v1193 = vpop.f32.mrb[0].mxu0
      %v1194 = vpop.f32.mrb[0].mxu0
      %v1195 = vadd.f32 0.0, %v1194
      %v1196 = vpop.f32.mrb[0].mxu0
      %1197 = vdwg.mxu0
      %1198 = vmatprep.subr.bf16.mxu0 0
      %1199 = vmatpush1.bf16.msra.mxu0 %v1005
      %1200 = vmatprep.subr.bf16.mxu0 0
      %1201 = vmatpush1.bf16.msra.mxu0 %v1006
      %1202 = vmatprep.subr.bf16.mxu0 0
      %1203 = vmatpush1.bf16.msra.mxu0 %v1007
      %1204 = vmatprep.subr.bf16.mxu0 0
      %1205 = vmatpush1.bf16.msra.mxu0 %v1008
      %1206 = vmatprep.subr.bf16.mxu0 0
      %1207 = vmatpush1.bf16.msra.mxu0 %v1009
      %1208 = vmatprep.subr.bf16.mxu0 0
      %1209 = vmatpush1.bf16.msra.mxu0 %v1010
      %1210 = vmatprep.subr.bf16.mxu0 0
      %1211 = vmatpush1.bf16.msra.mxu0 %v1011
      %1212 = vmatprep.subr.bf16.mxu0 0
      %1213 = vmatpush1.bf16.msra.mxu0 %v1012
      %1214 = vmatprep.subr.bf16.mxu0 0
      %1215 = vmatpush1.bf16.msra.mxu0 %v1013
      %1216 = vmatprep.subr.bf16.mxu0 0
      %1217 = vmatpush1.bf16.msra.mxu0 %v1014
      %1218 = vmatprep.subr.bf16.mxu0 0
      %1219 = vmatpush1.bf16.msra.mxu0 %v1015
      %1220 = vmatprep.subr.bf16.mxu0 0
      %1221 = vmatpush1.bf16.msra.mxu0 %v1016
      %1222 = vmatprep.subr.bf16.mxu0 0
      %1223 = vmatpush1.bf16.msra.mxu0 %v1017
      %1224 = vmatprep.subr.bf16.mxu0 0
      %1225 = vmatpush1.bf16.msra.mxu0 %v1018
      %1226 = vmatprep.subr.bf16.mxu0 0
      %1227 = vmatpush1.bf16.msra.mxu0 %v1019
      %1228 = vmatprep.subr.bf16.mxu0 0
      %1229 = vmatpush1.bf16.msra.mxu0 %v1020
      %1230 = vmatprep.mubr.bf16.mxu0 %v524
      %1231 = vmatmul.mubr.bf16.gmra.mrb[0].mxu0 %v523
      %v1232 = vpop.f32.mrb[0].mxu0
      %v1233 = vadd.f32 %v1168, %v1232
      %v1234 = vpop.f32.mrb[0].mxu0
      %v1235 = vpop.f32.mrb[0].mxu0
      %v1236 = vadd.f32 %v1171, %v1235
      %v1237 = vpop.f32.mrb[0].mxu0
      %1238 = vmatprep.mubr.bf16.mxu0 %v533
      %1239 = vmatmul.mubr.bf16.gmra.mrb[0].mxu0 %v532
      %v1240 = vpop.f32.mrb[0].mxu0
      %v1241 = vadd.f32 %v1176, %v1240
      %v1242 = vpop.f32.mrb[0].mxu0
      %v1243 = vpop.f32.mrb[0].mxu0
      %v1244 = vadd.f32 %v1179, %v1243
      %v1245 = vpop.f32.mrb[0].mxu0
      %1246 = vmatprep.mubr.bf16.mxu0 %v542
      %1247 = vmatmul.mubr.bf16.gmra.mrb[0].mxu0 %v541
      %v1248 = vpop.f32.mrb[0].mxu0
      %v1249 = vadd.f32 %v1184, %v1248
      %v1250 = vpop.f32.mrb[0].mxu0
      %v1251 = vpop.f32.mrb[0].mxu0
      %v1252 = vadd.f32 %v1187, %v1251
      %v1253 = vpop.f32.mrb[0].mxu0
      %1254 = vmatprep.mubr.bf16.mxu0 %v551
      %1255 = vmatmul.mubr.bf16.gmra.mrb[0].mxu0 %v550
      %v1256 = vpop.f32.mrb[0].mxu0
      %v1257 = vadd.f32 %v1192, %v1256
      %v1258 = vpop.f32.mrb[0].mxu0
      %v1259 = vpop.f32.mrb[0].mxu0
      %v1260 = vadd.f32 %v1195, %v1259
      %v1261 = vpop.f32.mrb[0].mxu0
      %1262 = vdwg.mxu0
      %1263 = vmatprep.subr.bf16.mxu0 0
      %1264 = vmatpush1.bf16.msra.mxu0 %v1021
      %1265 = vmatprep.subr.bf16.mxu0 0
      %1266 = vmatpush1.bf16.msra.mxu0 %v1022
      %1267 = vmatprep.subr.bf16.mxu0 0
      %1268 = vmatpush1.bf16.msra.mxu0 %v1023
      %1269 = vmatprep.subr.bf16.mxu0 0
      %1270 = vmatpush1.bf16.msra.mxu0 %v1024
      %1271 = vmatprep.subr.bf16.mxu0 0
      %1272 = vmatpush1.bf16.msra.mxu0 %v1025
      %1273 = vmatprep.subr.bf16.mxu0 0
      %1274 = vmatpush1.bf16.msra.mxu0 %v1026
      %1275 = vmatprep.subr.bf16.mxu0 0
      %1276 = vmatpush1.bf16.msra.mxu0 %v1027
      %1277 = vmatprep.subr.bf16.mxu0 0
      %1278 = vmatpush1.bf16.msra.mxu0 %v1028
      %1279 = vmatprep.subr.bf16.mxu0 0
      %1280 = vmatpush1.bf16.msra.mxu0 %v1029
      %1281 = vmatprep.subr.bf16.mxu0 0
      %1282 = vmatpush1.bf16.msra.mxu0 %v1030
      %1283 = vmatprep.subr.bf16.mxu0 0
      %1284 = vmatpush1.bf16.msra.mxu0 %v1031
      %1285 = vmatprep.subr.bf16.mxu0 0
      %1286 = vmatpush1.bf16.msra.mxu0 %v1032
      %1287 = vmatprep.subr.bf16.mxu0 0
      %1288 = vmatpush1.bf16.msra.mxu0 %v1033
      %1289 = vmatprep.subr.bf16.mxu0 0
      %1290 = vmatpush1.bf16.msra.mxu0 %v1034
      %1291 = vmatprep.subr.bf16.mxu0 0
      %1292 = vmatpush1.bf16.msra.mxu0 %v1035
      %1293 = vmatprep.subr.bf16.mxu0 0
      %1294 = vmatpush1.bf16.msra.mxu0 %v1036
      %1295 = vmatprep.mubr.bf16.mxu0 %v526
      %1296 = vmatmul.mubr.bf16.gmra.mrb[0].mxu0 %v525
      %v1297 = vpop.f32.mrb[0].mxu0
      %v1298 = vadd.f32 %v1233, %v1297
      %v1299 = vpop.f32.mrb[0].mxu0
      %v1300 = vpop.f32.mrb[0].mxu0
      %v1301 = vadd.f32 %v1236, %v1300
      %v1302 = vpop.f32.mrb[0].mxu0
      %1303 = vmatprep.mubr.bf16.mxu0 %v535
      %1304 = vmatmul.mubr.bf16.gmra.mrb[0].mxu0 %v534
      %v1305 = vpop.f32.mrb[0].mxu0
      %v1306 = vadd.f32 %v1241, %v1305
      %v1307 = vpop.f32.mrb[0].mxu0
      %v1308 = vpop.f32.mrb[0].mxu0
      %v1309 = vadd.f32 %v1244, %v1308
      %v1310 = vpop.f32.mrb[0].mxu0
      %1311 = vmatprep.mubr.bf16.mxu0 %v544
      %1312 = vmatmul.mubr.bf16.gmra.mrb[0].mxu0 %v543
      %v1313 = vpop.f32.mrb[0].mxu0
      %v1314 = vadd.f32 %v1249, %v1313
      %v1315 = vpop.f32.mrb[0].mxu0
      %v1316 = vpop.f32.mrb[0].mxu0
      %v1317 = vadd.f32 %v1252, %v1316
      %v1318 = vpop.f32.mrb[0].mxu0
      %1319 = vmatprep.mubr.bf16.mxu0 %v553
      %1320 = vmatmul.mubr.bf16.gmra.mrb[0].mxu0 %v552
      %v1321 = vpop.f32.mrb[0].mxu0
      %v1322 = vadd.f32 %v1257, %v1321
      %v1323 = vpop.f32.mrb[0].mxu0
      %v1324 = vpop.f32.mrb[0].mxu0
      %v1325 = vadd.f32 %v1260, %v1324
      %v1326 = vpop.f32.mrb[0].mxu0
      %1327 = vdwg.mxu0
      %1328 = vmatprep.subr.bf16.mxu0 0
      %1329 = vmatpush1.bf16.msra.mxu0 %v1037
      %1330 = vmatprep.subr.bf16.mxu0 0
      %1331 = vmatpush1.bf16.msra.mxu0 %v1038
      %1332 = vmatprep.subr.bf16.mxu0 0
      %1333 = vmatpush1.bf16.msra.mxu0 %v1039
      %1334 = vmatprep.subr.bf16.mxu0 0
      %1335 = vmatpush1.bf16.msra.mxu0 %v1040
      %1336 = vmatprep.subr.bf16.mxu0 0
      %1337 = vmatpush1.bf16.msra.mxu0 %v1041
      %1338 = vmatprep.subr.bf16.mxu0 0
      %1339 = vmatpush1.bf16.msra.mxu0 %v1042
      %1340 = vmatprep.subr.bf16.mxu0 0
      %1341 = vmatpush1.bf16.msra.mxu0 %v1043
      %1342 = vmatprep.subr.bf16.mxu0 0
      %1343 = vmatpush1.bf16.msra.mxu0 %v1044
      %1344 = vmatprep.subr.bf16.mxu0 0
      %1345 = vmatpush1.bf16.msra.mxu0 %v1045
      %1346 = vmatprep.subr.bf16.mxu0 0
      %1347 = vmatpush1.bf16.msra.mxu0 %v1046
      %1348 = vmatprep.subr.bf16.mxu0 0
      %1349 = vmatpush1.bf16.msra.mxu0 %v1047
      %1350 = vmatprep.subr.bf16.mxu0 0
      %1351 = vmatpush1.bf16.msra.mxu0 %v1048
      %1352 = vmatprep.subr.bf16.mxu0 0
      %1353 = vmatpush1.bf16.msra.mxu0 %v1049
      %1354 = vmatprep.subr.bf16.mxu0 0
      %1355 = vmatpush1.bf16.msra.mxu0 %v1050
      %1356 = vmatprep.subr.bf16.mxu0 0
      %1357 = vmatpush1.bf16.msra.mxu0 %v1051
      %1358 = vmatprep.subr.bf16.mxu0 0
      %1359 = vmatpush1.bf16.msra.mxu0 %v1052
      %1360 = vmatprep.mubr.bf16.mxu0 %v528
      %1361 = vmatmul.mubr.bf16.gmra.mrb[0].mxu0 %v527
      %v1362 = vpop.f32.mrb[0].mxu0
      %v1363 = vadd.f32 %v1298, %v1362
      %v1364 = vpop.f32.mrb[0].mxu0
      %v1365 = vpop.f32.mrb[0].mxu0
      %v1366 = vadd.f32 %v1301, %v1365
      %v1367 = vpop.f32.mrb[0].mxu0
      %1368 = vmatprep.mubr.bf16.mxu0 %v537
      %1369 = vmatmul.mubr.bf16.gmra.mrb[0].mxu0 %v536
      %v1370 = vpop.f32.mrb[0].mxu0
      %v1371 = vadd.f32 %v1306, %v1370
      %v1372 = vpop.f32.mrb[0].mxu0
      %v1373 = vpop.f32.mrb[0].mxu0
      %v1374 = vadd.f32 %v1309, %v1373
      %v1375 = vpop.f32.mrb[0].mxu0
      %1376 = vmatprep.mubr.bf16.mxu0 %v546
      %1377 = vmatmul.mubr.bf16.gmra.mrb[0].mxu0 %v545
      %v1378 = vpop.f32.mrb[0].mxu0
      %v1379 = vadd.f32 %v1314, %v1378
      %v1380 = vpop.f32.mrb[0].mxu0
      %v1381 = vpop.f32.mrb[0].mxu0
      %v1382 = vadd.f32 %v1317, %v1381
      %v1383 = vpop.f32.mrb[0].mxu0
      %1384 = vmatprep.mubr.bf16.mxu0 %v555
      %1385 = vmatmul.mubr.bf16.gmra.mrb[0].mxu0 %v554
      %v1386 = vpop.f32.mrb[0].mxu0
      %v1387 = vadd.f32 %v1322, %v1386
      %v1388 = vpop.f32.mrb[0].mxu0
      %v1389 = vpop.f32.mrb[0].mxu0
      %v1390 = vadd.f32 %v1325, %v1389
      %v1391 = vpop.f32.mrb[0].mxu0
      %1392 = vdwg.mxu0
      %1393 = vmatprep.subr.bf16.mxu0 0
      %1394 = vmatpush1.bf16.msra.mxu0 %v1053
      %1395 = vmatprep.subr.bf16.mxu0 0
      %1396 = vmatpush1.bf16.msra.mxu0 %v1054
      %1397 = vmatprep.subr.bf16.mxu0 0
      %1398 = vmatpush1.bf16.msra.mxu0 %v1055
      %1399 = vmatprep.subr.bf16.mxu0 0
      %1400 = vmatpush1.bf16.msra.mxu0 %v1056
      %1401 = vmatprep.subr.bf16.mxu0 0
      %1402 = vmatpush1.bf16.msra.mxu0 %v1057
      %1403 = vmatprep.subr.bf16.mxu0 0
      %1404 = vmatpush1.bf16.msra.mxu0 %v1058
      %1405 = vmatprep.subr.bf16.mxu0 0
      %1406 = vmatpush1.bf16.msra.mxu0 %v1059
      %1407 = vmatprep.subr.bf16.mxu0 0
      %1408 = vmatpush1.bf16.msra.mxu0 %v1060
      %1409 = vmatprep.subr.bf16.mxu0 0
      %1410 = vmatpush1.bf16.msra.mxu0 0
      %1411 = vmatprep.subr.bf16.mxu0 0
      %1412 = vmatpush1.bf16.msra.mxu0 0
      %1413 = vmatprep.subr.bf16.mxu0 0
      %1414 = vmatpush1.bf16.msra.mxu0 0
      %1415 = vmatprep.subr.bf16.mxu0 0
      %1416 = vmatpush1.bf16.msra.mxu0 0
      %1417 = vmatprep.subr.bf16.mxu0 0
      %1418 = vmatpush1.bf16.msra.mxu0 0
      %1419 = vmatprep.subr.bf16.mxu0 0
      %1420 = vmatpush1.bf16.msra.mxu0 0
      %1421 = vmatprep.subr.bf16.mxu0 0
      %1422 = vmatpush1.bf16.msra.mxu0 0
      %1423 = vmatprep.subr.bf16.mxu0 0
      %1424 = vmatpush1.bf16.msra.mxu0 0
      %1425 = vmatprep.mubr.bf16.mxu0 0
      %1426 = vmatmul.mubr.bf16.gmra.mrb[0].mxu0 %v529
      %v1427 = vpop.f32.mrb[0].mxu0
      %v1428 = vadd.f32 %v1363, %v1427
      %v1429 = vpop.f32.mrb[0].mxu0
      %v1430 = vpop.f32.mrb[0].mxu0
      %v1431 = vadd.f32 %v1366, %v1430
      %v1432 = vpop.f32.mrb[0].mxu0
      %1433 = vmatprep.mubr.bf16.mxu0 0
      %1434 = vmatmul.mubr.bf16.gmra.mrb[0].mxu0 %v538
      %v1435 = vpop.f32.mrb[0].mxu0
      %v1436 = vadd.f32 %v1371, %v1435
      %v1437 = vpop.f32.mrb[0].mxu0
      %v1438 = vpop.f32.mrb[0].mxu0
      %v1439 = vadd.f32 %v1374, %v1438
      %v1440 = vpop.f32.mrb[0].mxu0
      %1441 = vmatprep.mubr.bf16.mxu0 0
      %1442 = vmatmul.mubr.bf16.gmra.mrb[0].mxu0 %v547
      %v1443 = vpop.f32.mrb[0].mxu0
      %v1444 = vadd.f32 %v1379, %v1443
      %v1445 = vpop.f32.mrb[0].mxu0
      %v1446 = vpop.f32.mrb[0].mxu0
      %v1447 = vadd.f32 %v1382, %v1446
      %v1448 = vpop.f32.mrb[0].mxu0
      %1449 = vmatprep.mubr.bf16.mxu0 0
      %1450 = vmatmul.mubr.bf16.gmra.mrb[0].mxu0 %v556
      %v1451 = vpop.f32.mrb[0].mxu0
      %v1452 = vadd.f32 %v1387, %v1451
      %v1453 = vpop.f32.mrb[0].mxu0
      %v1454 = vpop.f32.mrb[0].mxu0
      %v1455 = vadd.f32 %v1390, %v1454
      %v1456 = vpop.f32.mrb[0].mxu0
      %1457 = vdwg.mxu0
      %v1458 = vpack.c.bf16 %v1431, %v1428
      %v1459 = vpack.c.bf16 %v1439, %v1436
      %v1460 = vpack.c.bf16 %v1447, %v1444
      %v1461 = vpack.c.bf16 %v1455, %v1452
      %v1466 = vunpack.c.l.b16 %v1458
      %v1467 = vunpack.c.h.b16 %v1458
      %v1468 = vunpack.c.l.b16 %v1459
      %v1469 = vunpack.c.h.b16 %v1459
      %v1470 = vunpack.c.l.b16 %v1460
      %v1471 = vunpack.c.h.b16 %v1460
      %v1472 = vunpack.c.l.b16 %v1461
      %v1473 = vunpack.c.h.b16 %v1461
      %v1474 = vpack.c.b16 %v1466, %v1466
      %v1475 = vpack.c.b16 %v1467, %v1467
      %v1476 = vpack.c.b16 %v1468, %v1468
      %v1477 = vpack.c.b16 %v1469, %v1469
      %v1478 = vpack.c.b16 %v1470, %v1470
      %v1479 = vpack.c.b16 %v1471, %v1471
      %v1480 = vpack.c.b16 %v1472, %v1472
      %v1481 = vpack.c.b16 %v1473, %v1473
      %1490 = vst [vmem:[%s235] sm:$0xf] %v1474
      %1491 = vst [vmem:[%s235 + $0x4] sm:$0xf] %v1475
      %1492 = vst [vmem:[%s235 + $0x8] sm:$0xf] %v1476
      %1493 = vst [vmem:[%s235 + $0xc] sm:$0xf] %v1477
      %1494 = vst [vmem:[%s235 + $0x10] sm:$0xf] %v1478
      %1495 = vst [vmem:[%s235 + $0x14] sm:$0xf] %v1479
      %1496 = vst [vmem:[%s235 + $0x18] sm:$0xf] %v1480
      %1497 = vst [vmem:[%s235 + $0x1c] sm:$0xf] %v1481
      %v1498 = vadd.f32 %v1428, %v1431
      %v1499 = vadd.f32 %v1498, %v1436
      %v1500 = vadd.f32 %v1499, %v1439
      %v1501 = vadd.f32 %v1500, %v1444
      %v1502 = vadd.f32 %v1501, %v1447
      %v1503 = vadd.f32 %v1502, %v1452
      %v1504 = vadd.f32 %v1503, %v1455
      %v1505 = vrot.slane %v1504, 4
      %v1506 = vadd.f32 %v1504, %v1505
      %v1507 = vrot.slane %v1506, 2
      %v1508 = vadd.f32 %v1506, %v1507
      %v1509 = vrot.slane %v1508, 1
      %v1510 = vadd.f32 %v1508, %v1509
      %1511 = vst [vmem:[%s239] sm:$0x1] %v1510
      %v1512 = vmul.f32 %v1428, %v1428
      %v1513 = vmul.f32 %v1431, %v1431
      %v1514 = vmul.f32 %v1436, %v1436
      %v1515 = vmul.f32 %v1439, %v1439
      %v1516 = vmul.f32 %v1444, %v1444
      %v1517 = vmul.f32 %v1447, %v1447
      %v1518 = vmul.f32 %v1452, %v1452
      %v1519 = vmul.f32 %v1455, %v1455
      %v1520 = vadd.f32 %v1512, %v1513
      %v1521 = vadd.f32 %v1520, %v1514
      %v1522 = vadd.f32 %v1521, %v1515
      %v1523 = vadd.f32 %v1522, %v1516
      %v1524 = vadd.f32 %v1523, %v1517
      %v1525 = vadd.f32 %v1524, %v1518
      %v1526 = vadd.f32 %v1525, %v1519
      %v1527 = vrot.slane %v1526, 4
      %v1528 = vadd.f32 %v1526, %v1527
      %v1529 = vrot.slane %v1528, 2
      %v1530 = vadd.f32 %v1528, %v1529
      %v1531 = vrot.slane %v1530, 1
      %v1532 = vadd.f32 %v1530, %v1531
      %1533 = vst [vmem:[%s242] sm:$0x1] %v1532
      %s1534 = smul.u32 8, %s17
      %p1535 = scmp.lt.s32.totalorder %s1534, 15
      %s1536 = scalar_select %p1535, %s1534, 15
      %s1537 = smul.addr %s1536, 4
      %s1538 = scalar_lea.vmem %s3, %s1537
      %p1539 = scmp.lt.s32.totalorder %s17, 1
      %s1540 = scalar_select %p1539, %s17, 1
      %s1541 = scalar_lea.vmem %s4, %s1540
      %p1542 = scmp.lt.s32.totalorder %s17, 1
      %s1543 = scalar_select %p1542, %s17, 1
      %s1544 = scalar_lea.vmem %s5, %s1543
      // Predicated region
      $region33: #{encoder_forward.7} parent=31 // pred_check
        %p1545 = pneg %p103
      $region34: #{encoder_forward.7} parent=31 // pred_check_branch
        %1547 = sbr.rel (%p1545) target = $region36
      $region35: #{encoder_forward.7} parent=31 // pred_region
        %s1548 = smul.u32 8, %s17
      $region36: #{encoder_forward.7} parent=31 // pred_fallthru
        _
      // Predicated region
      $region37: #{encoder_forward.7} parent=31 // pred_check
        %p1549 = pneg %p129
      $region38: #{encoder_forward.7} parent=31 // pred_check_branch
        %1551 = sbr.rel (%p1549) target = $region40
      $region39: #{encoder_forward.7} parent=31 // pred_region
        _
      $region40: #{encoder_forward.7} parent=31 // pred_fallthru
        _
      // Predicated region
      $region41: #{encoder_forward.7} parent=31 // pred_check
        %p1552 = pneg %p155
      $region42: #{encoder_forward.7} parent=31 // pred_check_branch
        %1554 = sbr.rel (%p1552) target = $region44
      $region43: #{encoder_forward.7} parent=31 // pred_region
        _
      $region44: #{encoder_forward.7} parent=31 // pred_fallthru
        _
    $region32: #{encoder_forward.7} parent=5 // pred_fallthru
      _
    %p1555 = scmp.le.s32.totalorder 2, %s12
    // Predicated region
    $region45: #{encoder_forward.7} parent=5 // pred_check
      %p1556 = pneg %p1555
    $region46: #{encoder_forward.7} parent=5 // pred_check_branch
      %1558 = sbr.rel (%p1556) target = $region48
    $region47: #{encoder_forward.7} parent=5 // pred_region
      %s1559 = ssub.s32 %s12, 2
      // Predicated region
      $region49: #{encoder_forward.7} parent=47 // pred_check
        %p1560 = pneg %p109
      $region50: #{encoder_forward.7} parent=47 // pred_check_branch
        %1562 = sbr.rel (%p1560) target = $region52
      $region51: #{encoder_forward.7} parent=47 // pred_region
        %s1563 = smul.u32 8, %s18
        %p1564 = scmp.lt.s32.totalorder %s1563, 15
        %s1565 = scalar_select %p1564, %s1563, 15
        %s1566 = smul.addr %s1565, 4
        %s1567 = scalar_lea.vmem %s3, %s1566
      $region52: #{encoder_forward.7} parent=47 // pred_fallthru
        _
      // Predicated region
      $region53: #{encoder_forward.7} parent=47 // pred_check
        %p1568 = pneg %p135
      $region54: #{encoder_forward.7} parent=47 // pred_check_branch
        %1570 = sbr.rel (%p1568) target = $region56
      $region55: #{encoder_forward.7} parent=47 // pred_region
        %p1571 = scmp.lt.s32.totalorder %s18, 1
        %s1572 = scalar_select %p1571, %s18, 1
        %s1573 = scalar_lea.vmem %s4, %s1572
      $region56: #{encoder_forward.7} parent=47 // pred_fallthru
        _
      // Predicated region
      $region57: #{encoder_forward.7} parent=47 // pred_check
        %p1574 = pneg %p161
      $region58: #{encoder_forward.7} parent=47 // pred_check_branch
        %1576 = sbr.rel (%p1574) target = $region60
      $region59: #{encoder_forward.7} parent=47 // pred_region
        %p1577 = scmp.lt.s32.totalorder %s18, 1
        %s1578 = scalar_select %p1577, %s18, 1
        %s1579 = scalar_lea.vmem %s5, %s1578
      $region60: #{encoder_forward.7} parent=47 // pred_fallthru
        _
    $region48: #{encoder_forward.7} parent=5 // pred_fallthru
      _
  $region6: #{encoder_forward.7} parent=0 // loop_footer
    %s16 = sadd.s32 1, %s12
  $region7: #{encoder_forward.7} parent=0 // loop_footer_branch
    %11 = sbr.rel target = $region3
  $region8: #{encoder_forward.7} parent=0 // loop_exit
    _

// kernel: encoder_forward.13
$region0: #{encoder_forward.13}
  #allocation0 [shape = 'u32[]', space=smem, size = 0x4, offset = 0x4, fixed_abs, tag = 'smem constant byte address 0x4 - core index']
  #allocation1 [shape = 'u32[144,128]{1,0:T(1,128)}', space=vmem, size = 0x12000, scoped, tag = 'internal scratch']
  %s0 = inlined_call_operand.vmem [shape: f32[128,128], index: 0, kind: input, shape index: {}, may-alias: {0,3}]
  %s1 = inlined_call_operand.vmem [shape: bf16[128,128], index: 1, kind: input, shape index: {}]
  %s2 = inlined_call_operand.vmem [shape: f32[2,128], index: 2, kind: input, shape index: {}]
  %s3 = inlined_call_operand.vmem [shape: f32[128,128], index: 3, kind: output, shape index: {}, may-alias: {0,3}]
  %s4 = sld [smem:[#allocation0]]
  $region45: #{encoder_forward.13} parent=0
    _
  %s6 = ssub.s32 1, %s4
  %s7 = scalar_select 0, %s6, %s4
  loop: start=0, step=1, limit=4
  $region2: #{encoder_forward.13} parent=0 // loop_pre_header
    _
  $region3: #{encoder_forward.13} parent=0 // loop_header
    %s9 = sphi 0, %s13
    %p10 = scmp.ge.s32.totalorder %s9, 4
    %s19 = sphi 0, %s21
    %s22 = sphi 0, %s19
    %s23 = sphi 0, %s22
    %s39 = sphi 0, %s23
    %s45 = sphi 0, %s47
    %s48 = sphi 0, %s45
    %s49 = sphi 0, %s48
    %s65 = sphi 0, %s49
    %s69 = sphi 0, %s69
    %s71 = sphi 0, %s69
    %s72 = sphi 0, %s71
    %s86 = sphi 0, %s72
    %s92 = sphi 0, %s94
    %s95 = sphi 0, %s92
    %s96 = sphi 0, %s95
    %s112 = sphi 0, %s96
  $region4: #{encoder_forward.13} parent=0 // loop_header_branch
    %12 = sbr.rel (%p10) target = $region8
  $region5: #{encoder_forward.13} parent=0 // loop_body
    %s14 = ssub.s32 %s9, 1
    %s15 = ssub.s32 %s9, 2
    %s16 = sadd.s32 %s9, 1
    %s17 = ssub.s32 %s9, %s16
    %p18 = scmp.eq.s32.totalorder %s17, 0
    %s20 = sadd.s32 %s19, 1
    %s21 = scalar_select %p18, %s19, %s20
    %p24 = pneg %p18
    %p25 = scmp.eq.s32.totalorder %s9, 1
    %p26 = por %p24, %p25
    %p27 = scmp.ne.s32.totalorder %s19, %s22
    %p28 = scmp.eq.s32.totalorder %s9, 0
    %p29 = por %p27, %p28
    %p30 = scmp.ne.s32.totalorder %s19, %s22
    %p31 = scmp.eq.s32.totalorder %s14, 1
    %p32 = por %p30, %p31
    %p33 = scmp.ne.s32.totalorder %s22, %s23
    %p34 = scmp.eq.s32.totalorder %s14, 0
    %p35 = por %p33, %p34
    %p36 = scmp.ne.s32.totalorder %s22, %s23
    %p37 = scmp.eq.s32.totalorder %s15, 1
    %p38 = por %p36, %p37
    %p40 = scmp.ne.s32.totalorder %s23, %s39
    %p41 = scmp.eq.s32.totalorder %s15, 0
    %p42 = por %p40, %p41
    %s43 = ssub.s32 %s9, %s16
    %p44 = scmp.eq.s32.totalorder %s43, 0
    %s46 = sadd.s32 %s45, 1
    %s47 = scalar_select %p44, %s45, %s46
    %p50 = pneg %p44
    %p51 = scmp.eq.s32.totalorder %s9, 1
    %p52 = por %p50, %p51
    %p53 = scmp.ne.s32.totalorder %s45, %s48
    %p54 = scmp.eq.s32.totalorder %s9, 0
    %p55 = por %p53, %p54
    %p56 = scmp.ne.s32.totalorder %s45, %s48
    %p57 = scmp.eq.s32.totalorder %s14, 1
    %p58 = por %p56, %p57
    %p59 = scmp.ne.s32.totalorder %s48, %s49
    %p60 = scmp.eq.s32.totalorder %s14, 0
    %p61 = por %p59, %p60
    %p62 = scmp.ne.s32.totalorder %s48, %s49
    %p63 = scmp.eq.s32.totalorder %s15, 1
    %p64 = por %p62, %p63
    %p66 = scmp.ne.s32.totalorder %s49, %s65
    %p67 = scmp.eq.s32.totalorder %s15, 0
    %p68 = por %p66, %p67
    %s70 = sadd.s32 %s69, 1
    %p73 = scmp.eq.s32.totalorder %s9, 1
    %p74 = scmp.ne.s32.totalorder %s69, %s71
    %p75 = scmp.eq.s32.totalorder %s9, 0
    %p76 = por %p74, %p75
    %p77 = scmp.ne.s32.totalorder %s69, %s71
    %p78 = scmp.eq.s32.totalorder %s14, 1
    %p79 = por %p77, %p78
    %p80 = scmp.ne.s32.totalorder %s71, %s72
    %p81 = scmp.eq.s32.totalorder %s14, 0
    %p82 = por %p80, %p81
    %p83 = scmp.ne.s32.totalorder %s71, %s72
    %p84 = scmp.eq.s32.totalorder %s15, 1
    %p85 = por %p83, %p84
    %p87 = scmp.ne.s32.totalorder %s72, %s86
    %p88 = scmp.eq.s32.totalorder %s15, 0
    %p89 = por %p87, %p88
    %s90 = ssub.s32 %s9, %s16
    %p91 = scmp.eq.s32.totalorder %s90, 0
    %s93 = sadd.s32 %s92, 1
    %s94 = scalar_select %p91, %s92, %s93
    %p97 = pneg %p91
    %p98 = scmp.eq.s32.totalorder %s9, 1
    %p99 = por %p97, %p98
    %p100 = scmp.ne.s32.totalorder %s92, %s95
    %p101 = scmp.eq.s32.totalorder %s9, 0
    %p102 = por %p100, %p101
    %p103 = scmp.ne.s32.totalorder %s92, %s95
    %p104 = scmp.eq.s32.totalorder %s14, 1
    %p105 = por %p103, %p104
    %p106 = scmp.ne.s32.totalorder %s95, %s96
    %p107 = scmp.eq.s32.totalorder %s14, 0
    %p108 = por %p106, %p107
    %p109 = scmp.ne.s32.totalorder %s95, %s96
    %p110 = scmp.eq.s32.totalorder %s15, 1
    %p111 = por %p109, %p110
    %p113 = scmp.ne.s32.totalorder %s96, %s112
    %p114 = scmp.eq.s32.totalorder %s15, 0
    %p115 = por %p113, %p114
    %p116 = scmp.le.s32.totalorder 1, %s9
    %p117 = scmp.lt.s32.totalorder %s9, 3
    %p118 = pnand %p116, %p117
    %p119 = pneg %p118
    // Predicated region
    $region9: #{encoder_forward.13} parent=5 // pred_check
      _
    $region10: #{encoder_forward.13} parent=5 // pred_check_branch
      %121 = sbr.rel (%p118) target = $region12
    $region11: #{encoder_forward.13} parent=5 // pred_region
      %s122 = ssub.s32 %s9, 1
      // Predicated region
      $region13: #{encoder_forward.13} parent=11 // pred_check
        %p123 = pneg %p82
      $region14: #{encoder_forward.13} parent=11 // pred_check_branch
        %125 = sbr.rel (%p123) target = $region16
      $region15: #{encoder_forward.13} parent=11 // pred_region
        _
      $region16: #{encoder_forward.13} parent=11 // pred_fallthru
        _
    $region12: #{encoder_forward.13} parent=5 // pred_fallthru
      _
    %p126 = scmp.lt.s32.totalorder %s9, 2
    // Predicated region
    $region17: #{encoder_forward.13} parent=5 // pred_check
      %p127 = pneg %p126
    $region18: #{encoder_forward.13} parent=5 // pred_check_branch
      %129 = sbr.rel (%p127) target = $region20
    $region19: #{encoder_forward.13} parent=5 // pred_region
      // Predicated region
      $region21: #{encoder_forward.13} parent=19 // pred_check
        %p130 = pneg %p29
      $region22: #{encoder_forward.13} parent=19 // pred_check_branch
        %132 = sbr.rel (%p130) target = $region24
      $region23: #{encoder_forward.13} parent=19 // pred_region
        %s133 = smul.u32 8, %s9
        %p134 = scmp.lt.s32.totalorder %s133, 15
        %s135 = scalar_select %p134, %s133, 15
        %s136 = smul.addr %s135, 8
        %s137 = scalar_lea.vmem %s0, %s136
        %s138 = smul.u32 8, %s9
      $region24: #{encoder_forward.13} parent=19 // pred_fallthru
        _
      // Predicated region
      $region25: #{encoder_forward.13} parent=19 // pred_check
        %p139 = pneg %p55
      $region26: #{encoder_forward.13} parent=19 // pred_check_branch
        %141 = sbr.rel (%p139) target = $region28
      $region27: #{encoder_forward.13} parent=19 // pred_region
        %s142 = smul.u32 8, %s9
        %p143 = scmp.lt.s32.totalorder %s142, 15
        %s144 = scalar_select %p143, %s142, 15
        %s145 = smul.addr %s144, 4
        %s146 = scalar_lea.vmem %s1, %s145
        %s147 = smul.u32 8, %s9
      $region28: #{encoder_forward.13} parent=19 // pred_fallthru
        _
    $region20: #{encoder_forward.13} parent=5 // pred_fallthru
      _
    %p148 = scmp.le.s32.totalorder 1, %s9
    %p149 = scmp.lt.s32.totalorder %s9, 3
    %p150 = pnand %p148, %p149
    %p151 = pneg %p150
    // Predicated region
    $region29: #{encoder_forward.13} parent=5 // pred_check
      _
    $region30: #{encoder_forward.13} parent=5 // pred_check_branch
      %153 = sbr.rel (%p150) target = $region32
    $region31: #{encoder_forward.13} parent=5 // pred_region
      %s154 = ssub.s32 %s9, 1
      %s155 = smul.u32 8, %s14
      %p156 = scmp.lt.s32.totalorder %s155, 15
      %s157 = scalar_select %p156, %s155, 15
      %s158 = smul.addr %s157, 8
      %s159 = scalar_lea.vmem %s0, %s158
      %p160 = pneg %p35
      %p161 = pneg %p32
      %s162 = smul.u32 8, %s14
      %p163 = scmp.lt.s32.totalorder %s162, 15
      %s164 = scalar_select %p163, %s162, 15
      %s165 = smul.addr %s164, 4
      %s166 = scalar_lea.vmem %s1, %s165
      %p167 = pneg %p61
      %p168 = pneg %p58
      %p169 = pneg %p82
      %p170 = pneg %p79
      %p171 = pneg %p108
      %p172 = pneg %p105
      %s173 = smul.u32 8, %s14
      %p174 = scmp.lt.s32.totalorder %s173, 15
      %s175 = scalar_select %p174, %s173, 15
      %s176 = smul.addr %s175, 8
      %s177 = scalar_lea.vmem %s3, %s176
      %s178 = smul.u32 8, %s14
      %p179 = scmp.lt.s32.totalorder %s178, 15
      %s180 = scalar_select %p179, %s178, 15
      %s181 = smul.addr %s180, 8
      %s182 = scalar_lea.vmem %s0, %s181
      %s183 = smul.u32 8, %s14
      %s184 = smul.u32 8, %s14
      %p185 = scmp.lt.s32.totalorder %s184, 15
      %s186 = scalar_select %p185, %s184, 15
      %s187 = smul.addr %s186, 4
      %s188 = scalar_lea.vmem %s1, %s187
      %s189 = smul.u32 8, %s14
      %s190 = smul.u32 8, %s14
      %p191 = scmp.lt.s32.totalorder %s190, 15
      %s192 = scalar_select %p191, %s190, 15
      %s193 = smul.addr %s192, 8
      %s194 = scalar_lea.vmem %s3, %s193
      %s195 = smul.u32 8, %s14
      %v196 = vld [vmem:[%s182] sm:$0xff]
      %v197 = vld [vmem:[%s182 + $0x8] sm:$0xff]
      %v198 = vld [vmem:[%s182 + $0x10] sm:$0xff]
      %v199 = vld [vmem:[%s182 + $0x18] sm:$0xff]
      %v200 = vld [vmem:[%s182 + $0x20] sm:$0xff]
      %v201 = vld [vmem:[%s182 + $0x28] sm:$0xff]
      %v202 = vld [vmem:[%s182 + $0x30] sm:$0xff]
      %v203 = vld [vmem:[%s182 + $0x38] sm:$0xff]
      %v204 = vld [vmem:[%s188] sm:$0xf]
      %v205 = vld [vmem:[%s188 + $0x4] sm:$0xf]
      %v206 = vld [vmem:[%s188 + $0x8] sm:$0xf]
      %v207 = vld [vmem:[%s188 + $0xc] sm:$0xf]
      %v208 = vld [vmem:[%s188 + $0x10] sm:$0xf]
      %v209 = vld [vmem:[%s188 + $0x14] sm:$0xf]
      %v210 = vld [vmem:[%s188 + $0x18] sm:$0xf]
      %v211 = vld [vmem:[%s188 + $0x1c] sm:$0xf]
      %v212 = vunpack.c.l.bf16 %v204
      %v213 = vunpack.c.l.bf16 %v205
      %v214 = vunpack.c.l.bf16 %v206
      %v215 = vunpack.c.l.bf16 %v207
      %v216 = vunpack.c.l.bf16 %v208
      %v217 = vunpack.c.l.bf16 %v209
      %v218 = vunpack.c.l.bf16 %v210
      %v219 = vunpack.c.l.bf16 %v211
      %v220 = vld [vmem:[%s2] sm:$0x1]
      %v221 = vlaneseq
      %v222 = vshrl.u32 %v221, 7
      %v223 = vsub.s32 0, %v222
      %v224 = vrot.slane %v220, %v223
      %v225 = vmul.f32 %v212, %v224
      %v226 = vmul.f32 %v213, %v224
      %v227 = vmul.f32 %v214, %v224
      %v228 = vmul.f32 %v215, %v224
      %v229 = vmul.f32 %v216, %v224
      %v230 = vmul.f32 %v217, %v224
      %v231 = vmul.f32 %v218, %v224
      %v232 = vmul.f32 %v219, %v224
      %v233 = vadd.f32 %v196, %v225
      %v234 = vadd.f32 %v197, %v226
      %v235 = vadd.f32 %v198, %v227
      %v236 = vadd.f32 %v199, %v228
      %v237 = vadd.f32 %v200, %v229
      %v238 = vadd.f32 %v201, %v230
      %v239 = vadd.f32 %v202, %v231
      %v240 = vadd.f32 %v203, %v232
      %v241 = vld [vmem:[%s2 + $0x1] sm:$0x1]
      %v242 = vlaneseq
      %v243 = vshrl.u32 %v242, 7
      %v244 = vsub.s32 0, %v243
      %v245 = vrot.slane %v241, %v244
      %v246 = vadd.f32 %v233, %v245
      %v247 = vadd.f32 %v234, %v245
      %v248 = vadd.f32 %v235, %v245
      %v249 = vadd.f32 %v236, %v245
      %v250 = vadd.f32 %v237, %v245
      %v251 = vadd.f32 %v238, %v245
      %v252 = vadd.f32 %v239, %v245
      %v253 = vadd.f32 %v240, %v245
      %254 = vst [vmem:[%s194] sm:$0xff] %v246
      %255 = vst [vmem:[%s194 + $0x8] sm:$0xff] %v247
      %256 = vst [vmem:[%s194 + $0x10] sm:$0xff] %v248
      %257 = vst [vmem:[%s194 + $0x18] sm:$0xff] %v249
      %258 = vst [vmem:[%s194 + $0x20] sm:$0xff] %v250
      %259 = vst [vmem:[%s194 + $0x28] sm:$0xff] %v251
      %260 = vst [vmem:[%s194 + $0x30] sm:$0xff] %v252
      %261 = vst [vmem:[%s194 + $0x38] sm:$0xff] %v253
      %s262 = smul.u32 8, %s14
      %p263 = scmp.lt.s32.totalorder %s262, 15
      %s264 = scalar_select %p263, %s262, 15
      %s265 = smul.addr %s264, 8
      %s266 = scalar_lea.vmem %s3, %s265
      // Predicated region
      $region33: #{encoder_forward.13} parent=31 // pred_check
        %p267 = pneg %p105
      $region34: #{encoder_forward.13} parent=31 // pred_check_branch
        %269 = sbr.rel (%p267) target = $region36
      $region35: #{encoder_forward.13} parent=31 // pred_region
        %s270 = smul.u32 8, %s14
      $region36: #{encoder_forward.13} parent=31 // pred_fallthru
        _
    $region32: #{encoder_forward.13} parent=5 // pred_fallthru
      _
    %p271 = scmp.le.s32.totalorder 2, %s9
    // Predicated region
    $region37: #{encoder_forward.13} parent=5 // pred_check
      %p272 = pneg %p271
    $region38: #{encoder_forward.13} parent=5 // pred_check_branch
      %274 = sbr.rel (%p272) target = $region40
    $region39: #{encoder_forward.13} parent=5 // pred_region
      %s275 = ssub.s32 %s9, 2
      // Predicated region
      $region41: #{encoder_forward.13} parent=39 // pred_check
        %p276 = pneg %p111
      $region42: #{encoder_forward.13} parent=39 // pred_check_branch
        %278 = sbr.rel (%p276) target = $region44
      $region43: #{encoder_forward.13} parent=39 // pred_region
        %s279 = smul.u32 8, %s15
        %p280 = scmp.lt.s32.totalorder %s279, 15
        %s281 = scalar_select %p280, %s279, 15
        %s282 = smul.addr %s281, 8
        %s283 = scalar_lea.vmem %s3, %s282
      $region44: #{encoder_forward.13} parent=39 // pred_fallthru
        _
    $region40: #{encoder_forward.13} parent=5 // pred_fallthru
      _
  $region6: #{encoder_forward.13} parent=0 // loop_footer
    %s13 = sadd.s32 1, %s9
  $region7: #{encoder_forward.13} parent=0 // loop_footer_branch
    %8 = sbr.rel target = $region3
  $region8: #{encoder_forward.13} parent=0 // loop_exit
    _

// kernel: encoder_forward.9
$region0: #{encoder_forward.9}
  #allocation0 [shape = 'u32[]', space=smem, size = 0x4, offset = 0x4, fixed_abs, tag = 'smem constant byte address 0x4 - core index']
  #allocation1 [shape = 'u32[144,128]{1,0:T(1,128)}', space=vmem, size = 0x12000, scoped, tag = 'internal scratch']
  #allocation2 [shape = 'f32[96,128]{1,0:T(8,128)}', space=vmem, size = 0xc000, scoped, tag = 'scratch operand']
  #allocation3 [shape = 'bf16[64,1152]{1,0:T(16,128)(2,1)}', space=vmem, size = 0x24000, scoped, tag = 'scratch operand']
  %s0 = inlined_call_operand.vmem [shape: f32[2,8,8,128], index: 0, kind: input, shape index: {}, may-alias: {0,5}]
  %s1 = inlined_call_operand.vmem [shape: bf16[2,8,8,128], index: 1, kind: input, shape index: {}]
  %s2 = inlined_call_operand.vmem [shape: f32[2,128], index: 2, kind: input, shape index: {}]
  %s3 = inlined_call_operand.vmem [shape: f32[2,64,128], index: 3, kind: input, shape index: {}]
  %s4 = inlined_call_operand.vmem [shape: bf16[1152,128], index: 4, kind: input, shape index: {}]
  %s5 = inlined_call_operand.vmem [shape: f32[2,8,8,128], index: 5, kind: output, shape index: {0}, may-alias: {0,5}]
  %s6 = inlined_call_operand.vmem [shape: bf16[128,128], index: 6, kind: output, shape index: {1}]
  %s7 = inlined_call_operand.vmem [shape: f32[2,1,128], index: 7, kind: output, shape index: {2}]
  %s8 = inlined_call_operand.vmem [shape: f32[2,1,128], index: 8, kind: output, shape index: {3}]
  %9 = xla_tuple %s5, %s6, %s7, %s8
  %s10 = sld [smem:[#allocation0]]
  $region77: #{encoder_forward.9} parent=0
    _
  %s12 = ssub.s32 1, %s10
  %s13 = scalar_select 0, %s12, %s10
  loop: start=0, step=1, limit=4
  $region2: #{encoder_forward.9} parent=0 // loop_pre_header
    _
  $region3: #{encoder_forward.9} parent=0 // loop_header
    %s15 = sphi 0, %s19
    %p16 = scmp.ge.s32.totalorder %s15, 4
    %s25 = sphi 0, %s27
    %s28 = sphi 0, %s25
    %s29 = sphi 0, %s28
    %s45 = sphi 0, %s29
    %s51 = sphi 0, %s53
    %s54 = sphi 0, %s51
    %s55 = sphi 0, %s54
    %s71 = sphi 0, %s55
    %s75 = sphi 0, %s75
    %s77 = sphi 0, %s75
    %s78 = sphi 0, %s77
    %s92 = sphi 0, %s78
    %s96 = sphi 0, %s96
    %s98 = sphi 0, %s96
    %s99 = sphi 0, %s98
    %s113 = sphi 0, %s99
    %s117 = sphi 0, %s117
    %s119 = sphi 0, %s117
    %s120 = sphi 0, %s119
    %s134 = sphi 0, %s120
    %s140 = sphi 0, %s142
    %s143 = sphi 0, %s140
    %s144 = sphi 0, %s143
    %s160 = sphi 0, %s144
    %s166 = sphi 0, %s168
    %s169 = sphi 0, %s166
    %s170 = sphi 0, %s169
    %s186 = sphi 0, %s170
    %s192 = sphi 0, %s194
    %s195 = sphi 0, %s192
    %s196 = sphi 0, %s195
    %s212 = sphi 0, %s196
    %s218 = sphi 0, %s220
    %s221 = sphi 0, %s218
    %s222 = sphi 0, %s221
    %s238 = sphi 0, %s222
  $region4: #{encoder_forward.9} parent=0 // loop_header_branch
    %18 = sbr.rel (%p16) target = $region8
  $region5: #{encoder_forward.9} parent=0 // loop_body
    %s20 = ssub.s32 %s15, 1
    %s21 = ssub.s32 %s15, 2
    %s22 = sadd.s32 %s15, 1
    %s23 = ssub.s32 %s15, %s22
    %p24 = scmp.eq.s32.totalorder %s23, 0
    %s26 = sadd.s32 %s25, 1
    %s27 = scalar_select %p24, %s25, %s26
    %p30 = pneg %p24
    %p31 = scmp.eq.s32.totalorder %s15, 1
    %p32 = por %p30, %p31
    %p33 = scmp.ne.s32.totalorder %s25, %s28
    %p34 = scmp.eq.s32.totalorder %s15, 0
    %p35 = por %p33, %p34
    %p36 = scmp.ne.s32.totalorder %s25, %s28
    %p37 = scmp.eq.s32.totalorder %s20, 1
    %p38 = por %p36, %p37
    %p39 = scmp.ne.s32.totalorder %s28, %s29
    %p40 = scmp.eq.s32.totalorder %s20, 0
    %p41 = por %p39, %p40
    %p42 = scmp.ne.s32.totalorder %s28, %s29
    %p43 = scmp.eq.s32.totalorder %s21, 1
    %p44 = por %p42, %p43
    %p46 = scmp.ne.s32.totalorder %s29, %s45
    %p47 = scmp.eq.s32.totalorder %s21, 0
    %p48 = por %p46, %p47
    %s49 = ssub.s32 %s15, %s22
    %p50 = scmp.eq.s32.totalorder %s49, 0
    %s52 = sadd.s32 %s51, 1
    %s53 = scalar_select %p50, %s51, %s52
    %p56 = pneg %p50
    %p57 = scmp.eq.s32.totalorder %s15, 1
    %p58 = por %p56, %p57
    %p59 = scmp.ne.s32.totalorder %s51, %s54
    %p60 = scmp.eq.s32.totalorder %s15, 0
    %p61 = por %p59, %p60
    %p62 = scmp.ne.s32.totalorder %s51, %s54
    %p63 = scmp.eq.s32.totalorder %s20, 1
    %p64 = por %p62, %p63
    %p65 = scmp.ne.s32.totalorder %s54, %s55
    %p66 = scmp.eq.s32.totalorder %s20, 0
    %p67 = por %p65, %p66
    %p68 = scmp.ne.s32.totalorder %s54, %s55
    %p69 = scmp.eq.s32.totalorder %s21, 1
    %p70 = por %p68, %p69
    %p72 = scmp.ne.s32.totalorder %s55, %s71
    %p73 = scmp.eq.s32.totalorder %s21, 0
    %p74 = por %p72, %p73
    %s76 = sadd.s32 %s75, 1
    %p79 = scmp.eq.s32.totalorder %s15, 1
    %p80 = scmp.ne.s32.totalorder %s75, %s77
    %p81 = scmp.eq.s32.totalorder %s15, 0
    %p82 = por %p80, %p81
    %p83 = scmp.ne.s32.totalorder %s75, %s77
    %p84 = scmp.eq.s32.totalorder %s20, 1
    %p85 = por %p83, %p84
    %p86 = scmp.ne.s32.totalorder %s77, %s78
    %p87 = scmp.eq.s32.totalorder %s20, 0
    %p88 = por %p86, %p87
    %p89 = scmp.ne.s32.totalorder %s77, %s78
    %p90 = scmp.eq.s32.totalorder %s21, 1
    %p91 = por %p89, %p90
    %p93 = scmp.ne.s32.totalorder %s78, %s92
    %p94 = scmp.eq.s32.totalorder %s21, 0
    %p95 = por %p93, %p94
    %s97 = sadd.s32 %s96, 1
    %p100 = scmp.eq.s32.totalorder %s15, 1
    %p101 = scmp.ne.s32.totalorder %s96, %s98
    %p102 = scmp.eq.s32.totalorder %s15, 0
    %p103 = por %p101, %p102
    %p104 = scmp.ne.s32.totalorder %s96, %s98
    %p105 = scmp.eq.s32.totalorder %s20, 1
    %p106 = por %p104, %p105
    %p107 = scmp.ne.s32.totalorder %s98, %s99
    %p108 = scmp.eq.s32.totalorder %s20, 0
    %p109 = por %p107, %p108
    %p110 = scmp.ne.s32.totalorder %s98, %s99
    %p111 = scmp.eq.s32.totalorder %s21, 1
    %p112 = por %p110, %p111
    %p114 = scmp.ne.s32.totalorder %s99, %s113
    %p115 = scmp.eq.s32.totalorder %s21, 0
    %p116 = por %p114, %p115
    %s118 = sadd.s32 %s117, 1
    %p121 = scmp.eq.s32.totalorder %s15, 1
    %p122 = scmp.ne.s32.totalorder %s117, %s119
    %p123 = scmp.eq.s32.totalorder %s15, 0
    %p124 = por %p122, %p123
    %p125 = scmp.ne.s32.totalorder %s117, %s119
    %p126 = scmp.eq.s32.totalorder %s20, 1
    %p127 = por %p125, %p126
    %p128 = scmp.ne.s32.totalorder %s119, %s120
    %p129 = scmp.eq.s32.totalorder %s20, 0
    %p130 = por %p128, %p129
    %p131 = scmp.ne.s32.totalorder %s119, %s120
    %p132 = scmp.eq.s32.totalorder %s21, 1
    %p133 = por %p131, %p132
    %p135 = scmp.ne.s32.totalorder %s120, %s134
    %p136 = scmp.eq.s32.totalorder %s21, 0
    %p137 = por %p135, %p136
    %s138 = ssub.s32 %s15, %s22
    %p139 = scmp.eq.s32.totalorder %s138, 0
    %s141 = sadd.s32 %s140, 1
    %s142 = scalar_select %p139, %s140, %s141
    %p145 = pneg %p139
    %p146 = scmp.eq.s32.totalorder %s15, 1
    %p147 = por %p145, %p146
    %p148 = scmp.ne.s32.totalorder %s140, %s143
    %p149 = scmp.eq.s32.totalorder %s15, 0
    %p150 = por %p148, %p149
    %p151 = scmp.ne.s32.totalorder %s140, %s143
    %p152 = scmp.eq.s32.totalorder %s20, 1
    %p153 = por %p151, %p152
    %p154 = scmp.ne.s32.totalorder %s143, %s144
    %p155 = scmp.eq.s32.totalorder %s20, 0
    %p156 = por %p154, %p155
    %p157 = scmp.ne.s32.totalorder %s143, %s144
    %p158 = scmp.eq.s32.totalorder %s21, 1
    %p159 = por %p157, %p158
    %p161 = scmp.ne.s32.totalorder %s144, %s160
    %p162 = scmp.eq.s32.totalorder %s21, 0
    %p163 = por %p161, %p162
    %s164 = ssub.s32 %s15, %s22
    %p165 = scmp.eq.s32.totalorder %s164, 0
    %s167 = sadd.s32 %s166, 1
    %s168 = scalar_select %p165, %s166, %s167
    %p171 = pneg %p165
    %p172 = scmp.eq.s32.totalorder %s15, 1
    %p173 = por %p171, %p172
    %p174 = scmp.ne.s32.totalorder %s166, %s169
    %p175 = scmp.eq.s32.totalorder %s15, 0
    %p176 = por %p174, %p175
    %p177 = scmp.ne.s32.totalorder %s166, %s169
    %p178 = scmp.eq.s32.totalorder %s20, 1
    %p179 = por %p177, %p178
    %p180 = scmp.ne.s32.totalorder %s169, %s170
    %p181 = scmp.eq.s32.totalorder %s20, 0
    %p182 = por %p180, %p181
    %p183 = scmp.ne.s32.totalorder %s169, %s170
    %p184 = scmp.eq.s32.totalorder %s21, 1
    %p185 = por %p183, %p184
    %p187 = scmp.ne.s32.totalorder %s170, %s186
    %p188 = scmp.eq.s32.totalorder %s21, 0
    %p189 = por %p187, %p188
    %s190 = ssub.s32 %s15, %s22
    %p191 = scmp.eq.s32.totalorder %s190, 0
    %s193 = sadd.s32 %s192, 1
    %s194 = scalar_select %p191, %s192, %s193
    %p197 = pneg %p191
    %p198 = scmp.eq.s32.totalorder %s15, 1
    %p199 = por %p197, %p198
    %p200 = scmp.ne.s32.totalorder %s192, %s195
    %p201 = scmp.eq.s32.totalorder %s15, 0
    %p202 = por %p200, %p201
    %p203 = scmp.ne.s32.totalorder %s192, %s195
    %p204 = scmp.eq.s32.totalorder %s20, 1
    %p205 = por %p203, %p204
    %p206 = scmp.ne.s32.totalorder %s195, %s196
    %p207 = scmp.eq.s32.totalorder %s20, 0
    %p208 = por %p206, %p207
    %p209 = scmp.ne.s32.totalorder %s195, %s196
    %p210 = scmp.eq.s32.totalorder %s21, 1
    %p211 = por %p209, %p210
    %p213 = scmp.ne.s32.totalorder %s196, %s212
    %p214 = scmp.eq.s32.totalorder %s21, 0
    %p215 = por %p213, %p214
    %s216 = ssub.s32 %s15, %s22
    %p217 = scmp.eq.s32.totalorder %s216, 0
    %s219 = sadd.s32 %s218, 1
    %s220 = scalar_select %p217, %s218, %s219
    %p223 = pneg %p217
    %p224 = scmp.eq.s32.totalorder %s15, 1
    %p225 = por %p223, %p224
    %p226 = scmp.ne.s32.totalorder %s218, %s221
    %p227 = scmp.eq.s32.totalorder %s15, 0
    %p228 = por %p226, %p227
    %p229 = scmp.ne.s32.totalorder %s218, %s221
    %p230 = scmp.eq.s32.totalorder %s20, 1
    %p231 = por %p229, %p230
    %p232 = scmp.ne.s32.totalorder %s221, %s222
    %p233 = scmp.eq.s32.totalorder %s20, 0
    %p234 = por %p232, %p233
    %p235 = scmp.ne.s32.totalorder %s221, %s222
    %p236 = scmp.eq.s32.totalorder %s21, 1
    %p237 = por %p235, %p236
    %p239 = scmp.ne.s32.totalorder %s222, %s238
    %p240 = scmp.eq.s32.totalorder %s21, 0
    %p241 = por %p239, %p240
    %p242 = scmp.le.s32.totalorder 1, %s15
    %p243 = scmp.lt.s32.totalorder %s15, 3
    %p244 = pnand %p242, %p243
    %p245 = pneg %p244
    // Predicated region
    $region9: #{encoder_forward.9} parent=5 // pred_check
      _
    $region10: #{encoder_forward.9} parent=5 // pred_check_branch
      %247 = sbr.rel (%p244) target = $region12
    $region11: #{encoder_forward.9} parent=5 // pred_region
      %s248 = ssub.s32 %s15, 1
      // Predicated region
      $region13: #{encoder_forward.9} parent=11 // pred_check
        %p249 = pneg %p88
      $region14: #{encoder_forward.9} parent=11 // pred_check_branch
        %251 = sbr.rel (%p249) target = $region16
      $region15: #{encoder_forward.9} parent=11 // pred_region
        _
      $region16: #{encoder_forward.9} parent=11 // pred_fallthru
        _
      // Predicated region
      $region17: #{encoder_forward.9} parent=11 // pred_check
        %p252 = pneg %p109
      $region18: #{encoder_forward.9} parent=11 // pred_check_branch
        %254 = sbr.rel (%p252) target = $region20
      $region19: #{encoder_forward.9} parent=11 // pred_region
        _
      $region20: #{encoder_forward.9} parent=11 // pred_fallthru
        _
      // Predicated region
      $region21: #{encoder_forward.9} parent=11 // pred_check
        %p255 = pneg %p130
      $region22: #{encoder_forward.9} parent=11 // pred_check_branch
        %257 = sbr.rel (%p255) target = $region24
      $region23: #{encoder_forward.9} parent=11 // pred_region
        _
      $region24: #{encoder_forward.9} parent=11 // pred_fallthru
        _
    $region12: #{encoder_forward.9} parent=5 // pred_fallthru
      _
    %p258 = scmp.lt.s32.totalorder %s15, 2
    // Predicated region
    $region25: #{encoder_forward.9} parent=5 // pred_check
      %p259 = pneg %p258
    $region26: #{encoder_forward.9} parent=5 // pred_check_branch
      %261 = sbr.rel (%p259) target = $region28
    $region27: #{encoder_forward.9} parent=5 // pred_region
      // Predicated region
      $region29: #{encoder_forward.9} parent=27 // pred_check
        %p262 = pneg %p35
      $region30: #{encoder_forward.9} parent=27 // pred_check_branch
        %264 = sbr.rel (%p262) target = $region32
      $region31: #{encoder_forward.9} parent=27 // pred_region
        %p265 = scmp.lt.s32.totalorder %s15, 1
        %s266 = scalar_select %p265, %s15, 1
        %s267 = smul.addr %s266, 8
        %s268 = smul.addr %s267, 8
        %s269 = scalar_lea.vmem %s0, %s268
      $region32: #{encoder_forward.9} parent=27 // pred_fallthru
        _
      // Predicated region
      $region33: #{encoder_forward.9} parent=27 // pred_check
        %p270 = pneg %p61
      $region34: #{encoder_forward.9} parent=27 // pred_check_branch
        %272 = sbr.rel (%p270) target = $region36
      $region35: #{encoder_forward.9} parent=27 // pred_region
        %p273 = scmp.lt.s32.totalorder %s15, 1
        %s274 = scalar_select %p273, %s15, 1
        %s275 = smul.addr %s274, 8
        %s276 = smul.addr %s275, 4
        %s277 = scalar_lea.vmem %s1, %s276
      $region36: #{encoder_forward.9} parent=27 // pred_fallthru
        _
    $region28: #{encoder_forward.9} parent=5 // pred_fallthru
      _
    %p278 = scmp.le.s32.totalorder 1, %s15
    %p279 = scmp.lt.s32.totalorder %s15, 3
    %p280 = pnand %p278, %p279
    %p281 = pneg %p280
    // Predicated region
    $region37: #{encoder_forward.9} parent=5 // pred_check
      _
    $region38: #{encoder_forward.9} parent=5 // pred_check_branch
      %283 = sbr.rel (%p280) target = $region40
    $region39: #{encoder_forward.9} parent=5 // pred_region
      %s284 = ssub.s32 %s15, 1
      %p285 = scmp.lt.s32.totalorder %s20, 1
      %s286 = scalar_select %p285, %s20, 1
      %s287 = smul.addr %s286, 8
      %s288 = smul.addr %s287, 8
      %s289 = scalar_lea.vmem %s0, %s288
      %p290 = pneg %p41
      %p291 = pneg %p38
      %p292 = scmp.lt.s32.totalorder %s20, 1
      %s293 = scalar_select %p292, %s20, 1
      %s294 = smul.addr %s293, 8
      %s295 = smul.addr %s294, 4
      %s296 = scalar_lea.vmem %s1, %s295
      %p297 = pneg %p67
      %p298 = pneg %p64
      %p299 = pneg %p88
      %p300 = pneg %p85
      %p301 = pneg %p109
      %p302 = pneg %p106
      %p303 = pneg %p130
      %p304 = pneg %p127
      %p305 = pneg %p156
      %p306 = pneg %p153
      %p307 = scmp.lt.s32.totalorder %s20, 1
      %s308 = scalar_select %p307, %s20, 1
      %s309 = smul.addr %s308, 8
      %s310 = smul.addr %s309, 8
      %s311 = scalar_lea.vmem %s5, %s310
      %p312 = pneg %p182
      %p313 = pneg %p179
      %s314 = smul.u32 8, %s20
      %p315 = scmp.lt.s32.totalorder %s314, 15
      %s316 = scalar_select %p315, %s314, 15
      %s317 = smul.addr %s316, 4
      %s318 = scalar_lea.vmem %s6, %s317
      %p319 = pneg %p208
      %p320 = pneg %p205
      %p321 = scmp.lt.s32.totalorder %s20, 1
      %s322 = scalar_select %p321, %s20, 1
      %s323 = scalar_lea.vmem %s7, %s322
      %p324 = pneg %p234
      %p325 = pneg %p231
      %p326 = scmp.lt.s32.totalorder %s20, 1
      %s327 = scalar_select %p326, %s20, 1
      %s328 = scalar_lea.vmem %s8, %s327
      %p329 = scmp.lt.s32.totalorder %s20, 1
      %s330 = scalar_select %p329, %s20, 1
      %s331 = smul.addr %s330, 8
      %s332 = smul.addr %s331, 8
      %s333 = scalar_lea.vmem %s0, %s332
      %p334 = scmp.lt.s32.totalorder %s20, 1
      %s335 = scalar_select %p334, %s20, 1
      %s336 = smul.addr %s335, 8
      %s337 = smul.addr %s336, 4
      %s338 = scalar_lea.vmem %s1, %s337
      %p339 = scmp.lt.s32.totalorder %s20, 1
      %s340 = scalar_select %p339, %s20, 1
      %s341 = smul.addr %s340, 8
      %s342 = smul.addr %s341, 8
      %s343 = scalar_lea.vmem %s5, %s342
      %s344 = smul.u32 8, %s20
      %p345 = scmp.lt.s32.totalorder %s344, 15
      %s346 = scalar_select %p345, %s344, 15
      %s347 = smul.addr %s346, 4
      %s348 = scalar_lea.vmem %s6, %s347
      %s349 = smul.u32 8, %s20
      %p350 = scmp.lt.s32.totalorder %s20, 1
      %s351 = scalar_select %p350, %s20, 1
      %s352 = scalar_lea.vmem %s7, %s351
      %p353 = scmp.lt.s32.totalorder %s20, 1
      %s354 = scalar_select %p353, %s20, 1
      %s355 = scalar_lea.vmem %s8, %s354
      %v357 = vld [vmem:[%s2] sm:$0x1]
      %v358 = vld [vmem:[%s2 + $0x1] sm:$0x1]
      %v359 = vld [vmem:[%s333] sm:$0xff]
      %v360 = vld [vmem:[%s333 + $0x8] sm:$0xff]
      %v361 = vld [vmem:[%s333 + $0x10] sm:$0xff]
      %v362 = vld [vmem:[%s333 + $0x18] sm:$0xff]
      %v363 = vld [vmem:[%s333 + $0x20] sm:$0xff]
      %v364 = vld [vmem:[%s333 + $0x28] sm:$0xff]
      %v365 = vld [vmem:[%s333 + $0x30] sm:$0xff]
      %v366 = vld [vmem:[%s333 + $0x38] sm:$0xff]
      %v367 = vld [vmem:[%s338] sm:$0xf]
      %v368 = vld [vmem:[%s338 + $0x4] sm:$0xf]
      %v369 = vld [vmem:[%s338 + $0x8] sm:$0xf]
      %v370 = vld [vmem:[%s338 + $0xc] sm:$0xf]
      %v371 = vld [vmem:[%s338 + $0x10] sm:$0xf]
      %v372 = vld [vmem:[%s338 + $0x14] sm:$0xf]
      %v373 = vld [vmem:[%s338 + $0x18] sm:$0xf]
      %v374 = vld [vmem:[%s338 + $0x1c] sm:$0xf]
      %v375 = vunpack.c.l.bf16 %v367
      %v376 = vunpack.c.l.bf16 %v368
      %v377 = vunpack.c.l.bf16 %v369
      %v378 = vunpack.c.l.bf16 %v370
      %v379 = vunpack.c.l.bf16 %v371
      %v380 = vunpack.c.l.bf16 %v372
      %v381 = vunpack.c.l.bf16 %v373
      %v382 = vunpack.c.l.bf16 %v374
      %v383 = vlaneseq
      %v384 = vshrl.u32 %v383, 7
      %v385 = vsub.s32 0, %v384
      %v386 = vrot.slane %v357, %v385
      %v387 = vmul.f32 %v375, %v386
      %v388 = vmul.f32 %v376, %v386
      %v389 = vmul.f32 %v377, %v386
      %v390 = vmul.f32 %v378, %v386
      %v391 = vmul.f32 %v379, %v386
      %v392 = vmul.f32 %v380, %v386
      %v393 = vmul.f32 %v381, %v386
      %v394 = vmul.f32 %v382, %v386
      %v395 = vadd.f32 %v359, %v387
      %v396 = vadd.f32 %v360, %v388
      %v397 = vadd.f32 %v361, %v389
      %v398 = vadd.f32 %v362, %v390
      %v399 = vadd.f32 %v363, %v391
      %v400 = vadd.f32 %v364, %v392
      %v401 = vadd.f32 %v365, %v393
      %v402 = vadd.f32 %v366, %v394
      %v403 = vlaneseq
      %v404 = vshrl.u32 %v403, 7
      %v405 = vsub.s32 0, %v404
      %v406 = vrot.slane %v358, %v405
      %v407 = vadd.f32 %v395, %v406
      %v408 = vadd.f32 %v396, %v406
      %v409 = vadd.f32 %v397, %v406
      %v410 = vadd.f32 %v398, %v406
      %v411 = vadd.f32 %v399, %v406
      %v412 = vadd.f32 %v400, %v406
      %v413 = vadd.f32 %v401, %v406
      %v414 = vadd.f32 %v402, %v406
      %415 = vst [vmem:[%s343] sm:$0xff] %v407
      %416 = vst [vmem:[%s343 + $0x8] sm:$0xff] %v408
      %417 = vst [vmem:[%s343 + $0x10] sm:$0xff] %v409
      %418 = vst [vmem:[%s343 + $0x18] sm:$0xff] %v410
      %419 = vst [vmem:[%s343 + $0x20] sm:$0xff] %v411
      %420 = vst [vmem:[%s343 + $0x28] sm:$0xff] %v412
      %421 = vst [vmem:[%s343 + $0x30] sm:$0xff] %v413
      %422 = vst [vmem:[%s343 + $0x38] sm:$0xff] %v414
      %v423 = vmax.f32 %v407, 0.0
      %v424 = vmax.f32 %v408, 0.0
      %v425 = vmax.f32 %v409, 0.0
      %v426 = vmax.f32 %v410, 0.0
      %v427 = vmax.f32 %v411, 0.0
      %v428 = vmax.f32 %v412, 0.0
      %v429 = vmax.f32 %v413, 0.0
      %v430 = vmax.f32 %v414, 0.0
      %431 = vst [vmem:[#allocation2] sm:$0xff] 0.0
      %432 = vst [vmem:[#allocation2 + $0x8] sm:$0xff] 0.0
      %433 = vst [vmem:[#allocation2 + $0x10] sm:$0xff] 0.0
      %434 = vst [vmem:[#allocation2 + $0x18] sm:$0xff] 0.0
      %435 = vst [vmem:[#allocation2 + $0x20] sm:$0xff] 0.0
      %436 = vst [vmem:[#allocation2 + $0x28] sm:$0xff] 0.0
      %437 = vst [vmem:[#allocation2 + $0x30] sm:$0xff] 0.0
      %438 = vst [vmem:[#allocation2 + $0x38] sm:$0xff] 0.0
      %439 = vst [vmem:[#allocation2 + $0x40] sm:$0xff] 0.0
      %440 = vst [vmem:[#allocation2 + $0x48] sm:$0xff] 0.0
      %441 = vst [vmem:[#allocation2 + $0x50] sm:$0xff] 0.0
      %442 = vst [vmem:[#allocation2 + $0x58] sm:$0xff] 0.0
      %443 = vst [vmem:[#allocation2 + $0x10] sm:$0xff] %v423
      %444 = vst [vmem:[#allocation2 + $0x18] sm:$0xff] %v424
      %445 = vst [vmem:[#allocation2 + $0x20] sm:$0xff] %v425
      %446 = vst [vmem:[#allocation2 + $0x28] sm:$0xff] %v426
      %447 = vst [vmem:[#allocation2 + $0x30] sm:$0xff] %v427
      %448 = vst [vmem:[#allocation2 + $0x38] sm:$0xff] %v428
      %449 = vst [vmem:[#allocation2 + $0x40] sm:$0xff] %v429
      %450 = vst [vmem:[#allocation2 + $0x48] sm:$0xff] %v430
      %v451 = vld [vmem:[#allocation2 + $0x7] sm:$0xff]
      %v452 = vld [vmem:[#allocation2 + $0xf] sm:$0xff]
      %v453 = vld [vmem:[#allocation2 + $0x17] sm:$0xff]
      %v454 = vld [vmem:[#allocation2 + $0x1f] sm:$0xff]
      %v455 = vld [vmem:[#allocation2 + $0x27] sm:$0xff]
      %v456 = vld [vmem:[#allocation2 + $0x2f] sm:$0xff]
      %v457 = vld [vmem:[#allocation2 + $0x37] sm:$0xff]
      %v458 = vld [vmem:[#allocation2 + $0x3f] sm:$0xff]
      %v459 = vld [vmem:[%s3] sm:$0xff]
      %v460 = vld [vmem:[%s3 + $0x8] sm:$0xff]
      %v461 = vld [vmem:[%s3 + $0x10] sm:$0xff]
      %v462 = vld [vmem:[%s3 + $0x18] sm:$0xff]
      %v463 = vld [vmem:[%s3 + $0x20] sm:$0xff]
      %v464 = vld [vmem:[%s3 + $0x28] sm:$0xff]
      %v465 = vld [vmem:[%s3 + $0x30] sm:$0xff]
      %v466 = vld [vmem:[%s3 + $0x38] sm:$0xff]
      %v467 = vmul.f32 %v451, %v459
      %v468 = vmul.f32 %v452, %v460
      %v469 = vmul.f32 %v453, %v461
      %v470 = vmul.f32 %v454, %v462
      %v471 = vmul.f32 %v455, %v463
      %v472 = vmul.f32 %v456, %v464
      %v473 = vmul.f32 %v457, %v465
      %v474 = vmul.f32 %v458, %v466
      %v475 = vpack.c.bf16 %v468, %v467
      %v476 = vpack.c.bf16 %v470, %v469
      %v477 = vpack.c.bf16 %v472, %v471
      %v478 = vpack.c.bf16 %v474, %v473
      %479 = vst [vmem:[#allocation3] sm:$0xff] %v475
      %480 = vst [vmem:[#allocation3 + $0x48] sm:$0xff] %v476
      %481 = vst [vmem:[#allocation3 + $0x90] sm:$0xff] %v477
      %482 = vst [vmem:[#allocation3 + $0xd8] sm:$0xff] %v478
      %v483 = vld [vmem:[#allocation2 + $0x8] sm:$0xff]
      %v484 = vld [vmem:[#allocation2 + $0x10] sm:$0xff]
      %v485 = vld [vmem:[#allocation2 + $0x18] sm:$0xff]
      %v486 = vld [vmem:[#allocation2 + $0x20] sm:$0xff]
      %v487 = vld [vmem:[#allocation2 + $0x28] sm:$0xff]
      %v488 = vld [vmem:[#allocation2 + $0x30] sm:$0xff]
      %v489 = vld [vmem:[#allocation2 + $0x38] sm:$0xff]
      %v490 = vld [vmem:[#allocation2 + $0x40] sm:$0xff]
      %v491 = vpack.c.bf16 %v484, %v483
      %v492 = vpack.c.bf16 %v486, %v485
      %v493 = vpack.c.bf16 %v488, %v487
      %v494 = vpack.c.bf16 %v490, %v489
      %495 = vst [vmem:[#allocation3 + $0x8] sm:$0xff] %v491
      %496 = vst [vmem:[#allocation3 + $0x50] sm:$0xff] %v492
      %497 = vst [vmem:[#allocation3 + $0x98] sm:$0xff] %v493
      %498 = vst [vmem:[#allocation3 + $0xe0] sm:$0xff] %v494
      %v499 = vld [vmem:[#allocation2 + $0x9] sm:$0xff]
      %v500 = vld [vmem:[#allocation2 + $0x11] sm:$0xff]
      %v501 = vld [vmem:[#allocation2 + $0x19] sm:$0xff]
      %v502 = vld [vmem:[#allocation2 + $0x21] sm:$0xff]
      %v503 = vld [vmem:[#allocation2 + $0x29] sm:$0xff]
      %v504 = vld [vmem:[#allocation2 + $0x31] sm:$0xff]
      %v505 = vld [vmem:[#allocation2 + $0x39] sm:$0xff]
      %v506 = vld [vmem:[#allocation2 + $0x41] sm:$0xff]
      %s507 = scalar_lea.vmem %s3, 64
      %v508 = vld [vmem:[%s507] sm:$0xff]
      %v509 = vld [vmem:[%s507 + $0x8] sm:$0xff]
      %v510 = vld [vmem:[%s507 + $0x10] sm:$0xff]
      %v511 = vld [vmem:[%s507 + $0x18] sm:$0xff]
      %v512 = vld [vmem:[%s507 + $0x20] sm:$0xff]
      %v513 = vld [vmem:[%s507 + $0x28] sm:$0xff]
      %v514 = vld [vmem:[%s507 + $0x30] sm:$0xff]
      %v515 = vld [vmem:[%s507 + $0x38] sm:$0xff]
      %v516 = vmul.f32 %v499, %v508
      %v517 = vmul.f32 %v500, %v509
      %v518 = vmul.f32 %v501, %v510
      %v519 = vmul.f32 %v502, %v511
      %v520 = vmul.f32 %v503, %v512
      %v521 = vmul.f32 %v504, %v513
      %v522 = vmul.f32 %v505, %v514
      %v523 = vmul.f32 %v506, %v515
      %v524 = vpack.c.bf16 %v517, %v516
      %v525 = vpack.c.bf16 %v519, %v518
      %v526 = vpack.c.bf16 %v521, %v520
      %v527 = vpack.c.bf16 %v523, %v522
      %528 = vst [vmem:[#allocation3 + $0x10] sm:$0xff] %v524
      %529 = vst [vmem:[#allocation3 + $0x58] sm:$0xff] %v525
      %530 = vst [vmem:[#allocation3 + $0xa0] sm:$0xff] %v526
      %531 = vst [vmem:[#allocation3 + $0xe8] sm:$0xff] %v527
      %v532 = vld [vmem:[#allocation2 + $0xf] sm:$0xff]
      %v533 = vld [vmem:[#allocation2 + $0x17] sm:$0xff]
      %v534 = vld [vmem:[#allocation2 + $0x1f] sm:$0xff]
      %v535 = vld [vmem:[#allocation2 + $0x27] sm:$0xff]
      %v536 = vld [vmem:[#allocation2 + $0x2f] sm:$0xff]
      %v537 = vld [vmem:[#allocation2 + $0x37] sm:$0xff]
      %v538 = vld [vmem:[#allocation2 + $0x3f] sm:$0xff]
      %v539 = vld [vmem:[#allocation2 + $0x47] sm:$0xff]
      %v540 = vld [vmem:[%s3] sm:$0xff]
      %v541 = vld [vmem:[%s3 + $0x8] sm:$0xff]
      %v542 = vld [vmem:[%s3 + $0x10] sm:$0xff]
      %v543 = vld [vmem:[%s3 + $0x18] sm:$0xff]
      %v544 = vld [vmem:[%s3 + $0x20] sm:$0xff]
      %v545 = vld [vmem:[%s3 + $0x28] sm:$0xff]
      %v546 = vld [vmem:[%s3 + $0x30] sm:$0xff]
      %v547 = vld [vmem:[%s3 + $0x38] sm:$0xff]
      %v548 = vmul.f32 %v532, %v540
      %v549 = vmul.f32 %v533, %v541
      %v550 = vmul.f32 %v534, %v542
      %v551 = vmul.f32 %v535, %v543
      %v552 = vmul.f32 %v536, %v544
      %v553 = vmul.f32 %v537, %v545
      %v554 = vmul.f32 %v538, %v546
      %v555 = vmul.f32 %v539, %v547
      %v556 = vpack.c.bf16 %v549, %v548
      %v557 = vpack.c.bf16 %v551, %v550
      %v558 = vpack.c.bf16 %v553, %v552
      %v559 = vpack.c.bf16 %v555, %v554
      %560 = vst [vmem:[#allocation3 + $0x18] sm:$0xff] %v556
      %561 = vst [vmem:[#allocation3 + $0x60] sm:$0xff] %v557
      %562 = vst [vmem:[#allocation3 + $0xa8] sm:$0xff] %v558
      %563 = vst [vmem:[#allocation3 + $0xf0] sm:$0xff] %v559
      %v564 = vld [vmem:[#allocation2 + $0x10] sm:$0xff]
      %v565 = vld [vmem:[#allocation2 + $0x18] sm:$0xff]
      %v566 = vld [vmem:[#allocation2 + $0x20] sm:$0xff]
      %v567 = vld [vmem:[#allocation2 + $0x28] sm:$0xff]
      %v568 = vld [vmem:[#allocation2 + $0x30] sm:$0xff]
      %v569 = vld [vmem:[#allocation2 + $0x38] sm:$0xff]
      %v570 = vld [vmem:[#allocation2 + $0x40] sm:$0xff]
      %v571 = vld [vmem:[#allocation2 + $0x48] sm:$0xff]
      %v572 = vpack.c.bf16 %v565, %v564
      %v573 = vpack.c.bf16 %v567, %v566
      %v574 = vpack.c.bf16 %v569, %v568
      %v575 = vpack.c.bf16 %v571, %v570
      %576 = vst [vmem:[#allocation3 + $0x20] sm:$0xff] %v572
      %577 = vst [vmem:[#allocation3 + $0x68] sm:$0xff] %v573
      %578 = vst [vmem:[#allocation3 + $0xb0] sm:$0xff] %v574
      %579 = vst [vmem:[#allocation3 + $0xf8] sm:$0xff] %v575
      %v580 = vld [vmem:[#allocation2 + $0x11] sm:$0xff]
      %v581 = vld [vmem:[#allocation2 + $0x19] sm:$0xff]
      %v582 = vld [vmem:[#allocation2 + $0x21] sm:$0xff]
      %v583 = vld [vmem:[#allocation2 + $0x29] sm:$0xff]
      %v584 = vld [vmem:[#allocation2 + $0x31] sm:$0xff]
      %v585 = vld [vmem:[#allocation2 + $0x39] sm:$0xff]
      %v586 = vld [vmem:[#allocation2 + $0x41] sm:$0xff]
      %v587 = vld [vmem:[#allocation2 + $0x49] sm:$0xff]
      %v588 = vld [vmem:[%s507] sm:$0xff]
      %v589 = vld [vmem:[%s507 + $0x8] sm:$0xff]
      %v590 = vld [vmem:[%s507 + $0x10] sm:$0xff]
      %v591 = vld [vmem:[%s507 + $0x18] sm:$0xff]
      %v592 = vld [vmem:[%s507 + $0x20] sm:$0xff]
      %v593 = vld [vmem:[%s507 + $0x28] sm:$0xff]
      %v594 = vld [vmem:[%s507 + $0x30] sm:$0xff]
      %v595 = vld [vmem:[%s507 + $0x38] sm:$0xff]
      %v596 = vmul.f32 %v580, %v588
      %v597 = vmul.f32 %v581, %v589
      %v598 = vmul.f32 %v582, %v590
      %v599 = vmul.f32 %v583, %v591
      %v600 = vmul.f32 %v584, %v592
      %v601 = vmul.f32 %v585, %v593
      %v602 = vmul.f32 %v586, %v594
      %v603 = vmul.f32 %v587, %v595
      %v604 = vpack.c.bf16 %v597, %v596
      %v605 = vpack.c.bf16 %v599, %v598
      %v606 = vpack.c.bf16 %v601, %v600
      %v607 = vpack.c.bf16 %v603, %v602
      %608 = vst [vmem:[#allocation3 + $0x28] sm:$0xff] %v604
      %609 = vst [vmem:[#allocation3 + $0x70] sm:$0xff] %v605
      %610 = vst [vmem:[#allocation3 + $0xb8] sm:$0xff] %v606
      %611 = vst [vmem:[#allocation3 + $0x100] sm:$0xff] %v607
      %v612 = vld [vmem:[#allocation2 + $0x17] sm:$0xff]
      %v613 = vld [vmem:[#allocation2 + $0x1f] sm:$0xff]
      %v614 = vld [vmem:[#allocation2 + $0x27] sm:$0xff]
      %v615 = vld [vmem:[#allocation2 + $0x2f] sm:$0xff]
      %v616 = vld [vmem:[#allocation2 + $0x37] sm:$0xff]
      %v617 = vld [vmem:[#allocation2 + $0x3f] sm:$0xff]
      %v618 = vld [vmem:[#allocation2 + $0x47] sm:$0xff]
      %v619 = vld [vmem:[#allocation2 + $0x4f] sm:$0xff]
      %v620 = vld [vmem:[%s3] sm:$0xff]
      %v621 = vld [vmem:[%s3 + $0x8] sm:$0xff]
      %v622 = vld [vmem:[%s3 + $0x10] sm:$0xff]
      %v623 = vld [vmem:[%s3 + $0x18] sm:$0xff]
      %v624 = vld [vmem:[%s3 + $0x20] sm:$0xff]
      %v625 = vld [vmem:[%s3 + $0x28] sm:$0xff]
      %v626 = vld [vmem:[%s3 + $0x30] sm:$0xff]
      %v627 = vld [vmem:[%s3 + $0x38] sm:$0xff]
      %v628 = vmul.f32 %v612, %v620
      %v629 = vmul.f32 %v613, %v621
      %v630 = vmul.f32 %v614, %v622
      %v631 = vmul.f32 %v615, %v623
      %v632 = vmul.f32 %v616, %v624
      %v633 = vmul.f32 %v617, %v625
      %v634 = vmul.f32 %v618, %v626
      %v635 = vmul.f32 %v619, %v627
      %v636 = vpack.c.bf16 %v629, %v628
      %v637 = vpack.c.bf16 %v631, %v630
      %v638 = vpack.c.bf16 %v633, %v632
      %v639 = vpack.c.bf16 %v635, %v634
      %640 = vst [vmem:[#allocation3 + $0x30] sm:$0xff] %v636
      %641 = vst [vmem:[#allocation3 + $0x78] sm:$0xff] %v637
      %642 = vst [vmem:[#allocation3 + $0xc0] sm:$0xff] %v638
      %643 = vst [vmem:[#allocation3 + $0x108] sm:$0xff] %v639
      %v644 = vld [vmem:[#allocation2 + $0x18] sm:$0xff]
      %v645 = vld [vmem:[#allocation2 + $0x20] sm:$0xff]
      %v646 = vld [vmem:[#allocation2 + $0x28] sm:$0xff]
      %v647 = vld [vmem:[#allocation2 + $0x30] sm:$0xff]
      %v648 = vld [vmem:[#allocation2 + $0x38] sm:$0xff]
      %v649 = vld [vmem:[#allocation2 + $0x40] sm:$0xff]
      %v650 = vld [vmem:[#allocation2 + $0x48] sm:$0xff]
      %v651 = vld [vmem:[#allocation2 + $0x50] sm:$0xff]
      %v652 = vpack.c.bf16 %v645, %v644
      %v653 = vpack.c.bf16 %v647, %v646
      %v654 = vpack.c.bf16 %v649, %v648
      %v655 = vpack.c.bf16 %v651, %v650
      %656 = vst [vmem:[#allocation3 + $0x38] sm:$0xff] %v652
      %657 = vst [vmem:[#allocation3 + $0x80] sm:$0xff] %v653
      %658 = vst [vmem:[#allocation3 + $0xc8] sm:$0xff] %v654
      %659 = vst [vmem:[#allocation3 + $0x110] sm:$0xff] %v655
      %v660 = vld [vmem:[#allocation2 + $0x19] sm:$0xff]
      %v661 = vld [vmem:[#allocation2 + $0x21] sm:$0xff]
      %v662 = vld [vmem:[#allocation2 + $0x29] sm:$0xff]
      %v663 = vld [vmem:[#allocation2 + $0x31] sm:$0xff]
      %v664 = vld [vmem:[#allocation2 + $0x39] sm:$0xff]
      %v665 = vld [vmem:[#allocation2 + $0x41] sm:$0xff]
      %v666 = vld [vmem:[#allocation2 + $0x49] sm:$0xff]
      %v667 = vld [vmem:[#allocation2 + $0x51] sm:$0xff]
      %v668 = vld [vmem:[%s507] sm:$0xff]
      %v669 = vld [vmem:[%s507 + $0x8] sm:$0xff]
      %v670 = vld [vmem:[%s507 + $0x10] sm:$0xff]
      %v671 = vld [vmem:[%s507 + $0x18] sm:$0xff]
      %v672 = vld [vmem:[%s507 + $0x20] sm:$0xff]
      %v673 = vld [vmem:[%s507 + $0x28] sm:$0xff]
      %v674 = vld [vmem:[%s507 + $0x30] sm:$0xff]
      %v675 = vld [vmem:[%s507 + $0x38] sm:$0xff]
      %v676 = vmul.f32 %v660, %v668
      %v677 = vmul.f32 %v661, %v669
      %v678 = vmul.f32 %v662, %v670
      %v679 = vmul.f32 %v663, %v671
      %v680 = vmul.f32 %v664, %v672
      %v681 = vmul.f32 %v665, %v673
      %v682 = vmul.f32 %v666, %v674
      %v683 = vmul.f32 %v667, %v675
      %v684 = vpack.c.bf16 %v677, %v676
      %v685 = vpack.c.bf16 %v679, %v678
      %v686 = vpack.c.bf16 %v681, %v680
      %v687 = vpack.c.bf16 %v683, %v682
      %688 = vst [vmem:[#allocation3 + $0x40] sm:$0xff] %v684
      %689 = vst [vmem:[#allocation3 + $0x88] sm:$0xff] %v685
      %690 = vst [vmem:[#allocation3 + $0xd0] sm:$0xff] %v686
      %691 = vst [vmem:[#allocation3 + $0x118] sm:$0xff] %v687
      %v692 = vld [vmem:[#allocation3] sm:$0xff]
      %v693 = vld [vmem:[#allocation3 + $0x8] sm:$0xff]
      %v694 = vld [vmem:[#allocation3 + $0x10] sm:$0xff]
      %v695 = vld [vmem:[#allocation3 + $0x18] sm:$0xff]
      %v696 = vld [vmem:[#allocation3 + $0x20] sm:$0xff]
      %v697 = vld [vmem:[#allocation3 + $0x28] sm:$0xff]
      %v698 = vld [vmem:[#allocation3 + $0x30] sm:$0xff]
      %v699 = vld [vmem:[#allocation3 + $0x38] sm:$0xff]
      %v700 = vld [vmem:[#allocation3 + $0x40] sm:$0xff]
      %v701 = vld [vmem:[#allocation3 + $0x48] sm:$0xff]
      %v702 = vld [vmem:[#allocation3 + $0x50] sm:$0xff]
      %v703 = vld [vmem:[#allocation3 + $0x58] sm:$0xff]
      %v704 = vld [vmem:[#allocation3 + $0x60] sm:$0xff]
      %v705 = vld [vmem:[#allocation3 + $0x68] sm:$0xff]
      %v706 = vld [vmem:[#allocation3 + $0x70] sm:$0xff]
      %v707 = vld [vmem:[#allocation3 + $0x78] sm:$0xff]
      %v708 = vld [vmem:[#allocation3 + $0x80] sm:$0xff]
      %v709 = vld [vmem:[#allocation3 + $0x88] sm:$0xff]
      %v710 = vld [vmem:[#allocation3 + $0x90] sm:$0xff]
      %v711 = vld [vmem:[#allocation3 + $0x98] sm:$0xff]
      %v712 = vld [vmem:[#allocation3 + $0xa0] sm:$0xff]
      %v713 = vld [vmem:[#allocation3 + $0xa8] sm:$0xff]
      %v714 = vld [vmem:[#allocation3 + $0xb0] sm:$0xff]
      %v715 = vld [vmem:[#allocation3 + $0xb8] sm:$0xff]
      %v716 = vld [vmem:[#allocation3 + $0xc0] sm:$0xff]
      %v717 = vld [vmem:[#allocation3 + $0xc8] sm:$0xff]
      %v718 = vld [vmem:[#allocation3 + $0xd0] sm:$0xff]
      %v719 = vld [vmem:[#allocation3 + $0xd8] sm:$0xff]
      %v720 = vld [vmem:[#allocation3 + $0xe0] sm:$0xff]
      %v721 = vld [vmem:[#allocation3 + $0xe8] sm:$0xff]
      %v722 = vld [vmem:[#allocation3 + $0xf0] sm:$0xff]
      %v723 = vld [vmem:[#allocation3 + $0xf8] sm:$0xff]
      %v724 = vld [vmem:[#allocation3 + $0x100] sm:$0xff]
      %v725 = vld [vmem:[#allocation3 + $0x108] sm:$0xff]
      %v726 = vld [vmem:[#allocation3 + $0x110] sm:$0xff]
      %v727 = vld [vmem:[#allocation3 + $0x118] sm:$0xff]
      %v728 = vld [vmem:[%s4] sm:$0xf]
      %v729 = vld [vmem:[%s4 + $0x4] sm:$0xf]
      %v730 = vld [vmem:[%s4 + $0x8] sm:$0xf]
      %v731 = vld [vmem:[%s4 + $0xc] sm:$0xf]
      %v732 = vld [vmem:[%s4 + $0x10] sm:$0xf]
      %v733 = vld [vmem:[%s4 + $0x14] sm:$0xf]
      %v734 = vld [vmem:[%s4 + $0x18] sm:$0xf]
      %v735 = vld [vmem:[%s4 + $0x1c] sm:$0xf]
      %v736 = vld [vmem:[%s4 + $0x20] sm:$0xf]
      %v737 = vld [vmem:[%s4 + $0x24] sm:$0xf]
      %v738 = vld [vmem:[%s4 + $0x28] sm:$0xf]
      %v739 = vld [vmem:[%s4 + $0x2c] sm:$0xf]
      %v740 = vld [vmem:[%s4 + $0x30] sm:$0xf]
      %v741 = vld [vmem:[%s4 + $0x34] sm:$0xf]
      %v742 = vld [vmem:[%s4 + $0x38] sm:$0xf]
      %v743 = vld [vmem:[%s4 + $0x3c] sm:$0xf]
      %v744 = vld [vmem:[%s4 + $0x40] sm:$0xf]
      %v745 = vld [vmem:[%s4 + $0x44] sm:$0xf]
      %v746 = vld [vmem:[%s4 + $0x48] sm:$0xf]
      %v747 = vld [vmem:[%s4 + $0x4c] sm:$0xf]
      %v748 = vld [vmem:[%s4 + $0x50] sm:$0xf]
      %v749 = vld [vmem:[%s4 + $0x54] sm:$0xf]
      %v750 = vld [vmem:[%s4 + $0x58] sm:$0xf]
      %v751 = vld [vmem:[%s4 + $0x5c] sm:$0xf]
      %v752 = vld [vmem:[%s4 + $0x60] sm:$0xf]
      %v753 = vld [vmem:[%s4 + $0x64] sm:$0xf]
      %v754 = vld [vmem:[%s4 + $0x68] sm:$0xf]
      %v755 = vld [vmem:[%s4 + $0x6c] sm:$0xf]
      %v756 = vld [vmem:[%s4 + $0x70] sm:$0xf]
      %v757 = vld [vmem:[%s4 + $0x74] sm:$0xf]
      %v758 = vld [vmem:[%s4 + $0x78] sm:$0xf]
      %v759 = vld [vmem:[%s4 + $0x7c] sm:$0xf]
      %v760 = vld [vmem:[%s4 + $0x80] sm:$0xf]
      %v761 = vld [vmem:[%s4 + $0x84] sm:$0xf]
      %v762 = vld [vmem:[%s4 + $0x88] sm:$0xf]
      %v763 = vld [vmem:[%s4 + $0x8c] sm:$0xf]
      %v764 = vld [vmem:[%s4 + $0x90] sm:$0xf]
      %v765 = vld [vmem:[%s4 + $0x94] sm:$0xf]
      %v766 = vld [vmem:[%s4 + $0x98] sm:$0xf]
      %v767 = vld [vmem:[%s4 + $0x9c] sm:$0xf]
      %v768 = vld [vmem:[%s4 + $0xa0] sm:$0xf]
      %v769 = vld [vmem:[%s4 + $0xa4] sm:$0xf]
      %v770 = vld [vmem:[%s4 + $0xa8] sm:$0xf]
      %v771 = vld [vmem:[%s4 + $0xac] sm:$0xf]
      %v772 = vld [vmem:[%s4 + $0xb0] sm:$0xf]
      %v773 = vld [vmem:[%s4 + $0xb4] sm:$0xf]
      %v774 = vld [vmem:[%s4 + $0xb8] sm:$0xf]
      %v775 = vld [vmem:[%s4 + $0xbc] sm:$0xf]
      %v776 = vld [vmem:[%s4 + $0xc0] sm:$0xf]
      %v777 = vld [vmem:[%s4 + $0xc4] sm:$0xf]
      %v778 = vld [vmem:[%s4 + $0xc8] sm:$0xf]
      %v779 = vld [vmem:[%s4 + $0xcc] sm:$0xf]
      %v780 = vld [vmem:[%s4 + $0xd0] sm:$0xf]
      %v781 = vld [vmem:[%s4 + $0xd4] sm:$0xf]
      %v782 = vld [vmem:[%s4 + $0xd8] sm:$0xf]
      %v783 = vld [vmem:[%s4 + $0xdc] sm:$0xf]
      %v784 = vld [vmem:[%s4 + $0xe0] sm:$0xf]
      %v785 = vld [vmem:[%s4 + $0xe4] sm:$0xf]
      %v786 = vld [vmem:[%s4 + $0xe8] sm:$0xf]
      %v787 = vld [vmem:[%s4 + $0xec] sm:$0xf]
      %v788 = vld [vmem:[%s4 + $0xf0] sm:$0xf]
      %v789 = vld [vmem:[%s4 + $0xf4] sm:$0xf]
      %v790 = vld [vmem:[%s4 + $0xf8] sm:$0xf]
      %v791 = vld [vmem:[%s4 + $0xfc] sm:$0xf]
      %v792 = vld [vmem:[%s4 + $0x100] sm:$0xf]
      %v793 = vld [vmem:[%s4 + $0x104] sm:$0xf]
      %v794 = vld [vmem:[%s4 + $0x108] sm:$0xf]
      %v795 = vld [vmem:[%s4 + $0x10c] sm:$0xf]
      %v796 = vld [vmem:[%s4 + $0x110] sm:$0xf]
      %v797 = vld [vmem:[%s4 + $0x114] sm:$0xf]
      %v798 = vld [vmem:[%s4 + $0x118] sm:$0xf]
      %v799 = vld [vmem:[%s4 + $0x11c] sm:$0xf]
      %v800 = vld [vmem:[%s4 + $0x120] sm:$0xf]
      %v801 = vld [vmem:[%s4 + $0x124] sm:$0xf]
      %v802 = vld [vmem:[%s4 + $0x128] sm:$0xf]
      %v803 = vld [vmem:[%s4 + $0x12c] sm:$0xf]
      %v804 = vld [vmem:[%s4 + $0x130] sm:$0xf]
      %v805 = vld [vmem:[%s4 + $0x134] sm:$0xf]
      %v806 = vld [vmem:[%s4 + $0x138] sm:$0xf]
      %v807 = vld [vmem:[%s4 + $0x13c] sm:$0xf]
      %v808 = vld [vmem:[%s4 + $0x140] sm:$0xf]
      %v809 = vld [vmem:[%s4 + $0x144] sm:$0xf]
      %v810 = vld [vmem:[%s4 + $0x148] sm:$0xf]
      %v811 = vld [vmem:[%s4 + $0x14c] sm:$0xf]
      %v812 = vld [vmem:[%s4 + $0x150] sm:$0xf]
      %v813 = vld [vmem:[%s4 + $0x154] sm:$0xf]
      %v814 = vld [vmem:[%s4 + $0x158] sm:$0xf]
      %v815 = vld [vmem:[%s4 + $0x15c] sm:$0xf]
      %v816 = vld [vmem:[%s4 + $0x160] sm:$0xf]
      %v817 = vld [vmem:[%s4 + $0x164] sm:$0xf]
      %v818 = vld [vmem:[%s4 + $0x168] sm:$0xf]
      %v819 = vld [vmem:[%s4 + $0x16c] sm:$0xf]
      %v820 = vld [vmem:[%s4 + $0x170] sm:$0xf]
      %v821 = vld [vmem:[%s4 + $0x174] sm:$0xf]
      %v822 = vld [vmem:[%s4 + $0x178] sm:$0xf]
      %v823 = vld [vmem:[%s4 + $0x17c] sm:$0xf]
      %v824 = vld [vmem:[%s4 + $0x180] sm:$0xf]
      %v825 = vld [vmem:[%s4 + $0x184] sm:$0xf]
      %v826 = vld [vmem:[%s4 + $0x188] sm:$0xf]
      %v827 = vld [vmem:[%s4 + $0x18c] sm:$0xf]
      %v828 = vld [vmem:[%s4 + $0x190] sm:$0xf]
      %v829 = vld [vmem:[%s4 + $0x194] sm:$0xf]
      %v830 = vld [vmem:[%s4 + $0x198] sm:$0xf]
      %v831 = vld [vmem:[%s4 + $0x19c] sm:$0xf]
      %v832 = vld [vmem:[%s4 + $0x1a0] sm:$0xf]
      %v833 = vld [vmem:[%s4 + $0x1a4] sm:$0xf]
      %v834 = vld [vmem:[%s4 + $0x1a8] sm:$0xf]
      %v835 = vld [vmem:[%s4 + $0x1ac] sm:$0xf]
      %v836 = vld [vmem:[%s4 + $0x1b0] sm:$0xf]
      %v837 = vld [vmem:[%s4 + $0x1b4] sm:$0xf]
      %v838 = vld [vmem:[%s4 + $0x1b8] sm:$0xf]
      %v839 = vld [vmem:[%s4 + $0x1bc] sm:$0xf]
      %v840 = vld [vmem:[%s4 + $0x1c0] sm:$0xf]
      %v841 = vld [vmem:[%s4 + $0x1c4] sm:$0xf]
      %v842 = vld [vmem:[%s4 + $0x1c8] sm:$0xf]
      %v843 = vld [vmem:[%s4 + $0x1cc] sm:$0xf]
      %v844 = vld [vmem:[%s4 + $0x1d0] sm:$0xf]
      %v845 = vld [vmem:[%s4 + $0x1d4] sm:$0xf]
      %v846 = vld [vmem:[%s4 + $0x1d8] sm:$0xf]
      %v847 = vld [vmem:[%s4 + $0x1dc] sm:$0xf]
      %v848 = vld [vmem:[%s4 + $0x1e0] sm:$0xf]
      %v849 = vld [vmem:[%s4 + $0x1e4] sm:$0xf]
      %v850 = vld [vmem:[%s4 + $0x1e8] sm:$0xf]
      %v851 = vld [vmem:[%s4 + $0x1ec] sm:$0xf]
      %v852 = vld [vmem:[%s4 + $0x1f0] sm:$0xf]
      %v853 = vld [vmem:[%s4 + $0x1f4] sm:$0xf]
      %v854 = vld [vmem:[%s4 + $0x1f8] sm:$0xf]
      %v855 = vld [vmem:[%s4 + $0x1fc] sm:$0xf]
      %v856 = vld [vmem:[%s4 + $0x200] sm:$0xf]
      %v857 = vld [vmem:[%s4 + $0x204] sm:$0xf]
      %v858 = vld [vmem:[%s4 + $0x208] sm:$0xf]
      %v859 = vld [vmem:[%s4 + $0x20c] sm:$0xf]
      %v860 = vld [vmem:[%s4 + $0x210] sm:$0xf]
      %v861 = vld [vmem:[%s4 + $0x214] sm:$0xf]
      %v862 = vld [vmem:[%s4 + $0x218] sm:$0xf]
      %v863 = vld [vmem:[%s4 + $0x21c] sm:$0xf]
      %v864 = vld [vmem:[%s4 + $0x220] sm:$0xf]
      %v865 = vld [vmem:[%s4 + $0x224] sm:$0xf]
      %v866 = vld [vmem:[%s4 + $0x228] sm:$0xf]
      %v867 = vld [vmem:[%s4 + $0x22c] sm:$0xf]
      %v868 = vld [vmem:[%s4 + $0x230] sm:$0xf]
      %v869 = vld [vmem:[%s4 + $0x234] sm:$0xf]
      %v870 = vld [vmem:[%s4 + $0x238] sm:$0xf]
      %v871 = vld [vmem:[%s4 + $0x23c] sm:$0xf]
      %v1016 = vunpack.c.l.b16 %v728
      %v1017 = vunpack.c.l.b16 %v729
      %v1018 = vunpack.c.l.b16 %v730
      %v1019 = vunpack.c.l.b16 %v731
      %v1020 = vunpack.c.l.b16 %v732
      %v1021 = vunpack.c.l.b16 %v733
      %v1022 = vunpack.c.l.b16 %v734
      %v1023 = vunpack.c.l.b16 %v735
      %v1024 = vunpack.c.l.b16 %v736
      %v1025 = vunpack.c.l.b16 %v737
      %v1026 = vunpack.c.l.b16 %v738
      %v1027 = vunpack.c.l.b16 %v739
      %v1028 = vunpack.c.l.b16 %v740
      %v1029 = vunpack.c.l.b16 %v741
      %v1030 = vunpack.c.l.b16 %v742
      %v1031 = vunpack.c.l.b16 %v743
      %v1032 = vunpack.c.l.b16 %v744
      %v1033 = vunpack.c.l.b16 %v745
      %v1034 = vunpack.c.l.b16 %v746
      %v1035 = vunpack.c.l.b16 %v747
      %v1036 = vunpack.c.l.b16 %v748
      %v1037 = vunpack.c.l.b16 %v749
      %v1038 = vunpack.c.l.b16 %v750
      %v1039 = vunpack.c.l.b16 %v751
      %v1040 = vunpack.c.l.b16 %v752
      %v1041 = vunpack.c.l.b16 %v753
      %v1042 = vunpack.c.l.b16 %v754
      %v1043 = vunpack.c.l.b16 %v755
      %v1044 = vunpack.c.l.b16 %v756
      %v1045 = vunpack.c.l.b16 %v757
      %v1046 = vunpack.c.l.b16 %v758
      %v1047 = vunpack.c.l.b16 %v759
      %v1048 = vunpack.c.l.b16 %v760
      %v1049 = vunpack.c.l.b16 %v761
      %v1050 = vunpack.c.l.b16 %v762
      %v1051 = vunpack.c.l.b16 %v763
      %v1052 = vunpack.c.l.b16 %v764
      %v1053 = vunpack.c.l.b16 %v765
      %v1054 = vunpack.c.l.b16 %v766
      %v1055 = vunpack.c.l.b16 %v767
      %v1056 = vunpack.c.l.b16 %v768
      %v1057 = vunpack.c.l.b16 %v769
      %v1058 = vunpack.c.l.b16 %v770
      %v1059 = vunpack.c.l.b16 %v771
      %v1060 = vunpack.c.l.b16 %v772
      %v1061 = vunpack.c.l.b16 %v773
      %v1062 = vunpack.c.l.b16 %v774
      %v1063 = vunpack.c.l.b16 %v775
      %v1064 = vunpack.c.l.b16 %v776
      %v1065 = vunpack.c.l.b16 %v777
      %v1066 = vunpack.c.l.b16 %v778
      %v1067 = vunpack.c.l.b16 %v779
      %v1068 = vunpack.c.l.b16 %v780
      %v1069 = vunpack.c.l.b16 %v781
      %v1070 = vunpack.c.l.b16 %v782
      %v1071 = vunpack.c.l.b16 %v783
      %v1072 = vunpack.c.l.b16 %v784
      %v1073 = vunpack.c.l.b16 %v785
      %v1074 = vunpack.c.l.b16 %v786
      %v1075 = vunpack.c.l.b16 %v787
      %v1076 = vunpack.c.l.b16 %v788
      %v1077 = vunpack.c.l.b16 %v789
      %v1078 = vunpack.c.l.b16 %v790
      %v1079 = vunpack.c.l.b16 %v791
      %v1080 = vunpack.c.l.b16 %v792
      %v1081 = vunpack.c.l.b16 %v793
      %v1082 = vunpack.c.l.b16 %v794
      %v1083 = vunpack.c.l.b16 %v795
      %v1084 = vunpack.c.l.b16 %v796
      %v1085 = vunpack.c.l.b16 %v797
      %v1086 = vunpack.c.l.b16 %v798
      %v1087 = vunpack.c.l.b16 %v799
      %v1088 = vunpack.c.l.b16 %v800
      %v1089 = vunpack.c.l.b16 %v801
      %v1090 = vunpack.c.l.b16 %v802
      %v1091 = vunpack.c.l.b16 %v803
      %v1092 = vunpack.c.l.b16 %v804
      %v1093 = vunpack.c.l.b16 %v805
      %v1094 = vunpack.c.l.b16 %v806
      %v1095 = vunpack.c.l.b16 %v807
      %v1096 = vunpack.c.l.b16 %v808
      %v1097 = vunpack.c.l.b16 %v809
      %v1098 = vunpack.c.l.b16 %v810
      %v1099 = vunpack.c.l.b16 %v811
      %v1100 = vunpack.c.l.b16 %v812
      %v1101 = vunpack.c.l.b16 %v813
      %v1102 = vunpack.c.l.b16 %v814
      %v1103 = vunpack.c.l.b16 %v815
      %v1104 = vunpack.c.l.b16 %v816
      %v1105 = vunpack.c.l.b16 %v817
      %v1106 = vunpack.c.l.b16 %v818
      %v1107 = vunpack.c.l.b16 %v819
      %v1108 = vunpack.c.l.b16 %v820
      %v1109 = vunpack.c.l.b16 %v821
      %v1110 = vunpack.c.l.b16 %v822
      %v1111 = vunpack.c.l.b16 %v823
      %v1112 = vunpack.c.l.b16 %v824
      %v1113 = vunpack.c.l.b16 %v825
      %v1114 = vunpack.c.l.b16 %v826
      %v1115 = vunpack.c.l.b16 %v827
      %v1116 = vunpack.c.l.b16 %v828
      %v1117 = vunpack.c.l.b16 %v829
      %v1118 = vunpack.c.l.b16 %v830
      %v1119 = vunpack.c.l.b16 %v831
      %v1120 = vunpack.c.l.b16 %v832
      %v1121 = vunpack.c.l.b16 %v833
      %v1122 = vunpack.c.l.b16 %v834
      %v1123 = vunpack.c.l.b16 %v835
      %v1124 = vunpack.c.l.b16 %v836
      %v1125 = vunpack.c.l.b16 %v837
      %v1126 = vunpack.c.l.b16 %v838
      %v1127 = vunpack.c.l.b16 %v839
      %v1128 = vunpack.c.l.b16 %v840
      %v1129 = vunpack.c.l.b16 %v841
      %v1130 = vunpack.c.l.b16 %v842
      %v1131 = vunpack.c.l.b16 %v843
      %v1132 = vunpack.c.l.b16 %v844
      %v1133 = vunpack.c.l.b16 %v845
      %v1134 = vunpack.c.l.b16 %v846
      %v1135 = vunpack.c.l.b16 %v847
      %v1136 = vunpack.c.l.b16 %v848
      %v1137 = vunpack.c.l.b16 %v849
      %v1138 = vunpack.c.l.b16 %v850
      %v1139 = vunpack.c.l.b16 %v851
      %v1140 = vunpack.c.l.b16 %v852
      %v1141 = vunpack.c.l.b16 %v853
      %v1142 = vunpack.c.l.b16 %v854
      %v1143 = vunpack.c.l.b16 %v855
      %v1144 = vunpack.c.l.b16 %v856
      %v1145 = vunpack.c.l.b16 %v857
      %v1146 = vunpack.c.l.b16 %v858
      %v1147 = vunpack.c.l.b16 %v859
      %v1148 = vunpack.c.l.b16 %v860
      %v1149 = vunpack.c.l.b16 %v861
      %v1150 = vunpack.c.l.b16 %v862
      %v1151 = vunpack.c.l.b16 %v863
      %v1152 = vunpack.c.l.b16 %v864
      %v1153 = vunpack.c.l.b16 %v865
      %v1154 = vunpack.c.l.b16 %v866
      %v1155 = vunpack.c.l.b16 %v867
      %v1156 = vunpack.c.l.b16 %v868
      %v1157 = vunpack.c.l.b16 %v869
      %v1158 = vunpack.c.l.b16 %v870
      %v1159 = vunpack.c.l.b16 %v871
      %v1160 = vpack.c.b16 %v1017, %v1016
      %v1161 = vpack.c.b16 %v1019, %v1018
      %v1162 = vpack.c.b16 %v1021, %v1020
      %v1163 = vpack.c.b16 %v1023, %v1022
      %v1164 = vpack.c.b16 %v1025, %v1024
      %v1165 = vpack.c.b16 %v1027, %v1026
      %v1166 = vpack.c.b16 %v1029, %v1028
      %v1167 = vpack.c.b16 %v1031, %v1030
      %v1168 = vpack.c.b16 %v1033, %v1032
      %v1169 = vpack.c.b16 %v1035, %v1034
      %v1170 = vpack.c.b16 %v1037, %v1036
      %v1171 = vpack.c.b16 %v1039, %v1038
      %v1172 = vpack.c.b16 %v1041, %v1040
      %v1173 = vpack.c.b16 %v1043, %v1042
      %v1174 = vpack.c.b16 %v1045, %v1044
      %v1175 = vpack.c.b16 %v1047, %v1046
      %v1176 = vpack.c.b16 %v1049, %v1048
      %v1177 = vpack.c.b16 %v1051, %v1050
      %v1178 = vpack.c.b16 %v1053, %v1052
      %v1179 = vpack.c.b16 %v1055, %v1054
      %v1180 = vpack.c.b16 %v1057, %v1056
      %v1181 = vpack.c.b16 %v1059, %v1058
      %v1182 = vpack.c.b16 %v1061, %v1060
      %v1183 = vpack.c.b16 %v1063, %v1062
      %v1184 = vpack.c.b16 %v1065, %v1064
      %v1185 = vpack.c.b16 %v1067, %v1066
      %v1186 = vpack.c.b16 %v1069, %v1068
      %v1187 = vpack.c.b16 %v1071, %v1070
      %v1188 = vpack.c.b16 %v1073, %v1072
      %v1189 = vpack.c.b16 %v1075, %v1074
      %v1190 = vpack.c.b16 %v1077, %v1076
      %v1191 = vpack.c.b16 %v1079, %v1078
      %v1192 = vpack.c.b16 %v1081, %v1080
      %v1193 = vpack.c.b16 %v1083, %v1082
      %v1194 = vpack.c.b16 %v1085, %v1084
      %v1195 = vpack.c.b16 %v1087, %v1086
      %v1196 = vpack.c.b16 %v1089, %v1088
      %v1197 = vpack.c.b16 %v1091, %v1090
      %v1198 = vpack.c.b16 %v1093, %v1092
      %v1199 = vpack.c.b16 %v1095, %v1094
      %v1200 = vpack.c.b16 %v1097, %v1096
      %v1201 = vpack.c.b16 %v1099, %v1098
      %v1202 = vpack.c.b16 %v1101, %v1100
      %v1203 = vpack.c.b16 %v1103, %v1102
      %v1204 = vpack.c.b16 %v1105, %v1104
      %v1205 = vpack.c.b16 %v1107, %v1106
      %v1206 = vpack.c.b16 %v1109, %v1108
      %v1207 = vpack.c.b16 %v1111, %v1110
      %v1208 = vpack.c.b16 %v1113, %v1112
      %v1209 = vpack.c.b16 %v1115, %v1114
      %v1210 = vpack.c.b16 %v1117, %v1116
      %v1211 = vpack.c.b16 %v1119, %v1118
      %v1212 = vpack.c.b16 %v1121, %v1120
      %v1213 = vpack.c.b16 %v1123, %v1122
      %v1214 = vpack.c.b16 %v1125, %v1124
      %v1215 = vpack.c.b16 %v1127, %v1126
      %v1216 = vpack.c.b16 %v1129, %v1128
      %v1217 = vpack.c.b16 %v1131, %v1130
      %v1218 = vpack.c.b16 %v1133, %v1132
      %v1219 = vpack.c.b16 %v1135, %v1134
      %v1220 = vpack.c.b16 %v1137, %v1136
      %v1221 = vpack.c.b16 %v1139, %v1138
      %v1222 = vpack.c.b16 %v1141, %v1140
      %v1223 = vpack.c.b16 %v1143, %v1142
      %v1224 = vpack.c.b16 %v1145, %v1144
      %v1225 = vpack.c.b16 %v1147, %v1146
      %v1226 = vpack.c.b16 %v1149, %v1148
      %v1227 = vpack.c.b16 %v1151, %v1150
      %v1228 = vpack.c.b16 %v1153, %v1152
      %v1229 = vpack.c.b16 %v1155, %v1154
      %v1230 = vpack.c.b16 %v1157, %v1156
      %v1231 = vpack.c.b16 %v1159, %v1158
      %1304 = vmatprep.subr.bf16.mxu0 0
      %1305 = vmatpush1.bf16.msra.mxu0 %v1160
      %1306 = vmatprep.subr.bf16.mxu0 0
      %1307 = vmatpush1.bf16.msra.mxu0 %v1161
      %1308 = vmatprep.subr.bf16.mxu0 0
      %1309 = vmatpush1.bf16.msra.mxu0 %v1162
      %1310 = vmatprep.subr.bf16.mxu0 0
      %1311 = vmatpush1.bf16.msra.mxu0 %v1163
      %1312 = vmatprep.subr.bf16.mxu0 0
      %1313 = vmatpush1.bf16.msra.mxu0 %v1164
      %1314 = vmatprep.subr.bf16.mxu0 0
      %1315 = vmatpush1.bf16.msra.mxu0 %v1165
      %1316 = vmatprep.subr.bf16.mxu0 0
      %1317 = vmatpush1.bf16.msra.mxu0 %v1166
      %1318 = vmatprep.subr.bf16.mxu0 0
      %1319 = vmatpush1.bf16.msra.mxu0 %v1167
      %1320 = vmatprep.subr.bf16.mxu0 0
      %1321 = vmatpush1.bf16.msra.mxu0 %v1168
      %1322 = vmatprep.subr.bf16.mxu0 0
      %1323 = vmatpush1.bf16.msra.mxu0 %v1169
      %1324 = vmatprep.subr.bf16.mxu0 0
      %1325 = vmatpush1.bf16.msra.mxu0 %v1170
      %1326 = vmatprep.subr.bf16.mxu0 0
      %1327 = vmatpush1.bf16.msra.mxu0 %v1171
      %1328 = vmatprep.subr.bf16.mxu0 0
      %1329 = vmatpush1.bf16.msra.mxu0 %v1172
      %1330 = vmatprep.subr.bf16.mxu0 0
      %1331 = vmatpush1.bf16.msra.mxu0 %v1173
      %1332 = vmatprep.subr.bf16.mxu0 0
      %1333 = vmatpush1.bf16.msra.mxu0 %v1174
      %1334 = vmatprep.subr.bf16.mxu0 0
      %1335 = vmatpush1.bf16.msra.mxu0 %v1175
      %1336 = vmatprep.mubr.bf16.mxu0 %v693
      %1337 = vmatmul.mubr.bf16.gmra.mrb[0].mxu0 %v692
      %v1338 = vpop.f32.mrb[0].mxu0
      %v1339 = vadd.f32 0.0, %v1338
      %v1340 = vpop.f32.mrb[0].mxu0
      %v1341 = vpop.f32.mrb[0].mxu0
      %v1342 = vadd.f32 0.0, %v1341
      %v1343 = vpop.f32.mrb[0].mxu0
      %1344 = vmatprep.mubr.bf16.mxu0 %v702
      %1345 = vmatmul.mubr.bf16.gmra.mrb[0].mxu0 %v701
      %v1346 = vpop.f32.mrb[0].mxu0
      %v1347 = vadd.f32 0.0, %v1346
      %v1348 = vpop.f32.mrb[0].mxu0
      %v1349 = vpop.f32.mrb[0].mxu0
      %v1350 = vadd.f32 0.0, %v1349
      %v1351 = vpop.f32.mrb[0].mxu0
      %1352 = vmatprep.mubr.bf16.mxu0 %v711
      %1353 = vmatmul.mubr.bf16.gmra.mrb[0].mxu0 %v710
      %v1354 = vpop.f32.mrb[0].mxu0
      %v1355 = vadd.f32 0.0, %v1354
      %v1356 = vpop.f32.mrb[0].mxu0
      %v1357 = vpop.f32.mrb[0].mxu0
      %v1358 = vadd.f32 0.0, %v1357
      %v1359 = vpop.f32.mrb[0].mxu0
      %1360 = vmatprep.mubr.bf16.mxu0 %v720
      %1361 = vmatmul.mubr.bf16.gmra.mrb[0].mxu0 %v719
      %v1362 = vpop.f32.mrb[0].mxu0
      %v1363 = vadd.f32 0.0, %v1362
      %v1364 = vpop.f32.mrb[0].mxu0
      %v1365 = vpop.f32.mrb[0].mxu0
      %v1366 = vadd.f32 0.0, %v1365
      %v1367 = vpop.f32.mrb[0].mxu0
      %1368 = vdwg.mxu0
      %1369 = vmatprep.subr.bf16.mxu0 0
      %1370 = vmatpush1.bf16.msra.mxu0 %v1176
      %1371 = vmatprep.subr.bf16.mxu0 0
      %1372 = vmatpush1.bf16.msra.mxu0 %v1177
      %1373 = vmatprep.subr.bf16.mxu0 0
      %1374 = vmatpush1.bf16.msra.mxu0 %v1178
      %1375 = vmatprep.subr.bf16.mxu0 0
      %1376 = vmatpush1.bf16.msra.mxu0 %v1179
      %1377 = vmatprep.subr.bf16.mxu0 0
      %1378 = vmatpush1.bf16.msra.mxu0 %v1180
      %1379 = vmatprep.subr.bf16.mxu0 0
      %1380 = vmatpush1.bf16.msra.mxu0 %v1181
      %1381 = vmatprep.subr.bf16.mxu0 0
      %1382 = vmatpush1.bf16.msra.mxu0 %v1182
      %1383 = vmatprep.subr.bf16.mxu0 0
      %1384 = vmatpush1.bf16.msra.mxu0 %v1183
      %1385 = vmatprep.subr.bf16.mxu0 0
      %1386 = vmatpush1.bf16.msra.mxu0 %v1184
      %1387 = vmatprep.subr.bf16.mxu0 0
      %1388 = vmatpush1.bf16.msra.mxu0 %v1185
      %1389 = vmatprep.subr.bf16.mxu0 0
      %1390 = vmatpush1.bf16.msra.mxu0 %v1186
      %1391 = vmatprep.subr.bf16.mxu0 0
      %1392 = vmatpush1.bf16.msra.mxu0 %v1187
      %1393 = vmatprep.subr.bf16.mxu0 0
      %1394 = vmatpush1.bf16.msra.mxu0 %v1188
      %1395 = vmatprep.subr.bf16.mxu0 0
      %1396 = vmatpush1.bf16.msra.mxu0 %v1189
      %1397 = vmatprep.subr.bf16.mxu0 0
      %1398 = vmatpush1.bf16.msra.mxu0 %v1190
      %1399 = vmatprep.subr.bf16.mxu0 0
      %1400 = vmatpush1.bf16.msra.mxu0 %v1191
      %1401 = vmatprep.mubr.bf16.mxu0 %v695
      %1402 = vmatmul.mubr.bf16.gmra.mrb[0].mxu0 %v694
      %v1403 = vpop.f32.mrb[0].mxu0
      %v1404 = vadd.f32 %v1339, %v1403
      %v1405 = vpop.f32.mrb[0].mxu0
      %v1406 = vpop.f32.mrb[0].mxu0
      %v1407 = vadd.f32 %v1342, %v1406
      %v1408 = vpop.f32.mrb[0].mxu0
      %1409 = vmatprep.mubr.bf16.mxu0 %v704
      %1410 = vmatmul.mubr.bf16.gmra.mrb[0].mxu0 %v703
      %v1411 = vpop.f32.mrb[0].mxu0
      %v1412 = vadd.f32 %v1347, %v1411
      %v1413 = vpop.f32.mrb[0].mxu0
      %v1414 = vpop.f32.mrb[0].mxu0
      %v1415 = vadd.f32 %v1350, %v1414
      %v1416 = vpop.f32.mrb[0].mxu0
      %1417 = vmatprep.mubr.bf16.mxu0 %v713
      %1418 = vmatmul.mubr.bf16.gmra.mrb[0].mxu0 %v712
      %v1419 = vpop.f32.mrb[0].mxu0
      %v1420 = vadd.f32 %v1355, %v1419
      %v1421 = vpop.f32.mrb[0].mxu0
      %v1422 = vpop.f32.mrb[0].mxu0
      %v1423 = vadd.f32 %v1358, %v1422
      %v1424 = vpop.f32.mrb[0].mxu0
      %1425 = vmatprep.mubr.bf16.mxu0 %v722
      %1426 = vmatmul.mubr.bf16.gmra.mrb[0].mxu0 %v721
      %v1427 = vpop.f32.mrb[0].mxu0
      %v1428 = vadd.f32 %v1363, %v1427
      %v1429 = vpop.f32.mrb[0].mxu0
      %v1430 = vpop.f32.mrb[0].mxu0
      %v1431 = vadd.f32 %v1366, %v1430
      %v1432 = vpop.f32.mrb[0].mxu0
      %1433 = vdwg.mxu0
      %1434 = vmatprep.subr.bf16.mxu0 0
      %1435 = vmatpush1.bf16.msra.mxu0 %v1192
      %1436 = vmatprep.subr.bf16.mxu0 0
      %1437 = vmatpush1.bf16.msra.mxu0 %v1193
      %1438 = vmatprep.subr.bf16.mxu0 0
      %1439 = vmatpush1.bf16.msra.mxu0 %v1194
      %1440 = vmatprep.subr.bf16.mxu0 0
      %1441 = vmatpush1.bf16.msra.mxu0 %v1195
      %1442 = vmatprep.subr.bf16.mxu0 0
      %1443 = vmatpush1.bf16.msra.mxu0 %v1196
      %1444 = vmatprep.subr.bf16.mxu0 0
      %1445 = vmatpush1.bf16.msra.mxu0 %v1197
      %1446 = vmatprep.subr.bf16.mxu0 0
      %1447 = vmatpush1.bf16.msra.mxu0 %v1198
      %1448 = vmatprep.subr.bf16.mxu0 0
      %1449 = vmatpush1.bf16.msra.mxu0 %v1199
      %1450 = vmatprep.subr.bf16.mxu0 0
      %1451 = vmatpush1.bf16.msra.mxu0 %v1200
      %1452 = vmatprep.subr.bf16.mxu0 0
      %1453 = vmatpush1.bf16.msra.mxu0 %v1201
      %1454 = vmatprep.subr.bf16.mxu0 0
      %1455 = vmatpush1.bf16.msra.mxu0 %v1202
      %1456 = vmatprep.subr.bf16.mxu0 0
      %1457 = vmatpush1.bf16.msra.mxu0 %v1203
      %1458 = vmatprep.subr.bf16.mxu0 0
      %1459 = vmatpush1.bf16.msra.mxu0 %v1204
      %1460 = vmatprep.subr.bf16.mxu0 0
      %1461 = vmatpush1.bf16.msra.mxu0 %v1205
      %1462 = vmatprep.subr.bf16.mxu0 0
      %1463 = vmatpush1.bf16.msra.mxu0 %v1206
      %1464 = vmatprep.subr.bf16.mxu0 0
      %1465 = vmatpush1.bf16.msra.mxu0 %v1207
      %1466 = vmatprep.mubr.bf16.mxu0 %v697
      %1467 = vmatmul.mubr.bf16.gmra.mrb[0].mxu0 %v696
      %v1468 = vpop.f32.mrb[0].mxu0
      %v1469 = vadd.f32 %v1404, %v1468
      %v1470 = vpop.f32.mrb[0].mxu0
      %v1471 = vpop.f32.mrb[0].mxu0
      %v1472 = vadd.f32 %v1407, %v1471
      %v1473 = vpop.f32.mrb[0].mxu0
      %1474 = vmatprep.mubr.bf16.mxu0 %v706
      %1475 = vmatmul.mubr.bf16.gmra.mrb[0].mxu0 %v705
      %v1476 = vpop.f32.mrb[0].mxu0
      %v1477 = vadd.f32 %v1412, %v1476
      %v1478 = vpop.f32.mrb[0].mxu0
      %v1479 = vpop.f32.mrb[0].mxu0
      %v1480 = vadd.f32 %v1415, %v1479
      %v1481 = vpop.f32.mrb[0].mxu0
      %1482 = vmatprep.mubr.bf16.mxu0 %v715
      %1483 = vmatmul.mubr.bf16.gmra.mrb[0].mxu0 %v714
      %v1484 = vpop.f32.mrb[0].mxu0
      %v1485 = vadd.f32 %v1420, %v1484
      %v1486 = vpop.f32.mrb[0].mxu0
      %v1487 = vpop.f32.mrb[0].mxu0
      %v1488 = vadd.f32 %v1423, %v1487
      %v1489 = vpop.f32.mrb[0].mxu0
      %1490 = vmatprep.mubr.bf16.mxu0 %v724
      %1491 = vmatmul.mubr.bf16.gmra.mrb[0].mxu0 %v723
      %v1492 = vpop.f32.mrb[0].mxu0
      %v1493 = vadd.f32 %v1428, %v1492
      %v1494 = vpop.f32.mrb[0].mxu0
      %v1495 = vpop.f32.mrb[0].mxu0
      %v1496 = vadd.f32 %v1431, %v1495
      %v1497 = vpop.f32.mrb[0].mxu0
      %1498 = vdwg.mxu0
      %1499 = vmatprep.subr.bf16.mxu0 0
      %1500 = vmatpush1.bf16.msra.mxu0 %v1208
      %1501 = vmatprep.subr.bf16.mxu0 0
      %1502 = vmatpush1.bf16.msra.mxu0 %v1209
      %1503 = vmatprep.subr.bf16.mxu0 0
      %1504 = vmatpush1.bf16.msra.mxu0 %v1210
      %1505 = vmatprep.subr.bf16.mxu0 0
      %1506 = vmatpush1.bf16.msra.mxu0 %v1211
      %1507 = vmatprep.subr.bf16.mxu0 0
      %1508 = vmatpush1.bf16.msra.mxu0 %v1212
      %1509 = vmatprep.subr.bf16.mxu0 0
      %1510 = vmatpush1.bf16.msra.mxu0 %v1213
      %1511 = vmatprep.subr.bf16.mxu0 0
      %1512 = vmatpush1.bf16.msra.mxu0 %v1214
      %1513 = vmatprep.subr.bf16.mxu0 0
      %1514 = vmatpush1.bf16.msra.mxu0 %v1215
      %1515 = vmatprep.subr.bf16.mxu0 0
      %1516 = vmatpush1.bf16.msra.mxu0 %v1216
      %1517 = vmatprep.subr.bf16.mxu0 0
      %1518 = vmatpush1.bf16.msra.mxu0 %v1217
      %1519 = vmatprep.subr.bf16.mxu0 0
      %1520 = vmatpush1.bf16.msra.mxu0 %v1218
      %1521 = vmatprep.subr.bf16.mxu0 0
      %1522 = vmatpush1.bf16.msra.mxu0 %v1219
      %1523 = vmatprep.subr.bf16.mxu0 0
      %1524 = vmatpush1.bf16.msra.mxu0 %v1220
      %1525 = vmatprep.subr.bf16.mxu0 0
      %1526 = vmatpush1.bf16.msra.mxu0 %v1221
      %1527 = vmatprep.subr.bf16.mxu0 0
      %1528 = vmatpush1.bf16.msra.mxu0 %v1222
      %1529 = vmatprep.subr.bf16.mxu0 0
      %1530 = vmatpush1.bf16.msra.mxu0 %v1223
      %1531 = vmatprep.mubr.bf16.mxu0 %v699
      %1532 = vmatmul.mubr.bf16.gmra.mrb[0].mxu0 %v698
      %v1533 = vpop.f32.mrb[0].mxu0
      %v1534 = vadd.f32 %v1469, %v1533
      %v1535 = vpop.f32.mrb[0].mxu0
      %v1536 = vpop.f32.mrb[0].mxu0
      %v1537 = vadd.f32 %v1472, %v1536
      %v1538 = vpop.f32.mrb[0].mxu0
      %1539 = vmatprep.mubr.bf16.mxu0 %v708
      %1540 = vmatmul.mubr.bf16.gmra.mrb[0].mxu0 %v707
      %v1541 = vpop.f32.mrb[0].mxu0
      %v1542 = vadd.f32 %v1477, %v1541
      %v1543 = vpop.f32.mrb[0].mxu0
      %v1544 = vpop.f32.mrb[0].mxu0
      %v1545 = vadd.f32 %v1480, %v1544
      %v1546 = vpop.f32.mrb[0].mxu0
      %1547 = vmatprep.mubr.bf16.mxu0 %v717
      %1548 = vmatmul.mubr.bf16.gmra.mrb[0].mxu0 %v716
      %v1549 = vpop.f32.mrb[0].mxu0
      %v1550 = vadd.f32 %v1485, %v1549
      %v1551 = vpop.f32.mrb[0].mxu0
      %v1552 = vpop.f32.mrb[0].mxu0
      %v1553 = vadd.f32 %v1488, %v1552
      %v1554 = vpop.f32.mrb[0].mxu0
      %1555 = vmatprep.mubr.bf16.mxu0 %v726
      %1556 = vmatmul.mubr.bf16.gmra.mrb[0].mxu0 %v725
      %v1557 = vpop.f32.mrb[0].mxu0
      %v1558 = vadd.f32 %v1493, %v1557
      %v1559 = vpop.f32.mrb[0].mxu0
      %v1560 = vpop.f32.mrb[0].mxu0
      %v1561 = vadd.f32 %v1496, %v1560
      %v1562 = vpop.f32.mrb[0].mxu0
      %1563 = vdwg.mxu0
      %1564 = vmatprep.subr.bf16.mxu0 0
      %1565 = vmatpush1.bf16.msra.mxu0 %v1224
      %1566 = vmatprep.subr.bf16.mxu0 0
      %1567 = vmatpush1.bf16.msra.mxu0 %v1225
      %1568 = vmatprep.subr.bf16.mxu0 0
      %1569 = vmatpush1.bf16.msra.mxu0 %v1226
      %1570 = vmatprep.subr.bf16.mxu0 0
      %1571 = vmatpush1.bf16.msra.mxu0 %v1227
      %1572 = vmatprep.subr.bf16.mxu0 0
      %1573 = vmatpush1.bf16.msra.mxu0 %v1228
      %1574 = vmatprep.subr.bf16.mxu0 0
      %1575 = vmatpush1.bf16.msra.mxu0 %v1229
      %1576 = vmatprep.subr.bf16.mxu0 0
      %1577 = vmatpush1.bf16.msra.mxu0 %v1230
      %1578 = vmatprep.subr.bf16.mxu0 0
      %1579 = vmatpush1.bf16.msra.mxu0 %v1231
      %1580 = vmatprep.subr.bf16.mxu0 0
      %1581 = vmatpush1.bf16.msra.mxu0 0
      %1582 = vmatprep.subr.bf16.mxu0 0
      %1583 = vmatpush1.bf16.msra.mxu0 0
      %1584 = vmatprep.subr.bf16.mxu0 0
      %1585 = vmatpush1.bf16.msra.mxu0 0
      %1586 = vmatprep.subr.bf16.mxu0 0
      %1587 = vmatpush1.bf16.msra.mxu0 0
      %1588 = vmatprep.subr.bf16.mxu0 0
      %1589 = vmatpush1.bf16.msra.mxu0 0
      %1590 = vmatprep.subr.bf16.mxu0 0
      %1591 = vmatpush1.bf16.msra.mxu0 0
      %1592 = vmatprep.subr.bf16.mxu0 0
      %1593 = vmatpush1.bf16.msra.mxu0 0
      %1594 = vmatprep.subr.bf16.mxu0 0
      %1595 = vmatpush1.bf16.msra.mxu0 0
      %1596 = vmatprep.mubr.bf16.mxu0 0
      %1597 = vmatmul.mubr.bf16.gmra.mrb[0].mxu0 %v700
      %v1598 = vpop.f32.mrb[0].mxu0
      %v1599 = vadd.f32 %v1534, %v1598
      %v1600 = vpop.f32.mrb[0].mxu0
      %v1601 = vpop.f32.mrb[0].mxu0
      %v1602 = vadd.f32 %v1537, %v1601
      %v1603 = vpop.f32.mrb[0].mxu0
      %1604 = vmatprep.mubr.bf16.mxu0 0
      %1605 = vmatmul.mubr.bf16.gmra.mrb[0].mxu0 %v709
      %v1606 = vpop.f32.mrb[0].mxu0
      %v1607 = vadd.f32 %v1542, %v1606
      %v1608 = vpop.f32.mrb[0].mxu0
      %v1609 = vpop.f32.mrb[0].mxu0
      %v1610 = vadd.f32 %v1545, %v1609
      %v1611 = vpop.f32.mrb[0].mxu0
      %1612 = vmatprep.mubr.bf16.mxu0 0
      %1613 = vmatmul.mubr.bf16.gmra.mrb[0].mxu0 %v718
      %v1614 = vpop.f32.mrb[0].mxu0
      %v1615 = vadd.f32 %v1550, %v1614
      %v1616 = vpop.f32.mrb[0].mxu0
      %v1617 = vpop.f32.mrb[0].mxu0
      %v1618 = vadd.f32 %v1553, %v1617
      %v1619 = vpop.f32.mrb[0].mxu0
      %1620 = vmatprep.mubr.bf16.mxu0 0
      %1621 = vmatmul.mubr.bf16.gmra.mrb[0].mxu0 %v727
      %v1622 = vpop.f32.mrb[0].mxu0
      %v1623 = vadd.f32 %v1558, %v1622
      %v1624 = vpop.f32.mrb[0].mxu0
      %v1625 = vpop.f32.mrb[0].mxu0
      %v1626 = vadd.f32 %v1561, %v1625
      %v1627 = vpop.f32.mrb[0].mxu0
      %1628 = vdwg.mxu0
      %v1629 = vpack.c.bf16 %v1602, %v1599
      %v1630 = vpack.c.bf16 %v1610, %v1607
      %v1631 = vpack.c.bf16 %v1618, %v1615
      %v1632 = vpack.c.bf16 %v1626, %v1623
      %v1637 = vunpack.c.l.b16 %v1629
      %v1638 = vunpack.c.h.b16 %v1629
      %v1639 = vunpack.c.l.b16 %v1630
      %v1640 = vunpack.c.h.b16 %v1630
      %v1641 = vunpack.c.l.b16 %v1631
      %v1642 = vunpack.c.h.b16 %v1631
      %v1643 = vunpack.c.l.b16 %v1632
      %v1644 = vunpack.c.h.b16 %v1632
      %v1645 = vpack.c.b16 %v1637, %v1637
      %v1646 = vpack.c.b16 %v1638, %v1638
      %v1647 = vpack.c.b16 %v1639, %v1639
      %v1648 = vpack.c.b16 %v1640, %v1640
      %v1649 = vpack.c.b16 %v1641, %v1641
      %v1650 = vpack.c.b16 %v1642, %v1642
      %v1651 = vpack.c.b16 %v1643, %v1643
      %v1652 = vpack.c.b16 %v1644, %v1644
      %1661 = vst [vmem:[%s348] sm:$0xf] %v1645
      %1662 = vst [vmem:[%s348 + $0x4] sm:$0xf] %v1646
      %1663 = vst [vmem:[%s348 + $0x8] sm:$0xf] %v1647
      %1664 = vst [vmem:[%s348 + $0xc] sm:$0xf] %v1648
      %1665 = vst [vmem:[%s348 + $0x10] sm:$0xf] %v1649
      %1666 = vst [vmem:[%s348 + $0x14] sm:$0xf] %v1650
      %1667 = vst [vmem:[%s348 + $0x18] sm:$0xf] %v1651
      %1668 = vst [vmem:[%s348 + $0x1c] sm:$0xf] %v1652
      %v1669 = vadd.f32 %v1599, %v1602
      %v1670 = vadd.f32 %v1669, %v1607
      %v1671 = vadd.f32 %v1670, %v1610
      %v1672 = vadd.f32 %v1671, %v1615
      %v1673 = vadd.f32 %v1672, %v1618
      %v1674 = vadd.f32 %v1673, %v1623
      %v1675 = vadd.f32 %v1674, %v1626
      %v1676 = vrot.slane %v1675, 4
      %v1677 = vadd.f32 %v1675, %v1676
      %v1678 = vrot.slane %v1677, 2
      %v1679 = vadd.f32 %v1677, %v1678
      %v1680 = vrot.slane %v1679, 1
      %v1681 = vadd.f32 %v1679, %v1680
      %1682 = vst [vmem:[%s352] sm:$0x1] %v1681
      %v1683 = vmul.f32 %v1599, %v1599
      %v1684 = vmul.f32 %v1602, %v1602
      %v1685 = vmul.f32 %v1607, %v1607
      %v1686 = vmul.f32 %v1610, %v1610
      %v1687 = vmul.f32 %v1615, %v1615
      %v1688 = vmul.f32 %v1618, %v1618
      %v1689 = vmul.f32 %v1623, %v1623
      %v1690 = vmul.f32 %v1626, %v1626
      %v1691 = vadd.f32 %v1683, %v1684
      %v1692 = vadd.f32 %v1691, %v1685
      %v1693 = vadd.f32 %v1692, %v1686
      %v1694 = vadd.f32 %v1693, %v1687
      %v1695 = vadd.f32 %v1694, %v1688
      %v1696 = vadd.f32 %v1695, %v1689
      %v1697 = vadd.f32 %v1696, %v1690
      %v1698 = vrot.slane %v1697, 4
      %v1699 = vadd.f32 %v1697, %v1698
      %v1700 = vrot.slane %v1699, 2
      %v1701 = vadd.f32 %v1699, %v1700
      %v1702 = vrot.slane %v1701, 1
      %v1703 = vadd.f32 %v1701, %v1702
      %1704 = vst [vmem:[%s355] sm:$0x1] %v1703
      %p1705 = scmp.lt.s32.totalorder %s20, 1
      %s1706 = scalar_select %p1705, %s20, 1
      %s1707 = smul.addr %s1706, 8
      %s1708 = smul.addr %s1707, 8
      %s1709 = scalar_lea.vmem %s5, %s1708
      %s1710 = smul.u32 8, %s20
      %p1711 = scmp.lt.s32.totalorder %s1710, 15
      %s1712 = scalar_select %p1711, %s1710, 15
      %s1713 = smul.addr %s1712, 4
      %s1714 = scalar_lea.vmem %s6, %s1713
      %p1715 = scmp.lt.s32.totalorder %s20, 1
      %s1716 = scalar_select %p1715, %s20, 1
      %s1717 = scalar_lea.vmem %s7, %s1716
      %p1718 = scmp.lt.s32.totalorder %s20, 1
      %s1719 = scalar_select %p1718, %s20, 1
      %s1720 = scalar_lea.vmem %s8, %s1719
      // Predicated region
      $region41: #{encoder_forward.9} parent=39 // pred_check
        %p1721 = pneg %p153
      $region42: #{encoder_forward.9} parent=39 // pred_check_branch
        %1723 = sbr.rel (%p1721) target = $region44
      $region43: #{encoder_forward.9} parent=39 // pred_region
        _
      $region44: #{encoder_forward.9} parent=39 // pred_fallthru
        _
      // Predicated region
      $region45: #{encoder_forward.9} parent=39 // pred_check
        %p1724 = pneg %p179
      $region46: #{encoder_forward.9} parent=39 // pred_check_branch
        %1726 = sbr.rel (%p1724) target = $region48
      $region47: #{encoder_forward.9} parent=39 // pred_region
        %s1727 = smul.u32 8, %s20
      $region48: #{encoder_forward.9} parent=39 // pred_fallthru
        _
      // Predicated region
      $region49: #{encoder_forward.9} parent=39 // pred_check
        %p1728 = pneg %p205
      $region50: #{encoder_forward.9} parent=39 // pred_check_branch
        %1730 = sbr.rel (%p1728) target = $region52
      $region51: #{encoder_forward.9} parent=39 // pred_region
        _
      $region52: #{encoder_forward.9} parent=39 // pred_fallthru
        _
      // Predicated region
      $region53: #{encoder_forward.9} parent=39 // pred_check
        %p1731 = pneg %p231
      $region54: #{encoder_forward.9} parent=39 // pred_check_branch
        %1733 = sbr.rel (%p1731) target = $region56
      $region55: #{encoder_forward.9} parent=39 // pred_region
        _
      $region56: #{encoder_forward.9} parent=39 // pred_fallthru
        _
    $region40: #{encoder_forward.9} parent=5 // pred_fallthru
      _
    %p1734 = scmp.le.s32.totalorder 2, %s15
    // Predicated region
    $region57: #{encoder_forward.9} parent=5 // pred_check
      %p1735 = pneg %p1734
    $region58: #{encoder_forward.9} parent=5 // pred_check_branch
      %1737 = sbr.rel (%p1735) target = $region60
    $region59: #{encoder_forward.9} parent=5 // pred_region
      %s1738 = ssub.s32 %s15, 2
      // Predicated region
      $region61: #{encoder_forward.9} parent=59 // pred_check
        %p1739 = pneg %p159
      $region62: #{encoder_forward.9} parent=59 // pred_check_branch
        %1741 = sbr.rel (%p1739) target = $region64
      $region63: #{encoder_forward.9} parent=59 // pred_region
        %p1742 = scmp.lt.s32.totalorder %s21, 1
        %s1743 = scalar_select %p1742, %s21, 1
        %s1744 = smul.addr %s1743, 8
        %s1745 = smul.addr %s1744, 8
        %s1746 = scalar_lea.vmem %s5, %s1745
      $region64: #{encoder_forward.9} parent=59 // pred_fallthru
        _
      // Predicated region
      $region65: #{encoder_forward.9} parent=59 // pred_check
        %p1747 = pneg %p185
      $region66: #{encoder_forward.9} parent=59 // pred_check_branch
        %1749 = sbr.rel (%p1747) target = $region68
      $region67: #{encoder_forward.9} parent=59 // pred_region
        %s1750 = smul.u32 8, %s21
        %p1751 = scmp.lt.s32.totalorder %s1750, 15
        %s1752 = scalar_select %p1751, %s1750, 15
        %s1753 = smul.addr %s1752, 4
        %s1754 = scalar_lea.vmem %s6, %s1753
      $region68: #{encoder_forward.9} parent=59 // pred_fallthru
        _
      // Predicated region
      $region69: #{encoder_forward.9} parent=59 // pred_check
        %p1755 = pneg %p211
      $region70: #{encoder_forward.9} parent=59 // pred_check_branch
        %1757 = sbr.rel (%p1755) target = $region72
      $region71: #{encoder_forward.9} parent=59 // pred_region
        %p1758 = scmp.lt.s32.totalorder %s21, 1
        %s1759 = scalar_select %p1758, %s21, 1
        %s1760 = scalar_lea.vmem %s7, %s1759
      $region72: #{encoder_forward.9} parent=59 // pred_fallthru
        _
      // Predicated region
      $region73: #{encoder_forward.9} parent=59 // pred_check
        %p1761 = pneg %p237
      $region74: #{encoder_forward.9} parent=59 // pred_check_branch
        %1763 = sbr.rel (%p1761) target = $region76
      $region75: #{encoder_forward.9} parent=59 // pred_region
        %p1764 = scmp.lt.s32.totalorder %s21, 1
        %s1765 = scalar_select %p1764, %s21, 1
        %s1766 = scalar_lea.vmem %s8, %s1765
      $region76: #{encoder_forward.9} parent=59 // pred_fallthru
        _
    $region60: #{encoder_forward.9} parent=5 // pred_fallthru
      _
  $region6: #{encoder_forward.9} parent=0 // loop_footer
    %s19 = sadd.s32 1, %s15
  $region7: #{encoder_forward.9} parent=0 // loop_footer_branch
    %14 = sbr.rel target = $region3
  $region8: #{encoder_forward.9} parent=0 // loop_exit
    _

</llo_original>
